<compile_context>
chip_gen: v7x
topology: tpu7x:2x2x1
jax: 0.10.0
libtpu: 0.0.40
codegen_flags: <defaults>
</compile_context>

<pallas_src>
import functools

import jax
import jax.numpy as jnp
import numpy as np
from jax.experimental import pallas as pl
from jax.experimental.pallas import tpu as pltpu


# ----------------------------------------------------------------------------
# Fused kernel (one batch element per grid step)
# ----------------------------------------------------------------------------
def _fused_block_kernel(x_ref, rsh_ref, w1f_ref, b1_ref, w2f_ref, b2_ref,
                        widf_ref, bid_ref, csum_ref, cbc_ref,
                        gamma_ref, beta_ref, hmask_ref, rsel_ref, wdf_ref,
                        out_ref, down_ref, *, relu_slope, eps):
    f32 = jnp.float32
    x = x_ref[0]                                   # (H, W*Cin) lane-dense slab
    H = x.shape[0]
    WCout = out_ref.shape[2]
    Ho = down_ref.shape[1]
    WoCout = down_ref.shape[2]
    ones_h = jnp.ones((H, 1), f32)

    def conv3x3(v, wf_ref, b_slab):
        # v: (H, W*Ci) slab.  wf_ref[kh]: (W*Ci, W*Cout) folded weights (the 3
        # kw taps and the W-direction zero padding are baked in).  rsh_ref[kh]:
        # (H, H) row shift by kh-1 with zero rows at the H border (H padding).
        acc = jnp.zeros((H, WCout), f32)
        for kh in range(3):
            rows = jnp.dot(rsh_ref[kh], v, preferred_element_type=f32)
            acc = acc + jnp.dot(rows, wf_ref[kh], preferred_element_type=f32)
        return acc + b_slab

    # ---- conv_1: 3x3, pad 1, bias -------------------------------------------
    acc1 = conv3x3(x, w1f_ref, b1_ref[...])        # (H, W*Cout)

    # ---- HIN: InstanceNorm over H,W on the first Cout/2 channels -------------
    # csum: (W*Cout, Cout) per-channel gather (scaled 1/W);
    # cbc : (Cout, W*Cout) per-channel -> slab-lane broadcast.
    m_c = jnp.mean(jnp.dot(acc1, csum_ref[...], preferred_element_type=f32),
                   axis=0, keepdims=True)          # (1, Cout) instance mean
    m_slab = jnp.dot(m_c * ones_h, cbc_ref[...], preferred_element_type=f32)
    d = acc1 - m_slab
    v_c = jnp.mean(jnp.dot(d * d, csum_ref[...], preferred_element_type=f32),
                   axis=0, keepdims=True)          # (1, Cout) instance var
    inv_c = jax.lax.rsqrt(v_c + eps)
    hmask = hmask_ref[...]                         # 1.0 on normalized channels
    gamma = gamma_ref[...]
    beta = beta_ref[...]
    a_c = hmask * (inv_c * gamma) + (1.0 - hmask)  # per-channel scale
    b_c = hmask * (beta - m_c * inv_c * gamma)     # per-channel shift
    a_slab = jnp.dot(a_c * ones_h, cbc_ref[...], preferred_element_type=f32)
    b_slab = jnp.dot(b_c * ones_h, cbc_ref[...], preferred_element_type=f32)
    out1 = acc1 * a_slab + b_slab

    # ---- LeakyReLU 1 ----------------------------------------------------------
    out1 = jnp.where(out1 >= 0, out1, relu_slope * out1)

    # ---- conv_2: 3x3, pad 1, bias + LeakyReLU 2 -------------------------------
    acc2 = conv3x3(out1, w2f_ref, b2_ref[...])
    out2 = jnp.where(acc2 >= 0, acc2, relu_slope * acc2)

    # ---- identity 1x1 conv (block-diagonal folded weight) + residual ----------
    ident = jnp.dot(x, widf_ref[...], preferred_element_type=f32) + bid_ref[...]
    out = out2 + ident                             # (H, W*Cout) lane-dense
    out_ref[0] = out

    # ---- fused downsample: 4x4, stride 2, pad 1, no bias ----------------------
    # rsel_ref[a]: (Ho, H) picks rows 2*ho + a - 1 (zero outside);
    # wdf_ref[a] : (W*Cout, Wo*Cout) stride-2 column selection + channel mix.
    dacc = jnp.zeros((Ho, WoCout), f32)
    for a in range(4):
        rows = jnp.dot(rsel_ref[a], out, preferred_element_type=f32)
        dacc = dacc + jnp.dot(rows, wdf_ref[a], preferred_element_type=f32)
    down_ref[0] = dacc


# ----------------------------------------------------------------------------
# Wrapper-side constant construction (weight folding / selection matrices)
# ----------------------------------------------------------------------------
def _build_constants(params, H, W):
    w1 = params["w1"].astype(jnp.float32)      # (3, 3, Cin, Cout) HWIO
    w2 = params["w2"].astype(jnp.float32)      # (3, 3, Cout, Cout)
    wid = params["wid"].astype(jnp.float32)    # (Cin, Cout)
    wd = params["wdown"].astype(jnp.float32)   # (4, 4, Cout, Cout)
    Cin, Cout = int(w1.shape[2]), int(w1.shape[3])
    C2 = Cout // 2
    Ho, Wo = H // 2, W // 2

    # row-shift selection matrices for the 3 kh taps of a 3x3 conv (pad 1)
    rshift = np.zeros((3, H, H), np.float32)
    for kh in range(3):
        for h in range(H):
            hs = h + kh - 1
            if 0 <= hs < H:
                rshift[kh, h, hs] = 1.0

    # fold the 3 kw taps (and the W-direction zero pad) into banded weights
    csel = np.zeros((3, W, W), np.float32)     # csel[kw, w_src, w_out]
    for kw in range(3):
        for wo_ in range(W):
            ws = wo_ + kw - 1
            if 0 <= ws < W:
                csel[kw, ws, wo_] = 1.0
    w1fold = jnp.einsum("kwv,hkio->hwivo", csel, w1).reshape(3, W * Cin, W * Cout)
    w2fold = jnp.einsum("kwv,hkio->hwivo", csel, w2).reshape(3, W * Cout, W * Cout)

    # identity 1x1 conv as a block-diagonal slab matmul
    widfold = jnp.einsum("wv,io->wivo", np.eye(W, dtype=np.float32),
                         wid).reshape(W * Cin, W * Cout)

    # biases broadcast to lane-dense slab layout
    b1s = jnp.tile(params["b1"].astype(jnp.float32), (1, W))     # (1, W*Cout)
    b2s = jnp.tile(params["b2"].astype(jnp.float32), (1, W))
    bids = jnp.tile(params["bid"].astype(jnp.float32), (1, W))

    # HIN helpers: channel reduce / broadcast matrices, affine params, mask
    csum = np.zeros((W * Cout, Cout), np.float32)
    cbc = np.zeros((Cout, W * Cout), np.float32)
    for w_ in range(W):
        for c in range(Cout):
            csum[w_ * Cout + c, c] = 1.0 / W
            cbc[c, w_ * Cout + c] = 1.0
    gamma_f = jnp.concatenate([params["gamma"].astype(jnp.float32),
                               jnp.ones((1, C2), jnp.float32)], axis=1)
    beta_f = jnp.concatenate([params["beta"].astype(jnp.float32),
                              jnp.zeros((1, C2), jnp.float32)], axis=1)
    hmask = np.concatenate([np.ones((1, C2), np.float32),
                            np.zeros((1, C2), np.float32)], axis=1)

    # downsample (4x4, stride 2, pad 1): row selection + folded col/chan weights
    rsel = np.zeros((4, Ho, H), np.float32)
    for a in range(4):
        for ho in range(Ho):
            hs = 2 * ho + a - 1
            if 0 <= hs < H:
                rsel[a, ho, hs] = 1.0
    dsel = np.zeros((4, W, Wo), np.float32)    # dsel[b, w_src, w_out]
    for b in range(4):
        for wo_ in range(Wo):
            ws = 2 * wo_ + b - 1
            if 0 <= ws < W:
                dsel[b, ws, wo_] = 1.0
    wdfold = jnp.einsum("bwv,abio->awivo", dsel, wd).reshape(4, W * Cout, Wo * Cout)

    return (jnp.asarray(rshift), w1fold, b1s, w2fold, b2s, widfold, bids,
            jnp.asarray(csum), jnp.asarray(cbc), gamma_f, beta_f,
            jnp.asarray(hmask), jnp.asarray(rsel), wdfold)


# ----------------------------------------------------------------------------
# Wrapper
# ----------------------------------------------------------------------------
def unet_conv_block(x_nchw, params, relu_slope=0.2):
    N, Cin, H, W = x_nchw.shape
    Cout = int(params["w1"].shape[-1])
    Ho, Wo = H // 2, W // 2

    # layout glue only: NCHW -> lane-dense NHWC slab (N, H, W*Cin)
    x_slab = jnp.transpose(x_nchw, (0, 2, 3, 1)).astype(jnp.float32)
    x_slab = x_slab.reshape(N, H, W * Cin)

    consts = _build_constants(params, H, W)
    kernel = functools.partial(_fused_block_kernel,
                               relu_slope=relu_slope, eps=1e-5)

    const_specs = [
        pl.BlockSpec((3, H, H), lambda n: (0, 0, 0)),                  # rshift
        pl.BlockSpec((3, W * Cin, W * Cout), lambda n: (0, 0, 0)),     # w1fold
        pl.BlockSpec((1, W * Cout), lambda n: (0, 0)),                 # b1 slab
        pl.BlockSpec((3, W * Cout, W * Cout), lambda n: (0, 0, 0)),    # w2fold
        pl.BlockSpec((1, W * Cout), lambda n: (0, 0)),                 # b2 slab
        pl.BlockSpec((W * Cin, W * Cout), lambda n: (0, 0)),           # widfold
        pl.BlockSpec((1, W * Cout), lambda n: (0, 0)),                 # bid slab
        pl.BlockSpec((W * Cout, Cout), lambda n: (0, 0)),              # csum
        pl.BlockSpec((Cout, W * Cout), lambda n: (0, 0)),              # cbc
        pl.BlockSpec((1, Cout), lambda n: (0, 0)),                     # gamma
        pl.BlockSpec((1, Cout), lambda n: (0, 0)),                     # beta
        pl.BlockSpec((1, Cout), lambda n: (0, 0)),                     # hin mask
        pl.BlockSpec((4, Ho, H), lambda n: (0, 0, 0)),                 # rsel
        pl.BlockSpec((4, W * Cout, Wo * Cout), lambda n: (0, 0, 0)),   # wd fold
    ]

    out_slab, down_slab = pl.pallas_call(
        kernel,
        out_shape=(jax.ShapeDtypeStruct((N, H, W * Cout), jnp.float32),
                   jax.ShapeDtypeStruct((N, Ho, Wo * Cout), jnp.float32)),
        grid_spec=pltpu.PrefetchScalarGridSpec(
            num_scalar_prefetch=0,
            grid=(N,),
            in_specs=[pl.BlockSpec((1, H, W * Cin), lambda n: (n, 0, 0))]
                     + const_specs,
            out_specs=[pl.BlockSpec((1, H, W * Cout), lambda n: (n, 0, 0)),
                       pl.BlockSpec((1, Ho, Wo * Cout), lambda n: (n, 0, 0))],
        ),
        compiler_params=pltpu.CompilerParams(dimension_semantics=("parallel",)),
    )(x_slab, *consts)

    # back to NCHW, return (out_down, out) like the PyTorch module
    out = jnp.transpose(out_slab.reshape(N, H, W, Cout), (0, 3, 1, 2))
    out_down = jnp.transpose(down_slab.reshape(N, Ho, Wo, Cout), (0, 3, 1, 2))
    return out_down, out


# ----------------------------------------------------------------------------
# Pure-JAX reference (XLA convs) for a sanity check
# ----------------------------------------------------------------------------
def _ref_forward(x_nchw, params, relu_slope=0.2):
    dn = ("NHWC", "HWIO", "NHWC")
    conv = lambda v, w, s, p: jax.lax.conv_general_dilated(
        v, w, (s, s), p, dimension_numbers=dn)
    x = jnp.transpose(x_nchw, (0, 2, 3, 1)).astype(jnp.float32)
    out = conv(x, params["w1"], 1, ((1, 1), (1, 1))) + params["b1"].reshape(1, 1, 1, -1)
    C2 = out.shape[-1] // 2
    o1, o2 = out[..., :C2], out[..., C2:]
    mu = jnp.mean(o1, axis=(1, 2), keepdims=True)
    var = jnp.mean((o1 - mu) ** 2, axis=(1, 2), keepdims=True)
    o1 = (o1 - mu) / jnp.sqrt(var + 1e-5)
    o1 = o1 * params["gamma"].reshape(1, 1, 1, -1) + params["beta"].reshape(1, 1, 1, -1)
    out = jnp.concatenate([o1, o2], axis=-1)
    out = jnp.where(out >= 0, out, relu_slope * out)
    out = conv(out, params["w2"], 1, ((1, 1), (1, 1))) + params["b2"].reshape(1, 1, 1, -1)
    out = jnp.where(out >= 0, out, relu_slope * out)
    ident = jnp.einsum("nhwc,co->nhwo", x, params["wid"]) + params["bid"].reshape(1, 1, 1, -1)
    out = out + ident
    down = conv(out, params["wdown"], 2, ((1, 1), (1, 1)))
    return (jnp.transpose(down, (0, 3, 1, 2)),
            jnp.transpose(out, (0, 3, 1, 2)))


if __name__ == "__main__":
    N, Cin, Cout, H, W = 2, 4, 8, 16, 16
    relu_slope = 0.2

    key = jax.random.PRNGKey(0)
    ks = jax.random.split(key, 11)
    nrm = jax.random.normal
    params = {
        "w1":    0.1 * nrm(ks[0], (3, 3, Cin, Cout), jnp.float32),   # conv_1 (HWIO)
        "b1":    0.1 * nrm(ks[1], (1, Cout), jnp.float32),
        "w2":    0.1 * nrm(ks[2], (3, 3, Cout, Cout), jnp.float32),  # conv_2
        "b2":    0.1 * nrm(ks[3], (1, Cout), jnp.float32),
        "wid":   0.1 * nrm(ks[4], (Cin, Cout), jnp.float32),         # identity 1x1
        "bid":   0.1 * nrm(ks[5], (1, Cout), jnp.float32),
        "gamma": 1.0 + 0.1 * nrm(ks[6], (1, Cout // 2), jnp.float32),  # HIN affine
        "beta":  0.1 * nrm(ks[7], (1, Cout // 2), jnp.float32),
        "wdown": 0.1 * nrm(ks[8], (4, 4, Cout, Cout), jnp.float32),  # conv_down
    }
    x = nrm(ks[9], (N, Cin, H, W), jnp.float32)

    out_down, out = jax.block_until_ready(unet_conv_block(x, params, relu_slope))
    ref_down, ref_out = jax.block_until_ready(_ref_forward(x, params, relu_slope))

    assert out.shape == (N, Cout, H, W)
    assert out_down.shape == (N, Cout, H // 2, W // 2)
    assert np.allclose(np.asarray(out), np.asarray(ref_out), atol=3e-2, rtol=0)
    assert np.allclose(np.asarray(out_down), np.asarray(ref_down), atol=3e-2, rtol=0)

    print("KERNEL_OK")
</pallas_src>

<mosaic_0001>
module attributes {stable_mosaic.version = 11 : i64} {
  func.func @_fused_block_kernel(%arg0: i32, %arg1: memref<1x16x64xf32, #tpu.memory_space<vmem>>, %arg2: memref<3x16x16xf32, #tpu.memory_space<vmem>>, %arg3: memref<3x64x128xf32, #tpu.memory_space<vmem>>, %arg4: memref<1x128xf32, #tpu.memory_space<vmem>>, %arg5: memref<3x128x128xf32, #tpu.memory_space<vmem>>, %arg6: memref<1x128xf32, #tpu.memory_space<vmem>>, %arg7: memref<64x128xf32, #tpu.memory_space<vmem>>, %arg8: memref<1x128xf32, #tpu.memory_space<vmem>>, %arg9: memref<128x8xf32, #tpu.memory_space<vmem>>, %arg10: memref<8x128xf32, #tpu.memory_space<vmem>>, %arg11: memref<1x8xf32, #tpu.memory_space<vmem>>, %arg12: memref<1x8xf32, #tpu.memory_space<vmem>>, %arg13: memref<1x8xf32, #tpu.memory_space<vmem>>, %arg14: memref<4x8x16xf32, #tpu.memory_space<vmem>>, %arg15: memref<4x128x64xf32, #tpu.memory_space<vmem>>, %arg16: memref<1x16x128xf32, #tpu.memory_space<vmem>>, %arg17: memref<1x8x64xf32, #tpu.memory_space<vmem>>) attributes {dimension_semantics = [#tpu.dimension_semantics<parallel>], iteration_bounds = array<i64: 2>, scalar_prefetch = 0 : i64, scratch_operands = 0 : i64, tpu.core_type = #tpu.core_type<tc>, window_params = [{transform_indices = @transform_0, window_bounds = array<i64: 1, 16, 64>}, {pipeline_mode = #tpu.pipeline_mode<synchronous>, transform_indices = @transform_1, window_bounds = array<i64: 3, 16, 16>}, {pipeline_mode = #tpu.pipeline_mode<synchronous>, transform_indices = @transform_2, window_bounds = array<i64: 3, 64, 128>}, {pipeline_mode = #tpu.pipeline_mode<synchronous>, transform_indices = @transform_3, window_bounds = array<i64: 1, 128>}, {pipeline_mode = #tpu.pipeline_mode<synchronous>, transform_indices = @transform_4, window_bounds = array<i64: 3, 128, 128>}, {pipeline_mode = #tpu.pipeline_mode<synchronous>, transform_indices = @transform_5, window_bounds = array<i64: 1, 128>}, {pipeline_mode = #tpu.pipeline_mode<synchronous>, transform_indices = @transform_6, window_bounds = array<i64: 64, 128>}, {pipeline_mode = #tpu.pipeline_mode<synchronous>, transform_indices = @transform_7, window_bounds = array<i64: 1, 128>}, {pipeline_mode = #tpu.pipeline_mode<synchronous>, transform_indices = @transform_8, window_bounds = array<i64: 128, 8>}, {pipeline_mode = #tpu.pipeline_mode<synchronous>, transform_indices = @transform_9, window_bounds = array<i64: 8, 128>}, {pipeline_mode = #tpu.pipeline_mode<synchronous>, transform_indices = @transform_10, window_bounds = array<i64: 1, 8>}, {pipeline_mode = #tpu.pipeline_mode<synchronous>, transform_indices = @transform_11, window_bounds = array<i64: 1, 8>}, {pipeline_mode = #tpu.pipeline_mode<synchronous>, transform_indices = @transform_12, window_bounds = array<i64: 1, 8>}, {pipeline_mode = #tpu.pipeline_mode<synchronous>, transform_indices = @transform_13, window_bounds = array<i64: 4, 8, 16>}, {pipeline_mode = #tpu.pipeline_mode<synchronous>, transform_indices = @transform_14, window_bounds = array<i64: 4, 128, 64>}, {transform_indices = @transform_15, window_bounds = array<i64: 1, 16, 128>}, {transform_indices = @transform_16, window_bounds = array<i64: 1, 8, 64>}]} {
    %c0 = arith.constant 0 : index
    %c0_0 = arith.constant 0 : index
    %c0_1 = arith.constant 0 : index
    %0 = vector.load %arg1[%c0, %c0_0, %c0_1] : memref<1x16x64xf32, #tpu.memory_space<vmem>>, vector<1x16x64xf32>
    %1 = vector.shape_cast %0 : vector<1x16x64xf32> to vector<16x64xf32>
    %cst = arith.constant 1.000000e+00 : f32
    %2 = vector.broadcast %cst : f32 to vector<16x1xf32>
    %c0_2 = arith.constant 0 : index
    %c0_3 = arith.constant 0 : index
    %3 = vector.load %arg4[%c0_2, %c0_3] : memref<1x128xf32, #tpu.memory_space<vmem>>, vector<1x128xf32>
    %cst_4 = arith.constant 0.000000e+00 : f32
    %4 = vector.broadcast %cst_4 : f32 to vector<16x128xf32>
    %c0_5 = arith.constant 0 : index
    %c0_6 = arith.constant 0 : index
    %c0_7 = arith.constant 0 : index
    %5 = vector.load %arg2[%c0_5, %c0_6, %c0_7] : memref<3x16x16xf32, #tpu.memory_space<vmem>>, vector<1x16x16xf32>
    %6 = vector.shape_cast %5 : vector<1x16x16xf32> to vector<16x16xf32>
    %cst_8 = arith.constant dense<0.000000e+00> : vector<16x64xf32>
    %7 = tpu.matmul %6, %1, %cst_8 {dimension_numbers = #tpu.dot_dimension_numbers<[1], [0], [0], [1], [0, 0, 1, 1], [], []>} : vector<16x16xf32>, vector<16x64xf32>, vector<16x64xf32> -> vector<16x64xf32>
    %c0_9 = arith.constant 0 : index
    %c0_10 = arith.constant 0 : index
    %c0_11 = arith.constant 0 : index
    %8 = vector.load %arg3[%c0_9, %c0_10, %c0_11] : memref<3x64x128xf32, #tpu.memory_space<vmem>>, vector<1x64x128xf32>
    %9 = vector.shape_cast %8 : vector<1x64x128xf32> to vector<64x128xf32>
    %cst_12 = arith.constant dense<0.000000e+00> : vector<16x128xf32>
    %10 = tpu.matmul %7, %9, %cst_12 {dimension_numbers = #tpu.dot_dimension_numbers<[1], [0], [0], [1], [0, 0, 1, 1], [], []>} : vector<16x64xf32>, vector<64x128xf32>, vector<16x128xf32> -> vector<16x128xf32>
    %11 = arith.addf %4, %10 : vector<16x128xf32>
    %c1 = arith.constant 1 : index
    %c0_13 = arith.constant 0 : index
    %c0_14 = arith.constant 0 : index
    %12 = vector.load %arg2[%c1, %c0_13, %c0_14] : memref<3x16x16xf32, #tpu.memory_space<vmem>>, vector<1x16x16xf32>
    %13 = vector.shape_cast %12 : vector<1x16x16xf32> to vector<16x16xf32>
    %cst_15 = arith.constant dense<0.000000e+00> : vector<16x64xf32>
    %14 = tpu.matmul %13, %1, %cst_15 {dimension_numbers = #tpu.dot_dimension_numbers<[1], [0], [0], [1], [0, 0, 1, 1], [], []>} : vector<16x16xf32>, vector<16x64xf32>, vector<16x64xf32> -> vector<16x64xf32>
    %c1_16 = arith.constant 1 : index
    %c0_17 = arith.constant 0 : index
    %c0_18 = arith.constant 0 : index
    %15 = vector.load %arg3[%c1_16, %c0_17, %c0_18] : memref<3x64x128xf32, #tpu.memory_space<vmem>>, vector<1x64x128xf32>
    %16 = vector.shape_cast %15 : vector<1x64x128xf32> to vector<64x128xf32>
    %cst_19 = arith.constant dense<0.000000e+00> : vector<16x128xf32>
    %17 = tpu.matmul %14, %16, %cst_19 {dimension_numbers = #tpu.dot_dimension_numbers<[1], [0], [0], [1], [0, 0, 1, 1], [], []>} : vector<16x64xf32>, vector<64x128xf32>, vector<16x128xf32> -> vector<16x128xf32>
    %18 = arith.addf %11, %17 : vector<16x128xf32>
    %c2 = arith.constant 2 : index
    %c0_20 = arith.constant 0 : index
    %c0_21 = arith.constant 0 : index
    %19 = vector.load %arg2[%c2, %c0_20, %c0_21] : memref<3x16x16xf32, #tpu.memory_space<vmem>>, vector<1x16x16xf32>
    %20 = vector.shape_cast %19 : vector<1x16x16xf32> to vector<16x16xf32>
    %cst_22 = arith.constant dense<0.000000e+00> : vector<16x64xf32>
    %21 = tpu.matmul %20, %1, %cst_22 {dimension_numbers = #tpu.dot_dimension_numbers<[1], [0], [0], [1], [0, 0, 1, 1], [], []>} : vector<16x16xf32>, vector<16x64xf32>, vector<16x64xf32> -> vector<16x64xf32>
    %c2_23 = arith.constant 2 : index
    %c0_24 = arith.constant 0 : index
    %c0_25 = arith.constant 0 : index
    %22 = vector.load %arg3[%c2_23, %c0_24, %c0_25] : memref<3x64x128xf32, #tpu.memory_space<vmem>>, vector<1x64x128xf32>
    %23 = vector.shape_cast %22 : vector<1x64x128xf32> to vector<64x128xf32>
    %cst_26 = arith.constant dense<0.000000e+00> : vector<16x128xf32>
    %24 = tpu.matmul %21, %23, %cst_26 {dimension_numbers = #tpu.dot_dimension_numbers<[1], [0], [0], [1], [0, 0, 1, 1], [], []>} : vector<16x64xf32>, vector<64x128xf32>, vector<16x128xf32> -> vector<16x128xf32>
    %25 = arith.addf %18, %24 : vector<16x128xf32>
    %26 = vector.broadcast %3 : vector<1x128xf32> to vector<16x128xf32>
    %27 = arith.addf %25, %26 : vector<16x128xf32>
    %c0_27 = arith.constant 0 : index
    %c0_28 = arith.constant 0 : index
    %28 = vector.load %arg9[%c0_27, %c0_28] : memref<128x8xf32, #tpu.memory_space<vmem>>, vector<128x8xf32>
    %cst_29 = arith.constant dense<0.000000e+00> : vector<16x8xf32>
    %29 = tpu.matmul %27, %28, %cst_29 {dimension_numbers = #tpu.dot_dimension_numbers<[1], [0], [0], [1], [0, 0, 1, 1], [], []>} : vector<16x128xf32>, vector<128x8xf32>, vector<16x8xf32> -> vector<16x8xf32>
    %cst_30 = arith.constant dense<0.000000e+00> : vector<8xf32>
    %30 = vector.multi_reduction <add>, %29, %cst_30 [0] : vector<16x8xf32> to vector<8xf32>
    %31 = vector.shape_cast %30 : vector<8xf32> to vector<1x8xf32>
    %cst_31 = arith.constant 1.600000e+01 : f32
    %32 = vector.broadcast %cst_31 : f32 to vector<1x8xf32>
    %33 = arith.divf %31, %32 : vector<1x8xf32>
    %34 = vector.broadcast %33 : vector<1x8xf32> to vector<16x8xf32>
    %35 = vector.broadcast %2 : vector<16x1xf32> to vector<16x8xf32>
    %36 = arith.mulf %34, %35 : vector<16x8xf32>
    %c0_32 = arith.constant 0 : index
    %c0_33 = arith.constant 0 : index
    %37 = vector.load %arg10[%c0_32, %c0_33] : memref<8x128xf32, #tpu.memory_space<vmem>>, vector<8x128xf32>
    %cst_34 = arith.constant dense<0.000000e+00> : vector<16x128xf32>
    %38 = tpu.matmul %36, %37, %cst_34 {dimension_numbers = #tpu.dot_dimension_numbers<[1], [0], [0], [1], [0, 0, 1, 1], [], []>} : vector<16x8xf32>, vector<8x128xf32>, vector<16x128xf32> -> vector<16x128xf32>
    %39 = arith.subf %27, %38 : vector<16x128xf32>
    %40 = arith.mulf %39, %39 : vector<16x128xf32>
    %c0_35 = arith.constant 0 : index
    %c0_36 = arith.constant 0 : index
    %41 = vector.load %arg9[%c0_35, %c0_36] : memref<128x8xf32, #tpu.memory_space<vmem>>, vector<128x8xf32>
    %cst_37 = arith.constant dense<0.000000e+00> : vector<16x8xf32>
    %42 = tpu.matmul %40, %41, %cst_37 {dimension_numbers = #tpu.dot_dimension_numbers<[1], [0], [0], [1], [0, 0, 1, 1], [], []>} : vector<16x128xf32>, vector<128x8xf32>, vector<16x8xf32> -> vector<16x8xf32>
    %cst_38 = arith.constant dense<0.000000e+00> : vector<8xf32>
    %43 = vector.multi_reduction <add>, %42, %cst_38 [0] : vector<16x8xf32> to vector<8xf32>
    %44 = vector.shape_cast %43 : vector<8xf32> to vector<1x8xf32>
    %cst_39 = arith.constant 1.600000e+01 : f32
    %45 = vector.broadcast %cst_39 : f32 to vector<1x8xf32>
    %46 = arith.divf %44, %45 : vector<1x8xf32>
    %cst_40 = arith.constant 9.99999974E-6 : f32
    %47 = vector.broadcast %cst_40 : f32 to vector<1x8xf32>
    %48 = arith.addf %46, %47 : vector<1x8xf32>
    %49 = math.rsqrt %48 : vector<1x8xf32>
    %c0_41 = arith.constant 0 : index
    %c0_42 = arith.constant 0 : index
    %50 = vector.load %arg13[%c0_41, %c0_42] : memref<1x8xf32, #tpu.memory_space<vmem>>, vector<1x8xf32>
    %c0_43 = arith.constant 0 : index
    %c0_44 = arith.constant 0 : index
    %51 = vector.load %arg11[%c0_43, %c0_44] : memref<1x8xf32, #tpu.memory_space<vmem>>, vector<1x8xf32>
    %c0_45 = arith.constant 0 : index
    %c0_46 = arith.constant 0 : index
    %52 = vector.load %arg12[%c0_45, %c0_46] : memref<1x8xf32, #tpu.memory_space<vmem>>, vector<1x8xf32>
    %53 = arith.mulf %49, %51 : vector<1x8xf32>
    %54 = arith.mulf %50, %53 : vector<1x8xf32>
    %cst_47 = arith.constant 1.000000e+00 : f32
    %55 = vector.broadcast %cst_47 : f32 to vector<1x8xf32>
    %56 = arith.subf %55, %50 : vector<1x8xf32>
    %57 = arith.addf %54, %56 : vector<1x8xf32>
    %58 = arith.mulf %33, %49 : vector<1x8xf32>
    %59 = arith.mulf %58, %51 : vector<1x8xf32>
    %60 = arith.subf %52, %59 : vector<1x8xf32>
    %61 = arith.mulf %50, %60 : vector<1x8xf32>
    %62 = vector.broadcast %57 : vector<1x8xf32> to vector<16x8xf32>
    %63 = vector.broadcast %2 : vector<16x1xf32> to vector<16x8xf32>
    %64 = arith.mulf %62, %63 : vector<16x8xf32>
    %c0_48 = arith.constant 0 : index
    %c0_49 = arith.constant 0 : index
    %65 = vector.load %arg10[%c0_48, %c0_49] : memref<8x128xf32, #tpu.memory_space<vmem>>, vector<8x128xf32>
    %cst_50 = arith.constant dense<0.000000e+00> : vector<16x128xf32>
    %66 = tpu.matmul %64, %65, %cst_50 {dimension_numbers = #tpu.dot_dimension_numbers<[1], [0], [0], [1], [0, 0, 1, 1], [], []>} : vector<16x8xf32>, vector<8x128xf32>, vector<16x128xf32> -> vector<16x128xf32>
    %67 = vector.broadcast %61 : vector<1x8xf32> to vector<16x8xf32>
    %68 = vector.broadcast %2 : vector<16x1xf32> to vector<16x8xf32>
    %69 = arith.mulf %67, %68 : vector<16x8xf32>
    %c0_51 = arith.constant 0 : index
    %c0_52 = arith.constant 0 : index
    %70 = vector.load %arg10[%c0_51, %c0_52] : memref<8x128xf32, #tpu.memory_space<vmem>>, vector<8x128xf32>
    %cst_53 = arith.constant dense<0.000000e+00> : vector<16x128xf32>
    %71 = tpu.matmul %69, %70, %cst_53 {dimension_numbers = #tpu.dot_dimension_numbers<[1], [0], [0], [1], [0, 0, 1, 1], [], []>} : vector<16x8xf32>, vector<8x128xf32>, vector<16x128xf32> -> vector<16x128xf32>
    %72 = arith.mulf %27, %66 : vector<16x128xf32>
    %73 = arith.addf %72, %71 : vector<16x128xf32>
    %cst_54 = arith.constant 0.000000e+00 : f32
    %74 = vector.broadcast %cst_54 : f32 to vector<16x128xf32>
    %75 = arith.cmpf oge, %73, %74 : vector<16x128xf32>
    %cst_55 = arith.constant 2.000000e-01 : f32
    %76 = vector.broadcast %cst_55 : f32 to vector<16x128xf32>
    %77 = arith.mulf %76, %73 : vector<16x128xf32>
    %78 = arith.select %75, %73, %77 : vector<16x128xi1>, vector<16x128xf32>
    %c0_56 = arith.constant 0 : index
    %c0_57 = arith.constant 0 : index
    %79 = vector.load %arg6[%c0_56, %c0_57] : memref<1x128xf32, #tpu.memory_space<vmem>>, vector<1x128xf32>
    %cst_58 = arith.constant 0.000000e+00 : f32
    %80 = vector.broadcast %cst_58 : f32 to vector<16x128xf32>
    %c0_59 = arith.constant 0 : index
    %c0_60 = arith.constant 0 : index
    %c0_61 = arith.constant 0 : index
    %81 = vector.load %arg2[%c0_59, %c0_60, %c0_61] : memref<3x16x16xf32, #tpu.memory_space<vmem>>, vector<1x16x16xf32>
    %82 = vector.shape_cast %81 : vector<1x16x16xf32> to vector<16x16xf32>
    %cst_62 = arith.constant dense<0.000000e+00> : vector<16x128xf32>
    %83 = tpu.matmul %82, %78, %cst_62 {dimension_numbers = #tpu.dot_dimension_numbers<[1], [0], [0], [1], [0, 0, 1, 1], [], []>} : vector<16x16xf32>, vector<16x128xf32>, vector<16x128xf32> -> vector<16x128xf32>
    %c0_63 = arith.constant 0 : index
    %c0_64 = arith.constant 0 : index
    %c0_65 = arith.constant 0 : index
    %84 = vector.load %arg5[%c0_63, %c0_64, %c0_65] : memref<3x128x128xf32, #tpu.memory_space<vmem>>, vector<1x128x128xf32>
    %85 = vector.shape_cast %84 : vector<1x128x128xf32> to vector<128x128xf32>
    %cst_66 = arith.constant dense<0.000000e+00> : vector<16x128xf32>
    %86 = tpu.matmul %83, %85, %cst_66 {dimension_numbers = #tpu.dot_dimension_numbers<[1], [0], [0], [1], [0, 0, 1, 1], [], []>} : vector<16x128xf32>, vector<128x128xf32>, vector<16x128xf32> -> vector<16x128xf32>
    %87 = arith.addf %80, %86 : vector<16x128xf32>
    %c1_67 = arith.constant 1 : index
    %c0_68 = arith.constant 0 : index
    %c0_69 = arith.constant 0 : index
    %88 = vector.load %arg2[%c1_67, %c0_68, %c0_69] : memref<3x16x16xf32, #tpu.memory_space<vmem>>, vector<1x16x16xf32>
    %89 = vector.shape_cast %88 : vector<1x16x16xf32> to vector<16x16xf32>
    %cst_70 = arith.constant dense<0.000000e+00> : vector<16x128xf32>
    %90 = tpu.matmul %89, %78, %cst_70 {dimension_numbers = #tpu.dot_dimension_numbers<[1], [0], [0], [1], [0, 0, 1, 1], [], []>} : vector<16x16xf32>, vector<16x128xf32>, vector<16x128xf32> -> vector<16x128xf32>
    %c1_71 = arith.constant 1 : index
    %c0_72 = arith.constant 0 : index
    %c0_73 = arith.constant 0 : index
    %91 = vector.load %arg5[%c1_71, %c0_72, %c0_73] : memref<3x128x128xf32, #tpu.memory_space<vmem>>, vector<1x128x128xf32>
    %92 = vector.shape_cast %91 : vector<1x128x128xf32> to vector<128x128xf32>
    %cst_74 = arith.constant dense<0.000000e+00> : vector<16x128xf32>
    %93 = tpu.matmul %90, %92, %cst_74 {dimension_numbers = #tpu.dot_dimension_numbers<[1], [0], [0], [1], [0, 0, 1, 1], [], []>} : vector<16x128xf32>, vector<128x128xf32>, vector<16x128xf32> -> vector<16x128xf32>
    %94 = arith.addf %87, %93 : vector<16x128xf32>
    %c2_75 = arith.constant 2 : index
    %c0_76 = arith.constant 0 : index
    %c0_77 = arith.constant 0 : index
    %95 = vector.load %arg2[%c2_75, %c0_76, %c0_77] : memref<3x16x16xf32, #tpu.memory_space<vmem>>, vector<1x16x16xf32>
    %96 = vector.shape_cast %95 : vector<1x16x16xf32> to vector<16x16xf32>
    %cst_78 = arith.constant dense<0.000000e+00> : vector<16x128xf32>
    %97 = tpu.matmul %96, %78, %cst_78 {dimension_numbers = #tpu.dot_dimension_numbers<[1], [0], [0], [1], [0, 0, 1, 1], [], []>} : vector<16x16xf32>, vector<16x128xf32>, vector<16x128xf32> -> vector<16x128xf32>
    %c2_79 = arith.constant 2 : index
    %c0_80 = arith.constant 0 : index
    %c0_81 = arith.constant 0 : index
    %98 = vector.load %arg5[%c2_79, %c0_80, %c0_81] : memref<3x128x128xf32, #tpu.memory_space<vmem>>, vector<1x128x128xf32>
    %99 = vector.shape_cast %98 : vector<1x128x128xf32> to vector<128x128xf32>
    %cst_82 = arith.constant dense<0.000000e+00> : vector<16x128xf32>
    %100 = tpu.matmul %97, %99, %cst_82 {dimension_numbers = #tpu.dot_dimension_numbers<[1], [0], [0], [1], [0, 0, 1, 1], [], []>} : vector<16x128xf32>, vector<128x128xf32>, vector<16x128xf32> -> vector<16x128xf32>
    %101 = arith.addf %94, %100 : vector<16x128xf32>
    %102 = vector.broadcast %79 : vector<1x128xf32> to vector<16x128xf32>
    %103 = arith.addf %101, %102 : vector<16x128xf32>
    %cst_83 = arith.constant 0.000000e+00 : f32
    %104 = vector.broadcast %cst_83 : f32 to vector<16x128xf32>
    %105 = arith.cmpf oge, %103, %104 : vector<16x128xf32>
    %cst_84 = arith.constant 2.000000e-01 : f32
    %106 = vector.broadcast %cst_84 : f32 to vector<16x128xf32>
    %107 = arith.mulf %106, %103 : vector<16x128xf32>
    %108 = arith.select %105, %103, %107 : vector<16x128xi1>, vector<16x128xf32>
    %c0_85 = arith.constant 0 : index
    %c0_86 = arith.constant 0 : index
    %109 = vector.load %arg7[%c0_85, %c0_86] : memref<64x128xf32, #tpu.memory_space<vmem>>, vector<64x128xf32>
    %cst_87 = arith.constant dense<0.000000e+00> : vector<16x128xf32>
    %110 = tpu.matmul %1, %109, %cst_87 {dimension_numbers = #tpu.dot_dimension_numbers<[1], [0], [0], [1], [0, 0, 1, 1], [], []>} : vector<16x64xf32>, vector<64x128xf32>, vector<16x128xf32> -> vector<16x128xf32>
    %c0_88 = arith.constant 0 : index
    %c0_89 = arith.constant 0 : index
    %111 = vector.load %arg8[%c0_88, %c0_89] : memref<1x128xf32, #tpu.memory_space<vmem>>, vector<1x128xf32>
    %112 = vector.broadcast %111 : vector<1x128xf32> to vector<16x128xf32>
    %113 = arith.addf %110, %112 : vector<16x128xf32>
    %114 = arith.addf %108, %113 : vector<16x128xf32>
    %c0_90 = arith.constant 0 : index
    %c0_91 = arith.constant 0 : index
    %c0_92 = arith.constant 0 : index
    %115 = vector.load %arg16[%c0_90, %c0_91, %c0_92] : memref<1x16x128xf32, #tpu.memory_space<vmem>>, vector<1x16x128xf32>
    %116 = vector.shape_cast %115 : vector<1x16x128xf32> to vector<16x128xf32>
    %117 = vector.shape_cast %114 : vector<16x128xf32> to vector<1x16x128xf32>
    tpu.vector_store %arg16[%c0_90, %c0_91, %c0_92], %117 {strides = array<i32>} : memref<1x16x128xf32, #tpu.memory_space<vmem>>, vector<1x16x128xf32>,
    %cst_93 = arith.constant 0.000000e+00 : f32
    %118 = vector.broadcast %cst_93 : f32 to vector<8x64xf32>
    %c0_94 = arith.constant 0 : index
    %c0_95 = arith.constant 0 : index
    %c0_96 = arith.constant 0 : index
    %119 = vector.load %arg14[%c0_94, %c0_95, %c0_96] : memref<4x8x16xf32, #tpu.memory_space<vmem>>, vector<1x8x16xf32>
    %120 = vector.shape_cast %119 : vector<1x8x16xf32> to vector<8x16xf32>
    %cst_97 = arith.constant dense<0.000000e+00> : vector<8x128xf32>
    %121 = tpu.matmul %120, %114, %cst_97 {dimension_numbers = #tpu.dot_dimension_numbers<[1], [0], [0], [1], [0, 0, 1, 1], [], []>} : vector<8x16xf32>, vector<16x128xf32>, vector<8x128xf32> -> vector<8x128xf32>
    %c0_98 = arith.constant 0 : index
    %c0_99 = arith.constant 0 : index
    %c0_100 = arith.constant 0 : index
    %122 = vector.load %arg15[%c0_98, %c0_99, %c0_100] : memref<4x128x64xf32, #tpu.memory_space<vmem>>, vector<1x128x64xf32>
    %123 = vector.shape_cast %122 : vector<1x128x64xf32> to vector<128x64xf32>
    %cst_101 = arith.constant dense<0.000000e+00> : vector<8x64xf32>
    %124 = tpu.matmul %121, %123, %cst_101 {dimension_numbers = #tpu.dot_dimension_numbers<[1], [0], [0], [1], [0, 0, 1, 1], [], []>} : vector<8x128xf32>, vector<128x64xf32>, vector<8x64xf32> -> vector<8x64xf32>
    %125 = arith.addf %118, %124 : vector<8x64xf32>
    %c1_102 = arith.constant 1 : index
    %c0_103 = arith.constant 0 : index
    %c0_104 = arith.constant 0 : index
    %126 = vector.load %arg14[%c1_102, %c0_103, %c0_104] : memref<4x8x16xf32, #tpu.memory_space<vmem>>, vector<1x8x16xf32>
    %127 = vector.shape_cast %126 : vector<1x8x16xf32> to vector<8x16xf32>
    %cst_105 = arith.constant dense<0.000000e+00> : vector<8x128xf32>
    %128 = tpu.matmul %127, %114, %cst_105 {dimension_numbers = #tpu.dot_dimension_numbers<[1], [0], [0], [1], [0, 0, 1, 1], [], []>} : vector<8x16xf32>, vector<16x128xf32>, vector<8x128xf32> -> vector<8x128xf32>
    %c1_106 = arith.constant 1 : index
    %c0_107 = arith.constant 0 : index
    %c0_108 = arith.constant 0 : index
    %129 = vector.load %arg15[%c1_106, %c0_107, %c0_108] : memref<4x128x64xf32, #tpu.memory_space<vmem>>, vector<1x128x64xf32>
    %130 = vector.shape_cast %129 : vector<1x128x64xf32> to vector<128x64xf32>
    %cst_109 = arith.constant dense<0.000000e+00> : vector<8x64xf32>
    %131 = tpu.matmul %128, %130, %cst_109 {dimension_numbers = #tpu.dot_dimension_numbers<[1], [0], [0], [1], [0, 0, 1, 1], [], []>} : vector<8x128xf32>, vector<128x64xf32>, vector<8x64xf32> -> vector<8x64xf32>
    %132 = arith.addf %125, %131 : vector<8x64xf32>
    %c2_110 = arith.constant 2 : index
    %c0_111 = arith.constant 0 : index
    %c0_112 = arith.constant 0 : index
    %133 = vector.load %arg14[%c2_110, %c0_111, %c0_112] : memref<4x8x16xf32, #tpu.memory_space<vmem>>, vector<1x8x16xf32>
    %134 = vector.shape_cast %133 : vector<1x8x16xf32> to vector<8x16xf32>
    %cst_113 = arith.constant dense<0.000000e+00> : vector<8x128xf32>
    %135 = tpu.matmul %134, %114, %cst_113 {dimension_numbers = #tpu.dot_dimension_numbers<[1], [0], [0], [1], [0, 0, 1, 1], [], []>} : vector<8x16xf32>, vector<16x128xf32>, vector<8x128xf32> -> vector<8x128xf32>
    %c2_114 = arith.constant 2 : index
    %c0_115 = arith.constant 0 : index
    %c0_116 = arith.constant 0 : index
    %136 = vector.load %arg15[%c2_114, %c0_115, %c0_116] : memref<4x128x64xf32, #tpu.memory_space<vmem>>, vector<1x128x64xf32>
    %137 = vector.shape_cast %136 : vector<1x128x64xf32> to vector<128x64xf32>
    %cst_117 = arith.constant dense<0.000000e+00> : vector<8x64xf32>
    %138 = tpu.matmul %135, %137, %cst_117 {dimension_numbers = #tpu.dot_dimension_numbers<[1], [0], [0], [1], [0, 0, 1, 1], [], []>} : vector<8x128xf32>, vector<128x64xf32>, vector<8x64xf32> -> vector<8x64xf32>
    %139 = arith.addf %132, %138 : vector<8x64xf32>
    %c3 = arith.constant 3 : index
    %c0_118 = arith.constant 0 : index
    %c0_119 = arith.constant 0 : index
    %140 = vector.load %arg14[%c3, %c0_118, %c0_119] : memref<4x8x16xf32, #tpu.memory_space<vmem>>, vector<1x8x16xf32>
    %141 = vector.shape_cast %140 : vector<1x8x16xf32> to vector<8x16xf32>
    %cst_120 = arith.constant dense<0.000000e+00> : vector<8x128xf32>
    %142 = tpu.matmul %141, %114, %cst_120 {dimension_numbers = #tpu.dot_dimension_numbers<[1], [0], [0], [1], [0, 0, 1, 1], [], []>} : vector<8x16xf32>, vector<16x128xf32>, vector<8x128xf32> -> vector<8x128xf32>
    %c3_121 = arith.constant 3 : index
    %c0_122 = arith.constant 0 : index
    %c0_123 = arith.constant 0 : index
    %143 = vector.load %arg15[%c3_121, %c0_122, %c0_123] : memref<4x128x64xf32, #tpu.memory_space<vmem>>, vector<1x128x64xf32>
    %144 = vector.shape_cast %143 : vector<1x128x64xf32> to vector<128x64xf32>
    %cst_124 = arith.constant dense<0.000000e+00> : vector<8x64xf32>
    %145 = tpu.matmul %142, %144, %cst_124 {dimension_numbers = #tpu.dot_dimension_numbers<[1], [0], [0], [1], [0, 0, 1, 1], [], []>} : vector<8x128xf32>, vector<128x64xf32>, vector<8x64xf32> -> vector<8x64xf32>
    %146 = arith.addf %139, %145 : vector<8x64xf32>
    %c0_125 = arith.constant 0 : index
    %c0_126 = arith.constant 0 : index
    %c0_127 = arith.constant 0 : index
    %147 = vector.load %arg17[%c0_125, %c0_126, %c0_127] : memref<1x8x64xf32, #tpu.memory_space<vmem>>, vector<1x8x64xf32>
    %148 = vector.shape_cast %147 : vector<1x8x64xf32> to vector<8x64xf32>
    %149 = vector.shape_cast %146 : vector<8x64xf32> to vector<1x8x64xf32>
    tpu.vector_store %arg17[%c0_125, %c0_126, %c0_127], %149 {strides = array<i32>} : memref<1x8x64xf32, #tpu.memory_space<vmem>>, vector<1x8x64xf32>,
    return
  }
  func.func @transform_0(%arg0: i32) -> (i32, i32, i32) {
    %c0_i32 = arith.constant 0 : i32
    %c0_i32_0 = arith.constant 0 : i32
    %c0_i32_1 = arith.constant 0 : i32
    return %arg0, %c0_i32, %c0_i32_0 : i32, i32, i32
  }
  func.func @transform_1(%arg0: i32) -> (i32, i32, i32) {
    %c0_i32 = arith.constant 0 : i32
    %c0_i32_0 = arith.constant 0 : i32
    %c0_i32_1 = arith.constant 0 : i32
    %c0_i32_2 = arith.constant 0 : i32
    return %c0_i32, %c0_i32_0, %c0_i32_1 : i32, i32, i32
  }
  func.func @transform_2(%arg0: i32) -> (i32, i32, i32) {
    %c0_i32 = arith.constant 0 : i32
    %c0_i32_0 = arith.constant 0 : i32
    %c0_i32_1 = arith.constant 0 : i32
    %c0_i32_2 = arith.constant 0 : i32
    return %c0_i32, %c0_i32_0, %c0_i32_1 : i32, i32, i32
  }
  func.func @transform_3(%arg0: i32) -> (i32, i32) {
    %c0_i32 = arith.constant 0 : i32
    %c0_i32_0 = arith.constant 0 : i32
    %c0_i32_1 = arith.constant 0 : i32
    return %c0_i32, %c0_i32_0 : i32, i32
  }
  func.func @transform_4(%arg0: i32) -> (i32, i32, i32) {
    %c0_i32 = arith.constant 0 : i32
    %c0_i32_0 = arith.constant 0 : i32
    %c0_i32_1 = arith.constant 0 : i32
    %c0_i32_2 = arith.constant 0 : i32
    return %c0_i32, %c0_i32_0, %c0_i32_1 : i32, i32, i32
  }
  func.func @transform_5(%arg0: i32) -> (i32, i32) {
    %c0_i32 = arith.constant 0 : i32
    %c0_i32_0 = arith.constant 0 : i32
    %c0_i32_1 = arith.constant 0 : i32
    return %c0_i32, %c0_i32_0 : i32, i32
  }
  func.func @transform_6(%arg0: i32) -> (i32, i32) {
    %c0_i32 = arith.constant 0 : i32
    %c0_i32_0 = arith.constant 0 : i32
    %c0_i32_1 = arith.constant 0 : i32
    return %c0_i32, %c0_i32_0 : i32, i32
  }
  func.func @transform_7(%arg0: i32) -> (i32, i32) {
    %c0_i32 = arith.constant 0 : i32
    %c0_i32_0 = arith.constant 0 : i32
    %c0_i32_1 = arith.constant 0 : i32
    return %c0_i32, %c0_i32_0 : i32, i32
  }
  func.func @transform_8(%arg0: i32) -> (i32, i32) {
    %c0_i32 = arith.constant 0 : i32
    %c0_i32_0 = arith.constant 0 : i32
    %c0_i32_1 = arith.constant 0 : i32
    return %c0_i32, %c0_i32_0 : i32, i32
  }
  func.func @transform_9(%arg0: i32) -> (i32, i32) {
    %c0_i32 = arith.constant 0 : i32
    %c0_i32_0 = arith.constant 0 : i32
    %c0_i32_1 = arith.constant 0 : i32
    return %c0_i32, %c0_i32_0 : i32, i32
  }
  func.func @transform_10(%arg0: i32) -> (i32, i32) {
    %c0_i32 = arith.constant 0 : i32
    %c0_i32_0 = arith.constant 0 : i32
    %c0_i32_1 = arith.constant 0 : i32
    return %c0_i32, %c0_i32_0 : i32, i32
  }
  func.func @transform_11(%arg0: i32) -> (i32, i32) {
    %c0_i32 = arith.constant 0 : i32
    %c0_i32_0 = arith.constant 0 : i32
    %c0_i32_1 = arith.constant 0 : i32
    return %c0_i32, %c0_i32_0 : i32, i32
  }
  func.func @transform_12(%arg0: i32) -> (i32, i32) {
    %c0_i32 = arith.constant 0 : i32
    %c0_i32_0 = arith.constant 0 : i32
    %c0_i32_1 = arith.constant 0 : i32
    return %c0_i32, %c0_i32_0 : i32, i32
  }
  func.func @transform_13(%arg0: i32) -> (i32, i32, i32) {
    %c0_i32 = arith.constant 0 : i32
    %c0_i32_0 = arith.constant 0 : i32
    %c0_i32_1 = arith.constant 0 : i32
    %c0_i32_2 = arith.constant 0 : i32
    return %c0_i32, %c0_i32_0, %c0_i32_1 : i32, i32, i32
  }
  func.func @transform_14(%arg0: i32) -> (i32, i32, i32) {
    %c0_i32 = arith.constant 0 : i32
    %c0_i32_0 = arith.constant 0 : i32
    %c0_i32_1 = arith.constant 0 : i32
    %c0_i32_2 = arith.constant 0 : i32
    return %c0_i32, %c0_i32_0, %c0_i32_1 : i32, i32, i32
  }
  func.func @transform_15(%arg0: i32) -> (i32, i32, i32) {
    %c0_i32 = arith.constant 0 : i32
    %c0_i32_0 = arith.constant 0 : i32
    %c0_i32_1 = arith.constant 0 : i32
    return %arg0, %c0_i32, %c0_i32_0 : i32, i32, i32
  }
  func.func @transform_16(%arg0: i32) -> (i32, i32, i32) {
    %c0_i32 = arith.constant 0 : i32
    %c0_i32_0 = arith.constant 0 : i32
    %c0_i32_1 = arith.constant 0 : i32
    return %arg0, %c0_i32, %c0_i32_0 : i32, i32, i32
  }
}

</mosaic_0001>

<llo_original>
// kernel: tpu_custom_call.1
$region0: #{tpu_custom_call.1}
  #allocation0 [shape = 'u32[]', space=smem, size = 0x4, offset = 0x4, fixed_abs, tag = 'smem constant byte address 0x4 - core index']
  #allocation1 [shape = 'u32[144,128]{1,0:T(1,128)}', space=vmem, size = 0x12000, scoped, tag = 'internal scratch']
  %s0 = inlined_call_operand.vmem [shape: f32[2,16,64], index: 0, kind: input, shape index: {}]
  %s1 = inlined_call_operand.vmem [shape: f32[3,16,16], index: 1, kind: input, shape index: {}]
  %s2 = inlined_call_operand.vmem [shape: f32[3,64,128], index: 2, kind: input, shape index: {}]
  %s3 = inlined_call_operand.vmem [shape: f32[1,128], index: 3, kind: input, shape index: {}]
  %s4 = inlined_call_operand.vmem [shape: f32[3,128,128], index: 4, kind: input, shape index: {}]
  %s5 = inlined_call_operand.vmem [shape: f32[1,128], index: 5, kind: input, shape index: {}]
  %s6 = inlined_call_operand.vmem [shape: f32[64,128], index: 6, kind: input, shape index: {}]
  %s7 = inlined_call_operand.vmem [shape: f32[1,128], index: 7, kind: input, shape index: {}]
  %s8 = inlined_call_operand.vmem [shape: f32[128,8], index: 8, kind: input, shape index: {}]
  %s9 = inlined_call_operand.vmem [shape: f32[8,128], index: 9, kind: input, shape index: {}]
  %s10 = inlined_call_operand.vmem [shape: f32[1,8], index: 10, kind: input, shape index: {}]
  %s11 = inlined_call_operand.vmem [shape: f32[1,8], index: 11, kind: input, shape index: {}]
  %s12 = inlined_call_operand.vmem [shape: f32[1,8], index: 12, kind: input, shape index: {}]
  %s13 = inlined_call_operand.vmem [shape: f32[4,8,16], index: 13, kind: input, shape index: {}]
  %s14 = inlined_call_operand.vmem [shape: f32[4,128,64], index: 14, kind: input, shape index: {}]
  %s15 = inlined_call_operand.hbm [shape: f32[2,16,128], index: 15, kind: output, shape index: {0}]
  %s16 = inlined_call_operand.hbm [shape: f32[2,8,64], index: 16, kind: output, shape index: {1}]
  %17 = xla_tuple %s15, %s16
  %s18 = sld [smem:[#allocation0]]
  $region101: #{tpu_custom_call.1} parent=0
    _
  %s20 = ssub.s32 1, %s18
  %s21 = scalar_select 0, %s20, %s18
  $region1: #{tpu_custom_call.1} parent=0
    #allocation2 [shape = 'u8[16384]{0}', space=vmem, size = 0x4000, scoped, tag = 'output window, operand 0']
    #allocation3 [shape = 's32[2]{0}', space=sflag, size = 0x8, scoped, tag = 'scoped memory for tpu_custom_call.1']
    #allocation4 [shape = 'u8[8192]{0}', space=vmem, size = 0x2000, scoped, tag = 'output window, operand 1']
    #allocation5 [shape = 's32[2]{0}', space=sflag, size = 0x8, scoped, tag = 'scoped memory for tpu_custom_call.1']
    %22 = vsyncpa [#allocation3], 0
    %s23 = scalar_lea.sflag [#allocation3], 1
    %24 = vsyncpa %s23, 0
    %25 = vsyncpa [#allocation5], 0
    %s26 = scalar_lea.sflag [#allocation5], 1
    %27 = vsyncpa %s26, 0
    loop: start=0, step=1, limit=4
    $region2: #{tpu_custom_call.1} parent=1 // loop_pre_header
      _
    $region3: #{tpu_custom_call.1} parent=1 // loop_header
      %s29 = sphi 0, %s33
      %p30 = scmp.ge.s32.totalorder %s29, 4
      %s39 = sphi 0, %s41
      %s42 = sphi 0, %s39
      %s43 = sphi 0, %s42
      %s59 = sphi 0, %s43
      %s63 = sphi 0, %s63
      %s65 = sphi 0, %s63
      %s66 = sphi 0, %s65
      %s80 = sphi 0, %s66
      %s84 = sphi 0, %s84
      %s86 = sphi 0, %s84
      %s87 = sphi 0, %s86
      %s101 = sphi 0, %s87
      %s105 = sphi 0, %s105
      %s107 = sphi 0, %s105
      %s108 = sphi 0, %s107
      %s122 = sphi 0, %s108
      %s126 = sphi 0, %s126
      %s128 = sphi 0, %s126
      %s129 = sphi 0, %s128
      %s143 = sphi 0, %s129
      %s147 = sphi 0, %s147
      %s149 = sphi 0, %s147
      %s150 = sphi 0, %s149
      %s164 = sphi 0, %s150
      %s168 = sphi 0, %s168
      %s170 = sphi 0, %s168
      %s171 = sphi 0, %s170
      %s185 = sphi 0, %s171
      %s189 = sphi 0, %s189
      %s191 = sphi 0, %s189
      %s192 = sphi 0, %s191
      %s206 = sphi 0, %s192
      %s210 = sphi 0, %s210
      %s212 = sphi 0, %s210
      %s213 = sphi 0, %s212
      %s227 = sphi 0, %s213
      %s231 = sphi 0, %s231
      %s233 = sphi 0, %s231
      %s234 = sphi 0, %s233
      %s248 = sphi 0, %s234
      %s252 = sphi 0, %s252
      %s254 = sphi 0, %s252
      %s255 = sphi 0, %s254
      %s269 = sphi 0, %s255
      %s273 = sphi 0, %s273
      %s275 = sphi 0, %s273
      %s276 = sphi 0, %s275
      %s290 = sphi 0, %s276
      %s294 = sphi 0, %s294
      %s296 = sphi 0, %s294
      %s297 = sphi 0, %s296
      %s311 = sphi 0, %s297
      %s315 = sphi 0, %s315
      %s317 = sphi 0, %s315
      %s318 = sphi 0, %s317
      %s332 = sphi 0, %s318
      %s336 = sphi 0, %s336
      %s338 = sphi 0, %s336
      %s339 = sphi 0, %s338
      %s353 = sphi 0, %s339
      %s359 = sphi 0, %s361
      %s362 = sphi 0, %s359
      %s363 = sphi 0, %s362
      %s379 = sphi 0, %s363
      %s385 = sphi 0, %s387
      %s388 = sphi 0, %s385
      %s389 = sphi 0, %s388
      %s405 = sphi 0, %s389
    $region4: #{tpu_custom_call.1} parent=1 // loop_header_branch
      %32 = sbr.rel (%p30) target = $region8
    $region5: #{tpu_custom_call.1} parent=1 // loop_body
      %s34 = ssub.s32 %s29, 1
      %s35 = ssub.s32 %s29, 2
      %s36 = sadd.s32 %s29, 1
      %s37 = ssub.s32 %s29, %s36
      %p38 = scmp.eq.s32.totalorder %s37, 0
      %s40 = sadd.s32 %s39, 1
      %s41 = scalar_select %p38, %s39, %s40
      %p44 = pneg %p38
      %p45 = scmp.eq.s32.totalorder %s29, 1
      %p46 = por %p44, %p45
      %p47 = scmp.ne.s32.totalorder %s39, %s42
      %p48 = scmp.eq.s32.totalorder %s29, 0
      %p49 = por %p47, %p48
      %p50 = scmp.ne.s32.totalorder %s39, %s42
      %p51 = scmp.eq.s32.totalorder %s34, 1
      %p52 = por %p50, %p51
      %p53 = scmp.ne.s32.totalorder %s42, %s43
      %p54 = scmp.eq.s32.totalorder %s34, 0
      %p55 = por %p53, %p54
      %p56 = scmp.ne.s32.totalorder %s42, %s43
      %p57 = scmp.eq.s32.totalorder %s35, 1
      %p58 = por %p56, %p57
      %p60 = scmp.ne.s32.totalorder %s43, %s59
      %p61 = scmp.eq.s32.totalorder %s35, 0
      %p62 = por %p60, %p61
      %s64 = sadd.s32 %s63, 1
      %p67 = scmp.eq.s32.totalorder %s29, 1
      %p68 = scmp.ne.s32.totalorder %s63, %s65
      %p69 = scmp.eq.s32.totalorder %s29, 0
      %p70 = por %p68, %p69
      %p71 = scmp.ne.s32.totalorder %s63, %s65
      %p72 = scmp.eq.s32.totalorder %s34, 1
      %p73 = por %p71, %p72
      %p74 = scmp.ne.s32.totalorder %s65, %s66
      %p75 = scmp.eq.s32.totalorder %s34, 0
      %p76 = por %p74, %p75
      %p77 = scmp.ne.s32.totalorder %s65, %s66
      %p78 = scmp.eq.s32.totalorder %s35, 1
      %p79 = por %p77, %p78
      %p81 = scmp.ne.s32.totalorder %s66, %s80
      %p82 = scmp.eq.s32.totalorder %s35, 0
      %p83 = por %p81, %p82
      %s85 = sadd.s32 %s84, 1
      %p88 = scmp.eq.s32.totalorder %s29, 1
      %p89 = scmp.ne.s32.totalorder %s84, %s86
      %p90 = scmp.eq.s32.totalorder %s29, 0
      %p91 = por %p89, %p90
      %p92 = scmp.ne.s32.totalorder %s84, %s86
      %p93 = scmp.eq.s32.totalorder %s34, 1
      %p94 = por %p92, %p93
      %p95 = scmp.ne.s32.totalorder %s86, %s87
      %p96 = scmp.eq.s32.totalorder %s34, 0
      %p97 = por %p95, %p96
      %p98 = scmp.ne.s32.totalorder %s86, %s87
      %p99 = scmp.eq.s32.totalorder %s35, 1
      %p100 = por %p98, %p99
      %p102 = scmp.ne.s32.totalorder %s87, %s101
      %p103 = scmp.eq.s32.totalorder %s35, 0
      %p104 = por %p102, %p103
      %s106 = sadd.s32 %s105, 1
      %p109 = scmp.eq.s32.totalorder %s29, 1
      %p110 = scmp.ne.s32.totalorder %s105, %s107
      %p111 = scmp.eq.s32.totalorder %s29, 0
      %p112 = por %p110, %p111
      %p113 = scmp.ne.s32.totalorder %s105, %s107
      %p114 = scmp.eq.s32.totalorder %s34, 1
      %p115 = por %p113, %p114
      %p116 = scmp.ne.s32.totalorder %s107, %s108
      %p117 = scmp.eq.s32.totalorder %s34, 0
      %p118 = por %p116, %p117
      %p119 = scmp.ne.s32.totalorder %s107, %s108
      %p120 = scmp.eq.s32.totalorder %s35, 1
      %p121 = por %p119, %p120
      %p123 = scmp.ne.s32.totalorder %s108, %s122
      %p124 = scmp.eq.s32.totalorder %s35, 0
      %p125 = por %p123, %p124
      %s127 = sadd.s32 %s126, 1
      %p130 = scmp.eq.s32.totalorder %s29, 1
      %p131 = scmp.ne.s32.totalorder %s126, %s128
      %p132 = scmp.eq.s32.totalorder %s29, 0
      %p133 = por %p131, %p132
      %p134 = scmp.ne.s32.totalorder %s126, %s128
      %p135 = scmp.eq.s32.totalorder %s34, 1
      %p136 = por %p134, %p135
      %p137 = scmp.ne.s32.totalorder %s128, %s129
      %p138 = scmp.eq.s32.totalorder %s34, 0
      %p139 = por %p137, %p138
      %p140 = scmp.ne.s32.totalorder %s128, %s129
      %p141 = scmp.eq.s32.totalorder %s35, 1
      %p142 = por %p140, %p141
      %p144 = scmp.ne.s32.totalorder %s129, %s143
      %p145 = scmp.eq.s32.totalorder %s35, 0
      %p146 = por %p144, %p145
      %s148 = sadd.s32 %s147, 1
      %p151 = scmp.eq.s32.totalorder %s29, 1
      %p152 = scmp.ne.s32.totalorder %s147, %s149
      %p153 = scmp.eq.s32.totalorder %s29, 0
      %p154 = por %p152, %p153
      %p155 = scmp.ne.s32.totalorder %s147, %s149
      %p156 = scmp.eq.s32.totalorder %s34, 1
      %p157 = por %p155, %p156
      %p158 = scmp.ne.s32.totalorder %s149, %s150
      %p159 = scmp.eq.s32.totalorder %s34, 0
      %p160 = por %p158, %p159
      %p161 = scmp.ne.s32.totalorder %s149, %s150
      %p162 = scmp.eq.s32.totalorder %s35, 1
      %p163 = por %p161, %p162
      %p165 = scmp.ne.s32.totalorder %s150, %s164
      %p166 = scmp.eq.s32.totalorder %s35, 0
      %p167 = por %p165, %p166
      %s169 = sadd.s32 %s168, 1
      %p172 = scmp.eq.s32.totalorder %s29, 1
      %p173 = scmp.ne.s32.totalorder %s168, %s170
      %p174 = scmp.eq.s32.totalorder %s29, 0
      %p175 = por %p173, %p174
      %p176 = scmp.ne.s32.totalorder %s168, %s170
      %p177 = scmp.eq.s32.totalorder %s34, 1
      %p178 = por %p176, %p177
      %p179 = scmp.ne.s32.totalorder %s170, %s171
      %p180 = scmp.eq.s32.totalorder %s34, 0
      %p181 = por %p179, %p180
      %p182 = scmp.ne.s32.totalorder %s170, %s171
      %p183 = scmp.eq.s32.totalorder %s35, 1
      %p184 = por %p182, %p183
      %p186 = scmp.ne.s32.totalorder %s171, %s185
      %p187 = scmp.eq.s32.totalorder %s35, 0
      %p188 = por %p186, %p187
      %s190 = sadd.s32 %s189, 1
      %p193 = scmp.eq.s32.totalorder %s29, 1
      %p194 = scmp.ne.s32.totalorder %s189, %s191
      %p195 = scmp.eq.s32.totalorder %s29, 0
      %p196 = por %p194, %p195
      %p197 = scmp.ne.s32.totalorder %s189, %s191
      %p198 = scmp.eq.s32.totalorder %s34, 1
      %p199 = por %p197, %p198
      %p200 = scmp.ne.s32.totalorder %s191, %s192
      %p201 = scmp.eq.s32.totalorder %s34, 0
      %p202 = por %p200, %p201
      %p203 = scmp.ne.s32.totalorder %s191, %s192
      %p204 = scmp.eq.s32.totalorder %s35, 1
      %p205 = por %p203, %p204
      %p207 = scmp.ne.s32.totalorder %s192, %s206
      %p208 = scmp.eq.s32.totalorder %s35, 0
      %p209 = por %p207, %p208
      %s211 = sadd.s32 %s210, 1
      %p214 = scmp.eq.s32.totalorder %s29, 1
      %p215 = scmp.ne.s32.totalorder %s210, %s212
      %p216 = scmp.eq.s32.totalorder %s29, 0
      %p217 = por %p215, %p216
      %p218 = scmp.ne.s32.totalorder %s210, %s212
      %p219 = scmp.eq.s32.totalorder %s34, 1
      %p220 = por %p218, %p219
      %p221 = scmp.ne.s32.totalorder %s212, %s213
      %p222 = scmp.eq.s32.totalorder %s34, 0
      %p223 = por %p221, %p222
      %p224 = scmp.ne.s32.totalorder %s212, %s213
      %p225 = scmp.eq.s32.totalorder %s35, 1
      %p226 = por %p224, %p225
      %p228 = scmp.ne.s32.totalorder %s213, %s227
      %p229 = scmp.eq.s32.totalorder %s35, 0
      %p230 = por %p228, %p229
      %s232 = sadd.s32 %s231, 1
      %p235 = scmp.eq.s32.totalorder %s29, 1
      %p236 = scmp.ne.s32.totalorder %s231, %s233
      %p237 = scmp.eq.s32.totalorder %s29, 0
      %p238 = por %p236, %p237
      %p239 = scmp.ne.s32.totalorder %s231, %s233
      %p240 = scmp.eq.s32.totalorder %s34, 1
      %p241 = por %p239, %p240
      %p242 = scmp.ne.s32.totalorder %s233, %s234
      %p243 = scmp.eq.s32.totalorder %s34, 0
      %p244 = por %p242, %p243
      %p245 = scmp.ne.s32.totalorder %s233, %s234
      %p246 = scmp.eq.s32.totalorder %s35, 1
      %p247 = por %p245, %p246
      %p249 = scmp.ne.s32.totalorder %s234, %s248
      %p250 = scmp.eq.s32.totalorder %s35, 0
      %p251 = por %p249, %p250
      %s253 = sadd.s32 %s252, 1
      %p256 = scmp.eq.s32.totalorder %s29, 1
      %p257 = scmp.ne.s32.totalorder %s252, %s254
      %p258 = scmp.eq.s32.totalorder %s29, 0
      %p259 = por %p257, %p258
      %p260 = scmp.ne.s32.totalorder %s252, %s254
      %p261 = scmp.eq.s32.totalorder %s34, 1
      %p262 = por %p260, %p261
      %p263 = scmp.ne.s32.totalorder %s254, %s255
      %p264 = scmp.eq.s32.totalorder %s34, 0
      %p265 = por %p263, %p264
      %p266 = scmp.ne.s32.totalorder %s254, %s255
      %p267 = scmp.eq.s32.totalorder %s35, 1
      %p268 = por %p266, %p267
      %p270 = scmp.ne.s32.totalorder %s255, %s269
      %p271 = scmp.eq.s32.totalorder %s35, 0
      %p272 = por %p270, %p271
      %s274 = sadd.s32 %s273, 1
      %p277 = scmp.eq.s32.totalorder %s29, 1
      %p278 = scmp.ne.s32.totalorder %s273, %s275
      %p279 = scmp.eq.s32.totalorder %s29, 0
      %p280 = por %p278, %p279
      %p281 = scmp.ne.s32.totalorder %s273, %s275
      %p282 = scmp.eq.s32.totalorder %s34, 1
      %p283 = por %p281, %p282
      %p284 = scmp.ne.s32.totalorder %s275, %s276
      %p285 = scmp.eq.s32.totalorder %s34, 0
      %p286 = por %p284, %p285
      %p287 = scmp.ne.s32.totalorder %s275, %s276
      %p288 = scmp.eq.s32.totalorder %s35, 1
      %p289 = por %p287, %p288
      %p291 = scmp.ne.s32.totalorder %s276, %s290
      %p292 = scmp.eq.s32.totalorder %s35, 0
      %p293 = por %p291, %p292
      %s295 = sadd.s32 %s294, 1
      %p298 = scmp.eq.s32.totalorder %s29, 1
      %p299 = scmp.ne.s32.totalorder %s294, %s296
      %p300 = scmp.eq.s32.totalorder %s29, 0
      %p301 = por %p299, %p300
      %p302 = scmp.ne.s32.totalorder %s294, %s296
      %p303 = scmp.eq.s32.totalorder %s34, 1
      %p304 = por %p302, %p303
      %p305 = scmp.ne.s32.totalorder %s296, %s297
      %p306 = scmp.eq.s32.totalorder %s34, 0
      %p307 = por %p305, %p306
      %p308 = scmp.ne.s32.totalorder %s296, %s297
      %p309 = scmp.eq.s32.totalorder %s35, 1
      %p310 = por %p308, %p309
      %p312 = scmp.ne.s32.totalorder %s297, %s311
      %p313 = scmp.eq.s32.totalorder %s35, 0
      %p314 = por %p312, %p313
      %s316 = sadd.s32 %s315, 1
      %p319 = scmp.eq.s32.totalorder %s29, 1
      %p320 = scmp.ne.s32.totalorder %s315, %s317
      %p321 = scmp.eq.s32.totalorder %s29, 0
      %p322 = por %p320, %p321
      %p323 = scmp.ne.s32.totalorder %s315, %s317
      %p324 = scmp.eq.s32.totalorder %s34, 1
      %p325 = por %p323, %p324
      %p326 = scmp.ne.s32.totalorder %s317, %s318
      %p327 = scmp.eq.s32.totalorder %s34, 0
      %p328 = por %p326, %p327
      %p329 = scmp.ne.s32.totalorder %s317, %s318
      %p330 = scmp.eq.s32.totalorder %s35, 1
      %p331 = por %p329, %p330
      %p333 = scmp.ne.s32.totalorder %s318, %s332
      %p334 = scmp.eq.s32.totalorder %s35, 0
      %p335 = por %p333, %p334
      %s337 = sadd.s32 %s336, 1
      %p340 = scmp.eq.s32.totalorder %s29, 1
      %p341 = scmp.ne.s32.totalorder %s336, %s338
      %p342 = scmp.eq.s32.totalorder %s29, 0
      %p343 = por %p341, %p342
      %p344 = scmp.ne.s32.totalorder %s336, %s338
      %p345 = scmp.eq.s32.totalorder %s34, 1
      %p346 = por %p344, %p345
      %p347 = scmp.ne.s32.totalorder %s338, %s339
      %p348 = scmp.eq.s32.totalorder %s34, 0
      %p349 = por %p347, %p348
      %p350 = scmp.ne.s32.totalorder %s338, %s339
      %p351 = scmp.eq.s32.totalorder %s35, 1
      %p352 = por %p350, %p351
      %p354 = scmp.ne.s32.totalorder %s339, %s353
      %p355 = scmp.eq.s32.totalorder %s35, 0
      %p356 = por %p354, %p355
      %s357 = ssub.s32 %s29, %s36
      %p358 = scmp.eq.s32.totalorder %s357, 0
      %s360 = sadd.s32 %s359, 1
      %s361 = scalar_select %p358, %s359, %s360
      %p364 = pneg %p358
      %p365 = scmp.eq.s32.totalorder %s29, 1
      %p366 = por %p364, %p365
      %p367 = scmp.ne.s32.totalorder %s359, %s362
      %p368 = scmp.eq.s32.totalorder %s29, 0
      %p369 = por %p367, %p368
      %p370 = scmp.ne.s32.totalorder %s359, %s362
      %p371 = scmp.eq.s32.totalorder %s34, 1
      %p372 = por %p370, %p371
      %p373 = scmp.ne.s32.totalorder %s362, %s363
      %p374 = scmp.eq.s32.totalorder %s34, 0
      %p375 = por %p373, %p374
      %p376 = scmp.ne.s32.totalorder %s362, %s363
      %p377 = scmp.eq.s32.totalorder %s35, 1
      %p378 = por %p376, %p377
      %p380 = scmp.ne.s32.totalorder %s363, %s379
      %p381 = scmp.eq.s32.totalorder %s35, 0
      %p382 = por %p380, %p381
      %s383 = ssub.s32 %s29, %s36
      %p384 = scmp.eq.s32.totalorder %s383, 0
      %s386 = sadd.s32 %s385, 1
      %s387 = scalar_select %p384, %s385, %s386
      %p390 = pneg %p384
      %p391 = scmp.eq.s32.totalorder %s29, 1
      %p392 = por %p390, %p391
      %p393 = scmp.ne.s32.totalorder %s385, %s388
      %p394 = scmp.eq.s32.totalorder %s29, 0
      %p395 = por %p393, %p394
      %p396 = scmp.ne.s32.totalorder %s385, %s388
      %p397 = scmp.eq.s32.totalorder %s34, 1
      %p398 = por %p396, %p397
      %p399 = scmp.ne.s32.totalorder %s388, %s389
      %p400 = scmp.eq.s32.totalorder %s34, 0
      %p401 = por %p399, %p400
      %p402 = scmp.ne.s32.totalorder %s388, %s389
      %p403 = scmp.eq.s32.totalorder %s35, 1
      %p404 = por %p402, %p403
      %p406 = scmp.ne.s32.totalorder %s389, %s405
      %p407 = scmp.eq.s32.totalorder %s35, 0
      %p408 = por %p406, %p407
      %p409 = scmp.le.s32.totalorder 1, %s29
      %p410 = scmp.lt.s32.totalorder %s29, 3
      %p411 = pnand %p409, %p410
      %p412 = pneg %p411
      // Predicated region
      $region9: #{tpu_custom_call.1} parent=5 // pred_check
        _
      $region10: #{tpu_custom_call.1} parent=5 // pred_check_branch
        %414 = sbr.rel (%p411) target = $region12
      $region11: #{tpu_custom_call.1} parent=5 // pred_region
        %s415 = ssub.s32 %s29, 1
        // Predicated region
        $region13: #{tpu_custom_call.1} parent=11 // pred_check
          %p416 = pneg %p76
        $region14: #{tpu_custom_call.1} parent=11 // pred_check_branch
          %418 = sbr.rel (%p416) target = $region16
        $region15: #{tpu_custom_call.1} parent=11 // pred_region
          _
        $region16: #{tpu_custom_call.1} parent=11 // pred_fallthru
          _
        // Predicated region
        $region17: #{tpu_custom_call.1} parent=11 // pred_check
          %p419 = pneg %p97
        $region18: #{tpu_custom_call.1} parent=11 // pred_check_branch
          %421 = sbr.rel (%p419) target = $region20
        $region19: #{tpu_custom_call.1} parent=11 // pred_region
          _
        $region20: #{tpu_custom_call.1} parent=11 // pred_fallthru
          _
        // Predicated region
        $region21: #{tpu_custom_call.1} parent=11 // pred_check
          %p422 = pneg %p118
        $region22: #{tpu_custom_call.1} parent=11 // pred_check_branch
          %424 = sbr.rel (%p422) target = $region24
        $region23: #{tpu_custom_call.1} parent=11 // pred_region
          _
        $region24: #{tpu_custom_call.1} parent=11 // pred_fallthru
          _
        // Predicated region
        $region25: #{tpu_custom_call.1} parent=11 // pred_check
          %p425 = pneg %p139
        $region26: #{tpu_custom_call.1} parent=11 // pred_check_branch
          %427 = sbr.rel (%p425) target = $region28
        $region27: #{tpu_custom_call.1} parent=11 // pred_region
          _
        $region28: #{tpu_custom_call.1} parent=11 // pred_fallthru
          _
        // Predicated region
        $region29: #{tpu_custom_call.1} parent=11 // pred_check
          %p428 = pneg %p160
        $region30: #{tpu_custom_call.1} parent=11 // pred_check_branch
          %430 = sbr.rel (%p428) target = $region32
        $region31: #{tpu_custom_call.1} parent=11 // pred_region
          _
        $region32: #{tpu_custom_call.1} parent=11 // pred_fallthru
          _
        // Predicated region
        $region33: #{tpu_custom_call.1} parent=11 // pred_check
          %p431 = pneg %p181
        $region34: #{tpu_custom_call.1} parent=11 // pred_check_branch
          %433 = sbr.rel (%p431) target = $region36
        $region35: #{tpu_custom_call.1} parent=11 // pred_region
          _
        $region36: #{tpu_custom_call.1} parent=11 // pred_fallthru
          _
        // Predicated region
        $region37: #{tpu_custom_call.1} parent=11 // pred_check
          %p434 = pneg %p202
        $region38: #{tpu_custom_call.1} parent=11 // pred_check_branch
          %436 = sbr.rel (%p434) target = $region40
        $region39: #{tpu_custom_call.1} parent=11 // pred_region
          _
        $region40: #{tpu_custom_call.1} parent=11 // pred_fallthru
          _
        // Predicated region
        $region41: #{tpu_custom_call.1} parent=11 // pred_check
          %p437 = pneg %p223
        $region42: #{tpu_custom_call.1} parent=11 // pred_check_branch
          %439 = sbr.rel (%p437) target = $region44
        $region43: #{tpu_custom_call.1} parent=11 // pred_region
          _
        $region44: #{tpu_custom_call.1} parent=11 // pred_fallthru
          _
        // Predicated region
        $region45: #{tpu_custom_call.1} parent=11 // pred_check
          %p440 = pneg %p244
        $region46: #{tpu_custom_call.1} parent=11 // pred_check_branch
          %442 = sbr.rel (%p440) target = $region48
        $region47: #{tpu_custom_call.1} parent=11 // pred_region
          _
        $region48: #{tpu_custom_call.1} parent=11 // pred_fallthru
          _
        // Predicated region
        $region49: #{tpu_custom_call.1} parent=11 // pred_check
          %p443 = pneg %p265
        $region50: #{tpu_custom_call.1} parent=11 // pred_check_branch
          %445 = sbr.rel (%p443) target = $region52
        $region51: #{tpu_custom_call.1} parent=11 // pred_region
          _
        $region52: #{tpu_custom_call.1} parent=11 // pred_fallthru
          _
        // Predicated region
        $region53: #{tpu_custom_call.1} parent=11 // pred_check
          %p446 = pneg %p286
        $region54: #{tpu_custom_call.1} parent=11 // pred_check_branch
          %448 = sbr.rel (%p446) target = $region56
        $region55: #{tpu_custom_call.1} parent=11 // pred_region
          _
        $region56: #{tpu_custom_call.1} parent=11 // pred_fallthru
          _
        // Predicated region
        $region57: #{tpu_custom_call.1} parent=11 // pred_check
          %p449 = pneg %p307
        $region58: #{tpu_custom_call.1} parent=11 // pred_check_branch
          %451 = sbr.rel (%p449) target = $region60
        $region59: #{tpu_custom_call.1} parent=11 // pred_region
          _
        $region60: #{tpu_custom_call.1} parent=11 // pred_fallthru
          _
        // Predicated region
        $region61: #{tpu_custom_call.1} parent=11 // pred_check
          %p452 = pneg %p328
        $region62: #{tpu_custom_call.1} parent=11 // pred_check_branch
          %454 = sbr.rel (%p452) target = $region64
        $region63: #{tpu_custom_call.1} parent=11 // pred_region
          _
        $region64: #{tpu_custom_call.1} parent=11 // pred_fallthru
          _
        // Predicated region
        $region65: #{tpu_custom_call.1} parent=11 // pred_check
          %p455 = pneg %p349
        $region66: #{tpu_custom_call.1} parent=11 // pred_check_branch
          %457 = sbr.rel (%p455) target = $region68
        $region67: #{tpu_custom_call.1} parent=11 // pred_region
          _
        $region68: #{tpu_custom_call.1} parent=11 // pred_fallthru
          _
      $region12: #{tpu_custom_call.1} parent=5 // pred_fallthru
        _
      %p458 = scmp.lt.s32.totalorder %s29, 2
      // Predicated region
      $region69: #{tpu_custom_call.1} parent=5 // pred_check
        %p459 = pneg %p458
      $region70: #{tpu_custom_call.1} parent=5 // pred_check_branch
        %461 = sbr.rel (%p459) target = $region72
      $region71: #{tpu_custom_call.1} parent=5 // pred_region
        // Predicated region
        $region73: #{tpu_custom_call.1} parent=71 // pred_check
          %p462 = pneg %p49
        $region74: #{tpu_custom_call.1} parent=71 // pred_check_branch
          %464 = sbr.rel (%p462) target = $region76
        $region75: #{tpu_custom_call.1} parent=71 // pred_region
          %p465 = scmp.lt.s32.totalorder %s29, 1
          %s466 = scalar_select %p465, %s29, 1
          %s467 = smul.addr %s466, 2
          %s468 = smul.addr %s467, 8
          %s469 = scalar_lea.vmem %s0, %s468
        $region76: #{tpu_custom_call.1} parent=71 // pred_fallthru
          _
      $region72: #{tpu_custom_call.1} parent=5 // pred_fallthru
        _
      %p470 = scmp.le.s32.totalorder 1, %s29
      %p471 = scmp.lt.s32.totalorder %s29, 3
      %p472 = pnand %p470, %p471
      %p473 = pneg %p472
      // Predicated region
      $region77: #{tpu_custom_call.1} parent=5 // pred_check
        _
      $region78: #{tpu_custom_call.1} parent=5 // pred_check_branch
        %475 = sbr.rel (%p472) target = $region80
      $region79: #{tpu_custom_call.1} parent=5 // pred_region
        %s476 = ssub.s32 %s29, 1
        %p477 = scmp.lt.s32.totalorder %s34, 1
        %s478 = scalar_select %p477, %s34, 1
        %s479 = smul.addr %s478, 2
        %s480 = smul.addr %s479, 8
        %s481 = scalar_lea.vmem %s0, %s480
        %p482 = pneg %p55
        %p483 = pneg %p52
        %p484 = pneg %p76
        %p485 = pneg %p73
        %p486 = pneg %p97
        %p487 = pneg %p94
        %p488 = pneg %p118
        %p489 = pneg %p115
        %p490 = pneg %p139
        %p491 = pneg %p136
        %p492 = pneg %p160
        %p493 = pneg %p157
        %p494 = pneg %p181
        %p495 = pneg %p178
        %p496 = pneg %p202
        %p497 = pneg %p199
        %p498 = pneg %p223
        %p499 = pneg %p220
        %p500 = pneg %p244
        %p501 = pneg %p241
        %p502 = pneg %p265
        %p503 = pneg %p262
        %p504 = pneg %p286
        %p505 = pneg %p283
        %p506 = pneg %p307
        %p507 = pneg %p304
        %p508 = pneg %p328
        %p509 = pneg %p325
        %p510 = pneg %p349
        %p511 = pneg %p346
        %p512 = pneg %p375
        %p513 = pneg %p372
        %s514 = sand.u32 %s362, 1
        %s515 = scalar_lea.sflag [#allocation3], %s514
        %s516 = sand.u32 %s362, 1
        %s517 = smul.addr %s516, 16
        %s518 = scalar_lea.vmem [#allocation2], %s517
        %p519 = pneg %p401
        %p520 = pneg %p398
        %s521 = sand.u32 %s388, 1
        %s522 = scalar_lea.sflag [#allocation5], %s521
        %s523 = sand.u32 %s388, 1
        %s524 = smul.addr %s523, 8
        %s525 = scalar_lea.vmem [#allocation4], %s524
        %p526 = scmp.lt.s32.totalorder %s34, 1
        %s527 = scalar_select %p526, %s34, 1
        %s528 = smul.addr %s527, 2
        %s529 = smul.addr %s528, 8
        %s530 = scalar_lea.vmem %s0, %s529
        %v531 = vld [vmem:[%s530] sm:$0xff]
        %v532 = vld [vmem:[%s530 + $0x8] sm:$0xff]
        %v533 = vld [vmem:[%s3] sm:$0x1]
        %v534 = vld [vmem:[%s1] sm:$0xff]
        %v535 = vld [vmem:[%s1 + $0x8] sm:$0xff]
        %vm536 = vcmask 130048
        %v538 = vsel %vm536, %v534, 0
        %v541 = vsel %vm536, %v535, 0
        %543 = vmatprep.subr.mxu0 0.0
        %544 = vmatpush1.msra.mxu0 %v531
        %545 = vmatprep.subr.mxu0 0.0
        %546 = vmatpush1.msra.mxu0 %v532
        %547 = vmatprep.subr.mxu0 0.0
        %548 = vmatpush1.msra.mxu0 0.0
        %549 = vmatprep.subr.mxu0 0.0
        %550 = vmatpush1.msra.mxu0 0.0
        %551 = vmatprep.subr.mxu0 0.0
        %552 = vmatpush1.msra.mxu0 0.0
        %553 = vmatprep.subr.mxu0 0.0
        %554 = vmatpush1.msra.mxu0 0.0
        %555 = vmatprep.subr.mxu0 0.0
        %556 = vmatpush1.msra.mxu0 0.0
        %557 = vmatprep.subr.mxu0 0.0
        %558 = vmatpush1.msra.mxu0 0.0
        %559 = vmatprep.subr.mxu0 0.0
        %560 = vmatpush1.msra.mxu0 0.0
        %561 = vmatprep.subr.mxu0 0.0
        %562 = vmatpush1.msra.mxu0 0.0
        %563 = vmatprep.subr.mxu0 0.0
        %564 = vmatpush1.msra.mxu0 0.0
        %565 = vmatprep.subr.mxu0 0.0
        %566 = vmatpush1.msra.mxu0 0.0
        %567 = vmatprep.subr.mxu0 0.0
        %568 = vmatpush1.msra.mxu0 0.0
        %569 = vmatprep.subr.mxu0 0.0
        %570 = vmatpush1.msra.mxu0 0.0
        %571 = vmatprep.subr.mxu0 0.0
        %572 = vmatpush1.msra.mxu0 0.0
        %573 = vmatprep.subr.mxu0 0.0
        %574 = vmatpush1.msra.mxu0 0.0
        %575 = vmatprep.subr.mxu0 0.0
        %576 = vmatpush1.msra.mxu0 0.0
        %577 = vmatprep.subr.mxu0 0.0
        %578 = vmatpush1.msra.mxu0 0.0
        %579 = vmatprep.subr.mxu0 0.0
        %580 = vmatpush1.msra.mxu0 0.0
        %581 = vmatprep.subr.mxu0 0.0
        %582 = vmatpush1.msra.mxu0 0.0
        %583 = vmatprep.subr.mxu0 0.0
        %584 = vmatpush1.msra.mxu0 0.0
        %585 = vmatprep.subr.mxu0 0.0
        %586 = vmatpush1.msra.mxu0 0.0
        %587 = vmatprep.subr.mxu0 0.0
        %588 = vmatpush1.msra.mxu0 0.0
        %589 = vmatprep.subr.mxu0 0.0
        %590 = vmatpush1.msra.mxu0 0.0
        %591 = vmatprep.subr.mxu0 0.0
        %592 = vmatpush1.msra.mxu0 0.0
        %593 = vmatprep.subr.mxu0 0.0
        %594 = vmatpush1.msra.mxu0 0.0
        %595 = vmatprep.subr.mxu0 0.0
        %596 = vmatpush1.msra.mxu0 0.0
        %597 = vmatprep.subr.mxu0 0.0
        %598 = vmatpush1.msra.mxu0 0.0
        %599 = vmatprep.subr.mxu0 0.0
        %600 = vmatpush1.msra.mxu0 0.0
        %601 = vmatprep.subr.mxu0 0.0
        %602 = vmatpush1.msra.mxu0 0.0
        %603 = vmatprep.subr.mxu0 0.0
        %604 = vmatpush1.msra.mxu0 0.0
        %605 = vmatprep.subr.mxu0 0.0
        %606 = vmatpush1.msra.mxu0 0.0
        %607 = vmatprep.mubr.f32.mxu0 0.0
        %608 = vmatmul.mubr.f32.gmra.mrb[0].mxu0 %v538
        %v609 = vpop.f32.mrb[0].mxu0
        %v610 = vadd.f32 0.0, %v609
        %v611 = vpop.f32.mrb[0].mxu0
        %612 = vmatprep.mubr.f32.mxu0 0.0
        %613 = vmatmul.mubr.f32.gmra.mrb[0].mxu0 %v541
        %v614 = vpop.f32.mrb[0].mxu0
        %v615 = vadd.f32 0.0, %v614
        %v616 = vpop.f32.mrb[0].mxu0
        %617 = vdwg.mxu0
        %v618 = vld [vmem:[%s2] sm:$0xff]
        %v619 = vld [vmem:[%s2 + $0x8] sm:$0xff]
        %v620 = vld [vmem:[%s2 + $0x10] sm:$0xff]
        %v621 = vld [vmem:[%s2 + $0x18] sm:$0xff]
        %v622 = vld [vmem:[%s2 + $0x20] sm:$0xff]
        %v623 = vld [vmem:[%s2 + $0x28] sm:$0xff]
        %v624 = vld [vmem:[%s2 + $0x30] sm:$0xff]
        %v625 = vld [vmem:[%s2 + $0x38] sm:$0xff]
        %s626 = scalar_lea.vmem %s1, 16
        %v627 = vld [vmem:[%s626] sm:$0xff]
        %v628 = vld [vmem:[%s626 + $0x8] sm:$0xff]
        %v630 = vsel %vm536, %v627, 0
        %v633 = vsel %vm536, %v628, 0
        %635 = vmatprep.subr.mxu0 0.0
        %636 = vmatpush1.msra.mxu0 %v531
        %637 = vmatprep.subr.mxu0 0.0
        %638 = vmatpush1.msra.mxu0 %v532
        %639 = vmatprep.subr.mxu0 0.0
        %640 = vmatpush1.msra.mxu0 0.0
        %641 = vmatprep.subr.mxu0 0.0
        %642 = vmatpush1.msra.mxu0 0.0
        %643 = vmatprep.subr.mxu0 0.0
        %644 = vmatpush1.msra.mxu0 0.0
        %645 = vmatprep.subr.mxu0 0.0
        %646 = vmatpush1.msra.mxu0 0.0
        %647 = vmatprep.subr.mxu0 0.0
        %648 = vmatpush1.msra.mxu0 0.0
        %649 = vmatprep.subr.mxu0 0.0
        %650 = vmatpush1.msra.mxu0 0.0
        %651 = vmatprep.subr.mxu0 0.0
        %652 = vmatpush1.msra.mxu0 0.0
        %653 = vmatprep.subr.mxu0 0.0
        %654 = vmatpush1.msra.mxu0 0.0
        %655 = vmatprep.subr.mxu0 0.0
        %656 = vmatpush1.msra.mxu0 0.0
        %657 = vmatprep.subr.mxu0 0.0
        %658 = vmatpush1.msra.mxu0 0.0
        %659 = vmatprep.subr.mxu0 0.0
        %660 = vmatpush1.msra.mxu0 0.0
        %661 = vmatprep.subr.mxu0 0.0
        %662 = vmatpush1.msra.mxu0 0.0
        %663 = vmatprep.subr.mxu0 0.0
        %664 = vmatpush1.msra.mxu0 0.0
        %665 = vmatprep.subr.mxu0 0.0
        %666 = vmatpush1.msra.mxu0 0.0
        %667 = vmatprep.subr.mxu0 0.0
        %668 = vmatpush1.msra.mxu0 0.0
        %669 = vmatprep.subr.mxu0 0.0
        %670 = vmatpush1.msra.mxu0 0.0
        %671 = vmatprep.subr.mxu0 0.0
        %672 = vmatpush1.msra.mxu0 0.0
        %673 = vmatprep.subr.mxu0 0.0
        %674 = vmatpush1.msra.mxu0 0.0
        %675 = vmatprep.subr.mxu0 0.0
        %676 = vmatpush1.msra.mxu0 0.0
        %677 = vmatprep.subr.mxu0 0.0
        %678 = vmatpush1.msra.mxu0 0.0
        %679 = vmatprep.subr.mxu0 0.0
        %680 = vmatpush1.msra.mxu0 0.0
        %681 = vmatprep.subr.mxu0 0.0
        %682 = vmatpush1.msra.mxu0 0.0
        %683 = vmatprep.subr.mxu0 0.0
        %684 = vmatpush1.msra.mxu0 0.0
        %685 = vmatprep.subr.mxu0 0.0
        %686 = vmatpush1.msra.mxu0 0.0
        %687 = vmatprep.subr.mxu0 0.0
        %688 = vmatpush1.msra.mxu0 0.0
        %689 = vmatprep.subr.mxu0 0.0
        %690 = vmatpush1.msra.mxu0 0.0
        %691 = vmatprep.subr.mxu0 0.0
        %692 = vmatpush1.msra.mxu0 0.0
        %693 = vmatprep.subr.mxu0 0.0
        %694 = vmatpush1.msra.mxu0 0.0
        %695 = vmatprep.subr.mxu0 0.0
        %696 = vmatpush1.msra.mxu0 0.0
        %697 = vmatprep.subr.mxu0 0.0
        %698 = vmatpush1.msra.mxu0 0.0
        %699 = vmatprep.mubr.f32.mxu0 0.0
        %700 = vmatmul.mubr.f32.gmra.mrb[0].mxu0 %v630
        %v701 = vpop.f32.mrb[0].mxu0
        %v702 = vadd.f32 0.0, %v701
        %v703 = vpop.f32.mrb[0].mxu0
        %704 = vmatprep.mubr.f32.mxu0 0.0
        %705 = vmatmul.mubr.f32.gmra.mrb[0].mxu0 %v633
        %v706 = vpop.f32.mrb[0].mxu0
        %v707 = vadd.f32 0.0, %v706
        %v708 = vpop.f32.mrb[0].mxu0
        %709 = vdwg.mxu0
        %s710 = scalar_lea.vmem %s2, 64
        %v711 = vld [vmem:[%s710] sm:$0xff]
        %v712 = vld [vmem:[%s710 + $0x8] sm:$0xff]
        %v713 = vld [vmem:[%s710 + $0x10] sm:$0xff]
        %v714 = vld [vmem:[%s710 + $0x18] sm:$0xff]
        %v715 = vld [vmem:[%s710 + $0x20] sm:$0xff]
        %v716 = vld [vmem:[%s710 + $0x28] sm:$0xff]
        %v717 = vld [vmem:[%s710 + $0x30] sm:$0xff]
        %v718 = vld [vmem:[%s710 + $0x38] sm:$0xff]
        %vm719 = vcmask 523264
        %v721 = vsel %vm719, %v702, 0
        %v724 = vsel %vm719, %v707, 0
        %726 = vmatprep.subr.mxu0 0.0
        %727 = vmatpush1.msra.mxu0 %v711
        %728 = vmatprep.subr.mxu0 0.0
        %729 = vmatpush1.msra.mxu0 %v712
        %730 = vmatprep.subr.mxu0 0.0
        %731 = vmatpush1.msra.mxu0 %v713
        %732 = vmatprep.subr.mxu0 0.0
        %733 = vmatpush1.msra.mxu0 %v714
        %734 = vmatprep.subr.mxu0 0.0
        %735 = vmatpush1.msra.mxu0 %v715
        %736 = vmatprep.subr.mxu0 0.0
        %737 = vmatpush1.msra.mxu0 %v716
        %738 = vmatprep.subr.mxu0 0.0
        %739 = vmatpush1.msra.mxu0 %v717
        %740 = vmatprep.subr.mxu0 0.0
        %741 = vmatpush1.msra.mxu0 %v718
        %742 = vmatprep.subr.mxu0 0.0
        %743 = vmatpush1.msra.mxu0 0.0
        %744 = vmatprep.subr.mxu0 0.0
        %745 = vmatpush1.msra.mxu0 0.0
        %746 = vmatprep.subr.mxu0 0.0
        %747 = vmatpush1.msra.mxu0 0.0
        %748 = vmatprep.subr.mxu0 0.0
        %749 = vmatpush1.msra.mxu0 0.0
        %750 = vmatprep.subr.mxu0 0.0
        %751 = vmatpush1.msra.mxu0 0.0
        %752 = vmatprep.subr.mxu0 0.0
        %753 = vmatpush1.msra.mxu0 0.0
        %754 = vmatprep.subr.mxu0 0.0
        %755 = vmatpush1.msra.mxu0 0.0
        %756 = vmatprep.subr.mxu0 0.0
        %757 = vmatpush1.msra.mxu0 0.0
        %758 = vmatprep.subr.mxu0 0.0
        %759 = vmatpush1.msra.mxu0 0.0
        %760 = vmatprep.subr.mxu0 0.0
        %761 = vmatpush1.msra.mxu0 0.0
        %762 = vmatprep.subr.mxu0 0.0
        %763 = vmatpush1.msra.mxu0 0.0
        %764 = vmatprep.subr.mxu0 0.0
        %765 = vmatpush1.msra.mxu0 0.0
        %766 = vmatprep.subr.mxu0 0.0
        %767 = vmatpush1.msra.mxu0 0.0
        %768 = vmatprep.subr.mxu0 0.0
        %769 = vmatpush1.msra.mxu0 0.0
        %770 = vmatprep.subr.mxu0 0.0
        %771 = vmatpush1.msra.mxu0 0.0
        %772 = vmatprep.subr.mxu0 0.0
        %773 = vmatpush1.msra.mxu0 0.0
        %774 = vmatprep.subr.mxu0 0.0
        %775 = vmatpush1.msra.mxu0 0.0
        %776 = vmatprep.subr.mxu0 0.0
        %777 = vmatpush1.msra.mxu0 0.0
        %778 = vmatprep.subr.mxu0 0.0
        %779 = vmatpush1.msra.mxu0 0.0
        %780 = vmatprep.subr.mxu0 0.0
        %781 = vmatpush1.msra.mxu0 0.0
        %782 = vmatprep.subr.mxu0 0.0
        %783 = vmatpush1.msra.mxu0 0.0
        %784 = vmatprep.subr.mxu0 0.0
        %785 = vmatpush1.msra.mxu0 0.0
        %786 = vmatprep.subr.mxu0 0.0
        %787 = vmatpush1.msra.mxu0 0.0
        %788 = vmatprep.subr.mxu0 0.0
        %789 = vmatpush1.msra.mxu0 0.0
        %790 = vmatprep.mubr.f32.mxu0 0.0
        %791 = vmatmul.mubr.f32.gmra.mrb[0].mxu0 %v721
        %v792 = vpop.f32.mrb[0].mxu0
        %v793 = vadd.f32 0.0, %v792
        %v794 = vpop.f32.mrb[0].mxu0
        %795 = vmatprep.mubr.f32.mxu0 0.0
        %796 = vmatmul.mubr.f32.gmra.mrb[0].mxu0 %v724
        %v797 = vpop.f32.mrb[0].mxu0
        %v798 = vadd.f32 0.0, %v797
        %v799 = vpop.f32.mrb[0].mxu0
        %800 = vdwg.mxu0
        %v802 = vsel %vm719, %v610, 0
        %v805 = vsel %vm719, %v615, 0
        %807 = vmatprep.subr.mxu0 0.0
        %808 = vmatpush1.msra.mxu0 %v618
        %809 = vmatprep.subr.mxu0 0.0
        %810 = vmatpush1.msra.mxu0 %v619
        %811 = vmatprep.subr.mxu0 0.0
        %812 = vmatpush1.msra.mxu0 %v620
        %813 = vmatprep.subr.mxu0 0.0
        %814 = vmatpush1.msra.mxu0 %v621
        %815 = vmatprep.subr.mxu0 0.0
        %816 = vmatpush1.msra.mxu0 %v622
        %817 = vmatprep.subr.mxu0 0.0
        %818 = vmatpush1.msra.mxu0 %v623
        %819 = vmatprep.subr.mxu0 0.0
        %820 = vmatpush1.msra.mxu0 %v624
        %821 = vmatprep.subr.mxu0 0.0
        %822 = vmatpush1.msra.mxu0 %v625
        %823 = vmatprep.subr.mxu0 0.0
        %824 = vmatpush1.msra.mxu0 0.0
        %825 = vmatprep.subr.mxu0 0.0
        %826 = vmatpush1.msra.mxu0 0.0
        %827 = vmatprep.subr.mxu0 0.0
        %828 = vmatpush1.msra.mxu0 0.0
        %829 = vmatprep.subr.mxu0 0.0
        %830 = vmatpush1.msra.mxu0 0.0
        %831 = vmatprep.subr.mxu0 0.0
        %832 = vmatpush1.msra.mxu0 0.0
        %833 = vmatprep.subr.mxu0 0.0
        %834 = vmatpush1.msra.mxu0 0.0
        %835 = vmatprep.subr.mxu0 0.0
        %836 = vmatpush1.msra.mxu0 0.0
        %837 = vmatprep.subr.mxu0 0.0
        %838 = vmatpush1.msra.mxu0 0.0
        %839 = vmatprep.subr.mxu0 0.0
        %840 = vmatpush1.msra.mxu0 0.0
        %841 = vmatprep.subr.mxu0 0.0
        %842 = vmatpush1.msra.mxu0 0.0
        %843 = vmatprep.subr.mxu0 0.0
        %844 = vmatpush1.msra.mxu0 0.0
        %845 = vmatprep.subr.mxu0 0.0
        %846 = vmatpush1.msra.mxu0 0.0
        %847 = vmatprep.subr.mxu0 0.0
        %848 = vmatpush1.msra.mxu0 0.0
        %849 = vmatprep.subr.mxu0 0.0
        %850 = vmatpush1.msra.mxu0 0.0
        %851 = vmatprep.subr.mxu0 0.0
        %852 = vmatpush1.msra.mxu0 0.0
        %853 = vmatprep.subr.mxu0 0.0
        %854 = vmatpush1.msra.mxu0 0.0
        %855 = vmatprep.subr.mxu0 0.0
        %856 = vmatpush1.msra.mxu0 0.0
        %857 = vmatprep.subr.mxu0 0.0
        %858 = vmatpush1.msra.mxu0 0.0
        %859 = vmatprep.subr.mxu0 0.0
        %860 = vmatpush1.msra.mxu0 0.0
        %861 = vmatprep.subr.mxu0 0.0
        %862 = vmatpush1.msra.mxu0 0.0
        %863 = vmatprep.subr.mxu0 0.0
        %864 = vmatpush1.msra.mxu0 0.0
        %865 = vmatprep.subr.mxu0 0.0
        %866 = vmatpush1.msra.mxu0 0.0
        %867 = vmatprep.subr.mxu0 0.0
        %868 = vmatpush1.msra.mxu0 0.0
        %869 = vmatprep.subr.mxu0 0.0
        %870 = vmatpush1.msra.mxu0 0.0
        %871 = vmatprep.mubr.f32.mxu0 0.0
        %872 = vmatmul.mubr.f32.gmra.mrb[0].mxu0 %v802
        %v873 = vpop.f32.mrb[0].mxu0
        %v874 = vadd.f32 %v793, %v873
        %v875 = vpop.f32.mrb[0].mxu0
        %876 = vmatprep.mubr.f32.mxu0 0.0
        %877 = vmatmul.mubr.f32.gmra.mrb[0].mxu0 %v805
        %v878 = vpop.f32.mrb[0].mxu0
        %v879 = vadd.f32 %v798, %v878
        %v880 = vpop.f32.mrb[0].mxu0
        %881 = vdwg.mxu0
        %s882 = scalar_lea.vmem %s1, 32
        %v883 = vld [vmem:[%s882] sm:$0xff]
        %v884 = vld [vmem:[%s882 + $0x8] sm:$0xff]
        %v886 = vsel %vm536, %v883, 0
        %v889 = vsel %vm536, %v884, 0
        %891 = vmatprep.subr.mxu0 0.0
        %892 = vmatpush1.msra.mxu0 %v531
        %893 = vmatprep.subr.mxu0 0.0
        %894 = vmatpush1.msra.mxu0 %v532
        %895 = vmatprep.subr.mxu0 0.0
        %896 = vmatpush1.msra.mxu0 0.0
        %897 = vmatprep.subr.mxu0 0.0
        %898 = vmatpush1.msra.mxu0 0.0
        %899 = vmatprep.subr.mxu0 0.0
        %900 = vmatpush1.msra.mxu0 0.0
        %901 = vmatprep.subr.mxu0 0.0
        %902 = vmatpush1.msra.mxu0 0.0
        %903 = vmatprep.subr.mxu0 0.0
        %904 = vmatpush1.msra.mxu0 0.0
        %905 = vmatprep.subr.mxu0 0.0
        %906 = vmatpush1.msra.mxu0 0.0
        %907 = vmatprep.subr.mxu0 0.0
        %908 = vmatpush1.msra.mxu0 0.0
        %909 = vmatprep.subr.mxu0 0.0
        %910 = vmatpush1.msra.mxu0 0.0
        %911 = vmatprep.subr.mxu0 0.0
        %912 = vmatpush1.msra.mxu0 0.0
        %913 = vmatprep.subr.mxu0 0.0
        %914 = vmatpush1.msra.mxu0 0.0
        %915 = vmatprep.subr.mxu0 0.0
        %916 = vmatpush1.msra.mxu0 0.0
        %917 = vmatprep.subr.mxu0 0.0
        %918 = vmatpush1.msra.mxu0 0.0
        %919 = vmatprep.subr.mxu0 0.0
        %920 = vmatpush1.msra.mxu0 0.0
        %921 = vmatprep.subr.mxu0 0.0
        %922 = vmatpush1.msra.mxu0 0.0
        %923 = vmatprep.subr.mxu0 0.0
        %924 = vmatpush1.msra.mxu0 0.0
        %925 = vmatprep.subr.mxu0 0.0
        %926 = vmatpush1.msra.mxu0 0.0
        %927 = vmatprep.subr.mxu0 0.0
        %928 = vmatpush1.msra.mxu0 0.0
        %929 = vmatprep.subr.mxu0 0.0
        %930 = vmatpush1.msra.mxu0 0.0
        %931 = vmatprep.subr.mxu0 0.0
        %932 = vmatpush1.msra.mxu0 0.0
        %933 = vmatprep.subr.mxu0 0.0
        %934 = vmatpush1.msra.mxu0 0.0
        %935 = vmatprep.subr.mxu0 0.0
        %936 = vmatpush1.msra.mxu0 0.0
        %937 = vmatprep.subr.mxu0 0.0
        %938 = vmatpush1.msra.mxu0 0.0
        %939 = vmatprep.subr.mxu0 0.0
        %940 = vmatpush1.msra.mxu0 0.0
        %941 = vmatprep.subr.mxu0 0.0
        %942 = vmatpush1.msra.mxu0 0.0
        %943 = vmatprep.subr.mxu0 0.0
        %944 = vmatpush1.msra.mxu0 0.0
        %945 = vmatprep.subr.mxu0 0.0
        %946 = vmatpush1.msra.mxu0 0.0
        %947 = vmatprep.subr.mxu0 0.0
        %948 = vmatpush1.msra.mxu0 0.0
        %949 = vmatprep.subr.mxu0 0.0
        %950 = vmatpush1.msra.mxu0 0.0
        %951 = vmatprep.subr.mxu0 0.0
        %952 = vmatpush1.msra.mxu0 0.0
        %953 = vmatprep.subr.mxu0 0.0
        %954 = vmatpush1.msra.mxu0 0.0
        %955 = vmatprep.mubr.f32.mxu0 0.0
        %956 = vmatmul.mubr.f32.gmra.mrb[0].mxu0 %v886
        %v957 = vpop.f32.mrb[0].mxu0
        %v958 = vadd.f32 0.0, %v957
        %v959 = vpop.f32.mrb[0].mxu0
        %960 = vmatprep.mubr.f32.mxu0 0.0
        %961 = vmatmul.mubr.f32.gmra.mrb[0].mxu0 %v889
        %v962 = vpop.f32.mrb[0].mxu0
        %v963 = vadd.f32 0.0, %v962
        %v964 = vpop.f32.mrb[0].mxu0
        %965 = vdwg.mxu0
        %s966 = scalar_lea.vmem %s2, 128
        %v967 = vld [vmem:[%s966] sm:$0xff]
        %v968 = vld [vmem:[%s966 + $0x8] sm:$0xff]
        %v969 = vld [vmem:[%s966 + $0x10] sm:$0xff]
        %v970 = vld [vmem:[%s966 + $0x18] sm:$0xff]
        %v971 = vld [vmem:[%s966 + $0x20] sm:$0xff]
        %v972 = vld [vmem:[%s966 + $0x28] sm:$0xff]
        %v973 = vld [vmem:[%s966 + $0x30] sm:$0xff]
        %v974 = vld [vmem:[%s966 + $0x38] sm:$0xff]
        %v976 = vsel %vm719, %v958, 0
        %v979 = vsel %vm719, %v963, 0
        %981 = vmatprep.subr.mxu0 0.0
        %982 = vmatpush1.msra.mxu0 %v967
        %983 = vmatprep.subr.mxu0 0.0
        %984 = vmatpush1.msra.mxu0 %v968
        %985 = vmatprep.subr.mxu0 0.0
        %986 = vmatpush1.msra.mxu0 %v969
        %987 = vmatprep.subr.mxu0 0.0
        %988 = vmatpush1.msra.mxu0 %v970
        %989 = vmatprep.subr.mxu0 0.0
        %990 = vmatpush1.msra.mxu0 %v971
        %991 = vmatprep.subr.mxu0 0.0
        %992 = vmatpush1.msra.mxu0 %v972
        %993 = vmatprep.subr.mxu0 0.0
        %994 = vmatpush1.msra.mxu0 %v973
        %995 = vmatprep.subr.mxu0 0.0
        %996 = vmatpush1.msra.mxu0 %v974
        %997 = vmatprep.subr.mxu0 0.0
        %998 = vmatpush1.msra.mxu0 0.0
        %999 = vmatprep.subr.mxu0 0.0
        %1000 = vmatpush1.msra.mxu0 0.0
        %1001 = vmatprep.subr.mxu0 0.0
        %1002 = vmatpush1.msra.mxu0 0.0
        %1003 = vmatprep.subr.mxu0 0.0
        %1004 = vmatpush1.msra.mxu0 0.0
        %1005 = vmatprep.subr.mxu0 0.0
        %1006 = vmatpush1.msra.mxu0 0.0
        %1007 = vmatprep.subr.mxu0 0.0
        %1008 = vmatpush1.msra.mxu0 0.0
        %1009 = vmatprep.subr.mxu0 0.0
        %1010 = vmatpush1.msra.mxu0 0.0
        %1011 = vmatprep.subr.mxu0 0.0
        %1012 = vmatpush1.msra.mxu0 0.0
        %1013 = vmatprep.subr.mxu0 0.0
        %1014 = vmatpush1.msra.mxu0 0.0
        %1015 = vmatprep.subr.mxu0 0.0
        %1016 = vmatpush1.msra.mxu0 0.0
        %1017 = vmatprep.subr.mxu0 0.0
        %1018 = vmatpush1.msra.mxu0 0.0
        %1019 = vmatprep.subr.mxu0 0.0
        %1020 = vmatpush1.msra.mxu0 0.0
        %1021 = vmatprep.subr.mxu0 0.0
        %1022 = vmatpush1.msra.mxu0 0.0
        %1023 = vmatprep.subr.mxu0 0.0
        %1024 = vmatpush1.msra.mxu0 0.0
        %1025 = vmatprep.subr.mxu0 0.0
        %1026 = vmatpush1.msra.mxu0 0.0
        %1027 = vmatprep.subr.mxu0 0.0
        %1028 = vmatpush1.msra.mxu0 0.0
        %1029 = vmatprep.subr.mxu0 0.0
        %1030 = vmatpush1.msra.mxu0 0.0
        %1031 = vmatprep.subr.mxu0 0.0
        %1032 = vmatpush1.msra.mxu0 0.0
        %1033 = vmatprep.subr.mxu0 0.0
        %1034 = vmatpush1.msra.mxu0 0.0
        %1035 = vmatprep.subr.mxu0 0.0
        %1036 = vmatpush1.msra.mxu0 0.0
        %1037 = vmatprep.subr.mxu0 0.0
        %1038 = vmatpush1.msra.mxu0 0.0
        %1039 = vmatprep.subr.mxu0 0.0
        %1040 = vmatpush1.msra.mxu0 0.0
        %1041 = vmatprep.subr.mxu0 0.0
        %1042 = vmatpush1.msra.mxu0 0.0
        %1043 = vmatprep.subr.mxu0 0.0
        %1044 = vmatpush1.msra.mxu0 0.0
        %1045 = vmatprep.mubr.f32.mxu0 0.0
        %1046 = vmatmul.mubr.f32.gmra.mrb[0].mxu0 %v976
        %v1047 = vpop.f32.mrb[0].mxu0
        %v1048 = vadd.f32 0.0, %v1047
        %v1049 = vpop.f32.mrb[0].mxu0
        %1050 = vmatprep.mubr.f32.mxu0 0.0
        %1051 = vmatmul.mubr.f32.gmra.mrb[0].mxu0 %v979
        %v1052 = vpop.f32.mrb[0].mxu0
        %v1053 = vadd.f32 0.0, %v1052
        %v1054 = vpop.f32.mrb[0].mxu0
        %1055 = vdwg.mxu0
        %v1056 = vadd.f32 %v874, %v1048
        %v1057 = vadd.f32 %v879, %v1053
        %v1059 = vlaneseq
        %v1060 = vshrl.u32 %v1059, 7
        %v1061 = vsub.s32 0, %v1060
        %v1062 = vrot.slane %v533, %v1061
        %v1064 = vadd.f32 %v1056, %v1062
        %v1065 = vadd.f32 %v1057, %v1062
        %v1066 = vld [vmem:[%s8] sm:$0xff]
        %v1067 = vld [vmem:[%s8 + $0x8] sm:$0xff]
        %v1068 = vld [vmem:[%s8 + $0x10] sm:$0xff]
        %v1069 = vld [vmem:[%s8 + $0x18] sm:$0xff]
        %v1070 = vld [vmem:[%s8 + $0x20] sm:$0xff]
        %v1071 = vld [vmem:[%s8 + $0x28] sm:$0xff]
        %v1072 = vld [vmem:[%s8 + $0x30] sm:$0xff]
        %v1073 = vld [vmem:[%s8 + $0x38] sm:$0xff]
        %v1074 = vld [vmem:[%s8 + $0x40] sm:$0xff]
        %v1075 = vld [vmem:[%s8 + $0x48] sm:$0xff]
        %v1076 = vld [vmem:[%s8 + $0x50] sm:$0xff]
        %v1077 = vld [vmem:[%s8 + $0x58] sm:$0xff]
        %v1078 = vld [vmem:[%s8 + $0x60] sm:$0xff]
        %v1079 = vld [vmem:[%s8 + $0x68] sm:$0xff]
        %v1080 = vld [vmem:[%s8 + $0x70] sm:$0xff]
        %v1081 = vld [vmem:[%s8 + $0x78] sm:$0xff]
        %1082 = vmatprep.subr.mxu0 0.0
        %1083 = vmatpush1.msra.mxu0 %v1066
        %1084 = vmatprep.subr.mxu0 0.0
        %1085 = vmatpush1.msra.mxu0 %v1067
        %1086 = vmatprep.subr.mxu0 0.0
        %1087 = vmatpush1.msra.mxu0 %v1068
        %1088 = vmatprep.subr.mxu0 0.0
        %1089 = vmatpush1.msra.mxu0 %v1069
        %1090 = vmatprep.subr.mxu0 0.0
        %1091 = vmatpush1.msra.mxu0 %v1070
        %1092 = vmatprep.subr.mxu0 0.0
        %1093 = vmatpush1.msra.mxu0 %v1071
        %1094 = vmatprep.subr.mxu0 0.0
        %1095 = vmatpush1.msra.mxu0 %v1072
        %1096 = vmatprep.subr.mxu0 0.0
        %1097 = vmatpush1.msra.mxu0 %v1073
        %1098 = vmatprep.subr.mxu0 0.0
        %1099 = vmatpush1.msra.mxu0 %v1074
        %1100 = vmatprep.subr.mxu0 0.0
        %1101 = vmatpush1.msra.mxu0 %v1075
        %1102 = vmatprep.subr.mxu0 0.0
        %1103 = vmatpush1.msra.mxu0 %v1076
        %1104 = vmatprep.subr.mxu0 0.0
        %1105 = vmatpush1.msra.mxu0 %v1077
        %1106 = vmatprep.subr.mxu0 0.0
        %1107 = vmatpush1.msra.mxu0 %v1078
        %1108 = vmatprep.subr.mxu0 0.0
        %1109 = vmatpush1.msra.mxu0 %v1079
        %1110 = vmatprep.subr.mxu0 0.0
        %1111 = vmatpush1.msra.mxu0 %v1080
        %1112 = vmatprep.subr.mxu0 0.0
        %1113 = vmatpush1.msra.mxu0 %v1081
        %1114 = vmatprep.subr.mxu0 0.0
        %1115 = vmatpush1.msra.mxu0 0.0
        %1116 = vmatprep.subr.mxu0 0.0
        %1117 = vmatpush1.msra.mxu0 0.0
        %1118 = vmatprep.subr.mxu0 0.0
        %1119 = vmatpush1.msra.mxu0 0.0
        %1120 = vmatprep.subr.mxu0 0.0
        %1121 = vmatpush1.msra.mxu0 0.0
        %1122 = vmatprep.subr.mxu0 0.0
        %1123 = vmatpush1.msra.mxu0 0.0
        %1124 = vmatprep.subr.mxu0 0.0
        %1125 = vmatpush1.msra.mxu0 0.0
        %1126 = vmatprep.subr.mxu0 0.0
        %1127 = vmatpush1.msra.mxu0 0.0
        %1128 = vmatprep.subr.mxu0 0.0
        %1129 = vmatpush1.msra.mxu0 0.0
        %1130 = vmatprep.subr.mxu0 0.0
        %1131 = vmatpush1.msra.mxu0 0.0
        %1132 = vmatprep.subr.mxu0 0.0
        %1133 = vmatpush1.msra.mxu0 0.0
        %1134 = vmatprep.subr.mxu0 0.0
        %1135 = vmatpush1.msra.mxu0 0.0
        %1136 = vmatprep.subr.mxu0 0.0
        %1137 = vmatpush1.msra.mxu0 0.0
        %1138 = vmatprep.subr.mxu0 0.0
        %1139 = vmatpush1.msra.mxu0 0.0
        %1140 = vmatprep.subr.mxu0 0.0
        %1141 = vmatpush1.msra.mxu0 0.0
        %1142 = vmatprep.subr.mxu0 0.0
        %1143 = vmatpush1.msra.mxu0 0.0
        %1144 = vmatprep.subr.mxu0 0.0
        %1145 = vmatpush1.msra.mxu0 0.0
        %1146 = vmatprep.mubr.f32.mxu0 0.0
        %1147 = vmatmul.mubr.f32.gmra.mrb[0].mxu0 %v1064
        %v1148 = vpop.f32.mrb[0].mxu0
        %v1149 = vadd.f32 0.0, %v1148
        %v1150 = vpop.f32.mrb[0].mxu0
        %1151 = vmatprep.mubr.f32.mxu0 0.0
        %1152 = vmatmul.mubr.f32.gmra.mrb[0].mxu0 %v1065
        %v1153 = vpop.f32.mrb[0].mxu0
        %v1154 = vadd.f32 0.0, %v1153
        %v1155 = vpop.f32.mrb[0].mxu0
        %1156 = vdwg.mxu0
        %vm1157 = vcmask 64512
        %v1158 = vsel %vm1157, %v1149, 0.0
        %v1159 = vsel %vm1157, %v1154, 0.0
        %v1160 = vadd.f32 %v1158, %v1159
        %v1161 = vrot.slane %v1160, 4
        %v1162 = vadd.f32 %v1160, %v1161
        %v1163 = vrot.slane %v1162, 2
        %v1164 = vadd.f32 %v1162, %v1163
        %v1165 = vrot.slane %v1164, 1
        %v1166 = vadd.f32 %v1164, %v1165
        %v1167 = vrcp.pop 16.0
        %v1168 = vmul.f32 %v1166, %v1167
        %v1169 = vld [vmem:[%s9] sm:$0xff]
        %v1171 = vsel %vm1157, %v1168, 0
        %1173 = vmatprep.subr.mxu0 0.0
        %1174 = vmatpush1.msra.mxu0 %v1169
        %1175 = vmatprep.subr.mxu0 0.0
        %1176 = vmatpush1.msra.mxu0 0.0
        %1177 = vmatprep.subr.mxu0 0.0
        %1178 = vmatpush1.msra.mxu0 0.0
        %1179 = vmatprep.subr.mxu0 0.0
        %1180 = vmatpush1.msra.mxu0 0.0
        %1181 = vmatprep.subr.mxu0 0.0
        %1182 = vmatpush1.msra.mxu0 0.0
        %1183 = vmatprep.subr.mxu0 0.0
        %1184 = vmatpush1.msra.mxu0 0.0
        %1185 = vmatprep.subr.mxu0 0.0
        %1186 = vmatpush1.msra.mxu0 0.0
        %1187 = vmatprep.subr.mxu0 0.0
        %1188 = vmatpush1.msra.mxu0 0.0
        %1189 = vmatprep.subr.mxu0 0.0
        %1190 = vmatpush1.msra.mxu0 0.0
        %1191 = vmatprep.subr.mxu0 0.0
        %1192 = vmatpush1.msra.mxu0 0.0
        %1193 = vmatprep.subr.mxu0 0.0
        %1194 = vmatpush1.msra.mxu0 0.0
        %1195 = vmatprep.subr.mxu0 0.0
        %1196 = vmatpush1.msra.mxu0 0.0
        %1197 = vmatprep.subr.mxu0 0.0
        %1198 = vmatpush1.msra.mxu0 0.0
        %1199 = vmatprep.subr.mxu0 0.0
        %1200 = vmatpush1.msra.mxu0 0.0
        %1201 = vmatprep.subr.mxu0 0.0
        %1202 = vmatpush1.msra.mxu0 0.0
        %1203 = vmatprep.subr.mxu0 0.0
        %1204 = vmatpush1.msra.mxu0 0.0
        %1205 = vmatprep.subr.mxu0 0.0
        %1206 = vmatpush1.msra.mxu0 0.0
        %1207 = vmatprep.subr.mxu0 0.0
        %1208 = vmatpush1.msra.mxu0 0.0
        %1209 = vmatprep.subr.mxu0 0.0
        %1210 = vmatpush1.msra.mxu0 0.0
        %1211 = vmatprep.subr.mxu0 0.0
        %1212 = vmatpush1.msra.mxu0 0.0
        %1213 = vmatprep.subr.mxu0 0.0
        %1214 = vmatpush1.msra.mxu0 0.0
        %1215 = vmatprep.subr.mxu0 0.0
        %1216 = vmatpush1.msra.mxu0 0.0
        %1217 = vmatprep.subr.mxu0 0.0
        %1218 = vmatpush1.msra.mxu0 0.0
        %1219 = vmatprep.subr.mxu0 0.0
        %1220 = vmatpush1.msra.mxu0 0.0
        %1221 = vmatprep.subr.mxu0 0.0
        %1222 = vmatpush1.msra.mxu0 0.0
        %1223 = vmatprep.subr.mxu0 0.0
        %1224 = vmatpush1.msra.mxu0 0.0
        %1225 = vmatprep.subr.mxu0 0.0
        %1226 = vmatpush1.msra.mxu0 0.0
        %1227 = vmatprep.subr.mxu0 0.0
        %1228 = vmatpush1.msra.mxu0 0.0
        %1229 = vmatprep.subr.mxu0 0.0
        %1230 = vmatpush1.msra.mxu0 0.0
        %1231 = vmatprep.subr.mxu0 0.0
        %1232 = vmatpush1.msra.mxu0 0.0
        %1233 = vmatprep.subr.mxu0 0.0
        %1234 = vmatpush1.msra.mxu0 0.0
        %1235 = vmatprep.subr.mxu0 0.0
        %1236 = vmatpush1.msra.mxu0 0.0
        %1237 = vmatprep.mubr.f32.mxu0 0.0
        %1238 = vmatmul.mubr.f32.gmra.mrb[0].mxu0 %v1171
        %v1239 = vpop.f32.mrb[0].mxu0
        %v1240 = vadd.f32 0.0, %v1239
        %v1241 = vpop.f32.mrb[0].mxu0
        %1242 = vmatprep.mubr.f32.mxu0 0.0
        %1243 = vmatmul.mubr.f32.gmra.mrb[0].mxu0 %v1171
        %v1244 = vpop.f32.mrb[0].mxu0
        %v1245 = vadd.f32 0.0, %v1244
        %v1246 = vpop.f32.mrb[0].mxu0
        %1247 = vdwg.mxu0
        %v1248 = vsub.f32 %v1064, %v1240
        %v1249 = vsub.f32 %v1065, %v1245
        %v1250 = vmul.f32 %v1248, %v1248
        %v1251 = vmul.f32 %v1249, %v1249
        %1252 = vmatprep.subr.mxu0 0.0
        %1253 = vmatpush1.msra.mxu0 %v1066
        %1254 = vmatprep.subr.mxu0 0.0
        %1255 = vmatpush1.msra.mxu0 %v1067
        %1256 = vmatprep.subr.mxu0 0.0
        %1257 = vmatpush1.msra.mxu0 %v1068
        %1258 = vmatprep.subr.mxu0 0.0
        %1259 = vmatpush1.msra.mxu0 %v1069
        %1260 = vmatprep.subr.mxu0 0.0
        %1261 = vmatpush1.msra.mxu0 %v1070
        %1262 = vmatprep.subr.mxu0 0.0
        %1263 = vmatpush1.msra.mxu0 %v1071
        %1264 = vmatprep.subr.mxu0 0.0
        %1265 = vmatpush1.msra.mxu0 %v1072
        %1266 = vmatprep.subr.mxu0 0.0
        %1267 = vmatpush1.msra.mxu0 %v1073
        %1268 = vmatprep.subr.mxu0 0.0
        %1269 = vmatpush1.msra.mxu0 %v1074
        %1270 = vmatprep.subr.mxu0 0.0
        %1271 = vmatpush1.msra.mxu0 %v1075
        %1272 = vmatprep.subr.mxu0 0.0
        %1273 = vmatpush1.msra.mxu0 %v1076
        %1274 = vmatprep.subr.mxu0 0.0
        %1275 = vmatpush1.msra.mxu0 %v1077
        %1276 = vmatprep.subr.mxu0 0.0
        %1277 = vmatpush1.msra.mxu0 %v1078
        %1278 = vmatprep.subr.mxu0 0.0
        %1279 = vmatpush1.msra.mxu0 %v1079
        %1280 = vmatprep.subr.mxu0 0.0
        %1281 = vmatpush1.msra.mxu0 %v1080
        %1282 = vmatprep.subr.mxu0 0.0
        %1283 = vmatpush1.msra.mxu0 %v1081
        %1284 = vmatprep.subr.mxu0 0.0
        %1285 = vmatpush1.msra.mxu0 0.0
        %1286 = vmatprep.subr.mxu0 0.0
        %1287 = vmatpush1.msra.mxu0 0.0
        %1288 = vmatprep.subr.mxu0 0.0
        %1289 = vmatpush1.msra.mxu0 0.0
        %1290 = vmatprep.subr.mxu0 0.0
        %1291 = vmatpush1.msra.mxu0 0.0
        %1292 = vmatprep.subr.mxu0 0.0
        %1293 = vmatpush1.msra.mxu0 0.0
        %1294 = vmatprep.subr.mxu0 0.0
        %1295 = vmatpush1.msra.mxu0 0.0
        %1296 = vmatprep.subr.mxu0 0.0
        %1297 = vmatpush1.msra.mxu0 0.0
        %1298 = vmatprep.subr.mxu0 0.0
        %1299 = vmatpush1.msra.mxu0 0.0
        %1300 = vmatprep.subr.mxu0 0.0
        %1301 = vmatpush1.msra.mxu0 0.0
        %1302 = vmatprep.subr.mxu0 0.0
        %1303 = vmatpush1.msra.mxu0 0.0
        %1304 = vmatprep.subr.mxu0 0.0
        %1305 = vmatpush1.msra.mxu0 0.0
        %1306 = vmatprep.subr.mxu0 0.0
        %1307 = vmatpush1.msra.mxu0 0.0
        %1308 = vmatprep.subr.mxu0 0.0
        %1309 = vmatpush1.msra.mxu0 0.0
        %1310 = vmatprep.subr.mxu0 0.0
        %1311 = vmatpush1.msra.mxu0 0.0
        %1312 = vmatprep.subr.mxu0 0.0
        %1313 = vmatpush1.msra.mxu0 0.0
        %1314 = vmatprep.subr.mxu0 0.0
        %1315 = vmatpush1.msra.mxu0 0.0
        %1316 = vmatprep.mubr.f32.mxu0 0.0
        %1317 = vmatmul.mubr.f32.gmra.mrb[0].mxu0 %v1250
        %v1318 = vpop.f32.mrb[0].mxu0
        %v1319 = vadd.f32 0.0, %v1318
        %v1320 = vpop.f32.mrb[0].mxu0
        %1321 = vmatprep.mubr.f32.mxu0 0.0
        %1322 = vmatmul.mubr.f32.gmra.mrb[0].mxu0 %v1251
        %v1323 = vpop.f32.mrb[0].mxu0
        %v1324 = vadd.f32 0.0, %v1323
        %v1325 = vpop.f32.mrb[0].mxu0
        %1326 = vdwg.mxu0
        %v1327 = vsel %vm1157, %v1319, 0.0
        %v1328 = vsel %vm1157, %v1324, 0.0
        %v1329 = vadd.f32 %v1327, %v1328
        %v1330 = vrot.slane %v1329, 4
        %v1331 = vadd.f32 %v1329, %v1330
        %v1332 = vrot.slane %v1331, 2
        %v1333 = vadd.f32 %v1331, %v1332
        %v1334 = vrot.slane %v1333, 1
        %v1335 = vadd.f32 %v1333, %v1334
        %v1336 = vmul.f32 %v1335, %v1167
        %v1337 = vadd.f32 %v1336, 1e-05
        %v1338 = vrsqrt.pop %v1337
        %v1339 = vld [vmem:[%s12] sm:$0x1]
        %v1340 = vld [vmem:[%s10] sm:$0x1]
        %v1341 = vld [vmem:[%s11] sm:$0x1]
        %v1342 = vmul.f32 %v1338, %v1340
        %v1343 = vmul.f32 %v1339, %v1342
        %v1344 = vsub.f32 1.0, %v1339
        %v1345 = vadd.f32 %v1343, %v1344
        %v1346 = vmul.f32 %v1168, %v1338
        %v1347 = vmul.f32 %v1346, %v1340
        %v1348 = vsub.f32 %v1341, %v1347
        %v1349 = vmul.f32 %v1339, %v1348
        %v1351 = vlaneseq
        %v1352 = vshrl.u32 %v1351, 7
        %v1353 = vsub.s32 0, %v1352
        %v1354 = vrot.slane %v1345, %v1353
        %v1355 = vsel %vm1157, %v1354, 0
        %1357 = vmatprep.subr.mxu0 0.0
        %1358 = vmatpush1.msra.mxu0 %v1169
        %1359 = vmatprep.subr.mxu0 0.0
        %1360 = vmatpush1.msra.mxu0 0.0
        %1361 = vmatprep.subr.mxu0 0.0
        %1362 = vmatpush1.msra.mxu0 0.0
        %1363 = vmatprep.subr.mxu0 0.0
        %1364 = vmatpush1.msra.mxu0 0.0
        %1365 = vmatprep.subr.mxu0 0.0
        %1366 = vmatpush1.msra.mxu0 0.0
        %1367 = vmatprep.subr.mxu0 0.0
        %1368 = vmatpush1.msra.mxu0 0.0
        %1369 = vmatprep.subr.mxu0 0.0
        %1370 = vmatpush1.msra.mxu0 0.0
        %1371 = vmatprep.subr.mxu0 0.0
        %1372 = vmatpush1.msra.mxu0 0.0
        %1373 = vmatprep.subr.mxu0 0.0
        %1374 = vmatpush1.msra.mxu0 0.0
        %1375 = vmatprep.subr.mxu0 0.0
        %1376 = vmatpush1.msra.mxu0 0.0
        %1377 = vmatprep.subr.mxu0 0.0
        %1378 = vmatpush1.msra.mxu0 0.0
        %1379 = vmatprep.subr.mxu0 0.0
        %1380 = vmatpush1.msra.mxu0 0.0
        %1381 = vmatprep.subr.mxu0 0.0
        %1382 = vmatpush1.msra.mxu0 0.0
        %1383 = vmatprep.subr.mxu0 0.0
        %1384 = vmatpush1.msra.mxu0 0.0
        %1385 = vmatprep.subr.mxu0 0.0
        %1386 = vmatpush1.msra.mxu0 0.0
        %1387 = vmatprep.subr.mxu0 0.0
        %1388 = vmatpush1.msra.mxu0 0.0
        %1389 = vmatprep.subr.mxu0 0.0
        %1390 = vmatpush1.msra.mxu0 0.0
        %1391 = vmatprep.subr.mxu0 0.0
        %1392 = vmatpush1.msra.mxu0 0.0
        %1393 = vmatprep.subr.mxu0 0.0
        %1394 = vmatpush1.msra.mxu0 0.0
        %1395 = vmatprep.subr.mxu0 0.0
        %1396 = vmatpush1.msra.mxu0 0.0
        %1397 = vmatprep.subr.mxu0 0.0
        %1398 = vmatpush1.msra.mxu0 0.0
        %1399 = vmatprep.subr.mxu0 0.0
        %1400 = vmatpush1.msra.mxu0 0.0
        %1401 = vmatprep.subr.mxu0 0.0
        %1402 = vmatpush1.msra.mxu0 0.0
        %1403 = vmatprep.subr.mxu0 0.0
        %1404 = vmatpush1.msra.mxu0 0.0
        %1405 = vmatprep.subr.mxu0 0.0
        %1406 = vmatpush1.msra.mxu0 0.0
        %1407 = vmatprep.subr.mxu0 0.0
        %1408 = vmatpush1.msra.mxu0 0.0
        %1409 = vmatprep.subr.mxu0 0.0
        %1410 = vmatpush1.msra.mxu0 0.0
        %1411 = vmatprep.subr.mxu0 0.0
        %1412 = vmatpush1.msra.mxu0 0.0
        %1413 = vmatprep.subr.mxu0 0.0
        %1414 = vmatpush1.msra.mxu0 0.0
        %1415 = vmatprep.subr.mxu0 0.0
        %1416 = vmatpush1.msra.mxu0 0.0
        %1417 = vmatprep.subr.mxu0 0.0
        %1418 = vmatpush1.msra.mxu0 0.0
        %1419 = vmatprep.subr.mxu0 0.0
        %1420 = vmatpush1.msra.mxu0 0.0
        %1421 = vmatprep.mubr.f32.mxu0 0.0
        %1422 = vmatmul.mubr.f32.gmra.mrb[0].mxu0 %v1355
        %v1423 = vpop.f32.mrb[0].mxu0
        %v1424 = vadd.f32 0.0, %v1423
        %v1425 = vpop.f32.mrb[0].mxu0
        %1426 = vmatprep.mubr.f32.mxu0 0.0
        %1427 = vmatmul.mubr.f32.gmra.mrb[0].mxu0 %v1355
        %v1428 = vpop.f32.mrb[0].mxu0
        %v1429 = vadd.f32 0.0, %v1428
        %v1430 = vpop.f32.mrb[0].mxu0
        %1431 = vdwg.mxu0
        %v1433 = vlaneseq
        %v1434 = vshrl.u32 %v1433, 7
        %v1435 = vsub.s32 0, %v1434
        %v1436 = vrot.slane %v1349, %v1435
        %v1437 = vsel %vm1157, %v1436, 0
        %1439 = vmatprep.subr.mxu0 0.0
        %1440 = vmatpush1.msra.mxu0 %v1169
        %1441 = vmatprep.subr.mxu0 0.0
        %1442 = vmatpush1.msra.mxu0 0.0
        %1443 = vmatprep.subr.mxu0 0.0
        %1444 = vmatpush1.msra.mxu0 0.0
        %1445 = vmatprep.subr.mxu0 0.0
        %1446 = vmatpush1.msra.mxu0 0.0
        %1447 = vmatprep.subr.mxu0 0.0
        %1448 = vmatpush1.msra.mxu0 0.0
        %1449 = vmatprep.subr.mxu0 0.0
        %1450 = vmatpush1.msra.mxu0 0.0
        %1451 = vmatprep.subr.mxu0 0.0
        %1452 = vmatpush1.msra.mxu0 0.0
        %1453 = vmatprep.subr.mxu0 0.0
        %1454 = vmatpush1.msra.mxu0 0.0
        %1455 = vmatprep.subr.mxu0 0.0
        %1456 = vmatpush1.msra.mxu0 0.0
        %1457 = vmatprep.subr.mxu0 0.0
        %1458 = vmatpush1.msra.mxu0 0.0
        %1459 = vmatprep.subr.mxu0 0.0
        %1460 = vmatpush1.msra.mxu0 0.0
        %1461 = vmatprep.subr.mxu0 0.0
        %1462 = vmatpush1.msra.mxu0 0.0
        %1463 = vmatprep.subr.mxu0 0.0
        %1464 = vmatpush1.msra.mxu0 0.0
        %1465 = vmatprep.subr.mxu0 0.0
        %1466 = vmatpush1.msra.mxu0 0.0
        %1467 = vmatprep.subr.mxu0 0.0
        %1468 = vmatpush1.msra.mxu0 0.0
        %1469 = vmatprep.subr.mxu0 0.0
        %1470 = vmatpush1.msra.mxu0 0.0
        %1471 = vmatprep.subr.mxu0 0.0
        %1472 = vmatpush1.msra.mxu0 0.0
        %1473 = vmatprep.subr.mxu0 0.0
        %1474 = vmatpush1.msra.mxu0 0.0
        %1475 = vmatprep.subr.mxu0 0.0
        %1476 = vmatpush1.msra.mxu0 0.0
        %1477 = vmatprep.subr.mxu0 0.0
        %1478 = vmatpush1.msra.mxu0 0.0
        %1479 = vmatprep.subr.mxu0 0.0
        %1480 = vmatpush1.msra.mxu0 0.0
        %1481 = vmatprep.subr.mxu0 0.0
        %1482 = vmatpush1.msra.mxu0 0.0
        %1483 = vmatprep.subr.mxu0 0.0
        %1484 = vmatpush1.msra.mxu0 0.0
        %1485 = vmatprep.subr.mxu0 0.0
        %1486 = vmatpush1.msra.mxu0 0.0
        %1487 = vmatprep.subr.mxu0 0.0
        %1488 = vmatpush1.msra.mxu0 0.0
        %1489 = vmatprep.subr.mxu0 0.0
        %1490 = vmatpush1.msra.mxu0 0.0
        %1491 = vmatprep.subr.mxu0 0.0
        %1492 = vmatpush1.msra.mxu0 0.0
        %1493 = vmatprep.subr.mxu0 0.0
        %1494 = vmatpush1.msra.mxu0 0.0
        %1495 = vmatprep.subr.mxu0 0.0
        %1496 = vmatpush1.msra.mxu0 0.0
        %1497 = vmatprep.subr.mxu0 0.0
        %1498 = vmatpush1.msra.mxu0 0.0
        %1499 = vmatprep.subr.mxu0 0.0
        %1500 = vmatpush1.msra.mxu0 0.0
        %1501 = vmatprep.subr.mxu0 0.0
        %1502 = vmatpush1.msra.mxu0 0.0
        %1503 = vmatprep.mubr.f32.mxu0 0.0
        %1504 = vmatmul.mubr.f32.gmra.mrb[0].mxu0 %v1437
        %v1505 = vpop.f32.mrb[0].mxu0
        %v1506 = vadd.f32 0.0, %v1505
        %v1507 = vpop.f32.mrb[0].mxu0
        %1508 = vmatprep.mubr.f32.mxu0 0.0
        %1509 = vmatmul.mubr.f32.gmra.mrb[0].mxu0 %v1437
        %v1510 = vpop.f32.mrb[0].mxu0
        %v1511 = vadd.f32 0.0, %v1510
        %v1512 = vpop.f32.mrb[0].mxu0
        %1513 = vdwg.mxu0
        %v1514 = vmul.f32 %v1064, %v1424
        %v1515 = vmul.f32 %v1065, %v1429
        %v1516 = vadd.f32 %v1514, %v1506
        %v1517 = vadd.f32 %v1515, %v1511
        %vm1518 = vcmp.ge.f32.partialorder %v1516, 0.0
        %vm1519 = vcmp.ge.f32.partialorder %v1517, 0.0
        %v1520 = vmul.f32 %v1516, 0.2
        %v1521 = vmul.f32 %v1517, 0.2
        %v1522 = vsel %vm1518, %v1516, %v1520
        %v1523 = vsel %vm1519, %v1517, %v1521
        %v1524 = vld [vmem:[%s5] sm:$0x1]
        %1525 = vmatprep.subr.mxu0 0.0
        %1526 = vmatpush1.msra.mxu0 %v1522
        %1527 = vmatprep.subr.mxu0 0.0
        %1528 = vmatpush1.msra.mxu0 %v1523
        %1529 = vmatprep.subr.mxu0 0.0
        %1530 = vmatpush1.msra.mxu0 0.0
        %1531 = vmatprep.subr.mxu0 0.0
        %1532 = vmatpush1.msra.mxu0 0.0
        %1533 = vmatprep.subr.mxu0 0.0
        %1534 = vmatpush1.msra.mxu0 0.0
        %1535 = vmatprep.subr.mxu0 0.0
        %1536 = vmatpush1.msra.mxu0 0.0
        %1537 = vmatprep.subr.mxu0 0.0
        %1538 = vmatpush1.msra.mxu0 0.0
        %1539 = vmatprep.subr.mxu0 0.0
        %1540 = vmatpush1.msra.mxu0 0.0
        %1541 = vmatprep.subr.mxu0 0.0
        %1542 = vmatpush1.msra.mxu0 0.0
        %1543 = vmatprep.subr.mxu0 0.0
        %1544 = vmatpush1.msra.mxu0 0.0
        %1545 = vmatprep.subr.mxu0 0.0
        %1546 = vmatpush1.msra.mxu0 0.0
        %1547 = vmatprep.subr.mxu0 0.0
        %1548 = vmatpush1.msra.mxu0 0.0
        %1549 = vmatprep.subr.mxu0 0.0
        %1550 = vmatpush1.msra.mxu0 0.0
        %1551 = vmatprep.subr.mxu0 0.0
        %1552 = vmatpush1.msra.mxu0 0.0
        %1553 = vmatprep.subr.mxu0 0.0
        %1554 = vmatpush1.msra.mxu0 0.0
        %1555 = vmatprep.subr.mxu0 0.0
        %1556 = vmatpush1.msra.mxu0 0.0
        %1557 = vmatprep.subr.mxu0 0.0
        %1558 = vmatpush1.msra.mxu0 0.0
        %1559 = vmatprep.subr.mxu0 0.0
        %1560 = vmatpush1.msra.mxu0 0.0
        %1561 = vmatprep.subr.mxu0 0.0
        %1562 = vmatpush1.msra.mxu0 0.0
        %1563 = vmatprep.subr.mxu0 0.0
        %1564 = vmatpush1.msra.mxu0 0.0
        %1565 = vmatprep.subr.mxu0 0.0
        %1566 = vmatpush1.msra.mxu0 0.0
        %1567 = vmatprep.subr.mxu0 0.0
        %1568 = vmatpush1.msra.mxu0 0.0
        %1569 = vmatprep.subr.mxu0 0.0
        %1570 = vmatpush1.msra.mxu0 0.0
        %1571 = vmatprep.subr.mxu0 0.0
        %1572 = vmatpush1.msra.mxu0 0.0
        %1573 = vmatprep.subr.mxu0 0.0
        %1574 = vmatpush1.msra.mxu0 0.0
        %1575 = vmatprep.subr.mxu0 0.0
        %1576 = vmatpush1.msra.mxu0 0.0
        %1577 = vmatprep.subr.mxu0 0.0
        %1578 = vmatpush1.msra.mxu0 0.0
        %1579 = vmatprep.subr.mxu0 0.0
        %1580 = vmatpush1.msra.mxu0 0.0
        %1581 = vmatprep.subr.mxu0 0.0
        %1582 = vmatpush1.msra.mxu0 0.0
        %1583 = vmatprep.subr.mxu0 0.0
        %1584 = vmatpush1.msra.mxu0 0.0
        %1585 = vmatprep.subr.mxu0 0.0
        %1586 = vmatpush1.msra.mxu0 0.0
        %1587 = vmatprep.subr.mxu0 0.0
        %1588 = vmatpush1.msra.mxu0 0.0
        %1589 = vmatprep.mubr.f32.mxu0 0.0
        %1590 = vmatmul.mubr.f32.gmra.mrb[0].mxu0 %v538
        %v1591 = vpop.f32.mrb[0].mxu0
        %v1592 = vadd.f32 0.0, %v1591
        %v1593 = vpop.f32.mrb[0].mxu0
        %1594 = vmatprep.mubr.f32.mxu0 0.0
        %1595 = vmatmul.mubr.f32.gmra.mrb[0].mxu0 %v541
        %v1596 = vpop.f32.mrb[0].mxu0
        %v1597 = vadd.f32 0.0, %v1596
        %v1598 = vpop.f32.mrb[0].mxu0
        %1599 = vdwg.mxu0
        %v1600 = vld [vmem:[%s4] sm:$0xff]
        %v1601 = vld [vmem:[%s4 + $0x8] sm:$0xff]
        %v1602 = vld [vmem:[%s4 + $0x10] sm:$0xff]
        %v1603 = vld [vmem:[%s4 + $0x18] sm:$0xff]
        %v1604 = vld [vmem:[%s4 + $0x20] sm:$0xff]
        %v1605 = vld [vmem:[%s4 + $0x28] sm:$0xff]
        %v1606 = vld [vmem:[%s4 + $0x30] sm:$0xff]
        %v1607 = vld [vmem:[%s4 + $0x38] sm:$0xff]
        %v1608 = vld [vmem:[%s4 + $0x40] sm:$0xff]
        %v1609 = vld [vmem:[%s4 + $0x48] sm:$0xff]
        %v1610 = vld [vmem:[%s4 + $0x50] sm:$0xff]
        %v1611 = vld [vmem:[%s4 + $0x58] sm:$0xff]
        %v1612 = vld [vmem:[%s4 + $0x60] sm:$0xff]
        %v1613 = vld [vmem:[%s4 + $0x68] sm:$0xff]
        %v1614 = vld [vmem:[%s4 + $0x70] sm:$0xff]
        %v1615 = vld [vmem:[%s4 + $0x78] sm:$0xff]
        %1616 = vmatprep.subr.mxu0 0.0
        %1617 = vmatpush1.msra.mxu0 %v1522
        %1618 = vmatprep.subr.mxu0 0.0
        %1619 = vmatpush1.msra.mxu0 %v1523
        %1620 = vmatprep.subr.mxu0 0.0
        %1621 = vmatpush1.msra.mxu0 0.0
        %1622 = vmatprep.subr.mxu0 0.0
        %1623 = vmatpush1.msra.mxu0 0.0
        %1624 = vmatprep.subr.mxu0 0.0
        %1625 = vmatpush1.msra.mxu0 0.0
        %1626 = vmatprep.subr.mxu0 0.0
        %1627 = vmatpush1.msra.mxu0 0.0
        %1628 = vmatprep.subr.mxu0 0.0
        %1629 = vmatpush1.msra.mxu0 0.0
        %1630 = vmatprep.subr.mxu0 0.0
        %1631 = vmatpush1.msra.mxu0 0.0
        %1632 = vmatprep.subr.mxu0 0.0
        %1633 = vmatpush1.msra.mxu0 0.0
        %1634 = vmatprep.subr.mxu0 0.0
        %1635 = vmatpush1.msra.mxu0 0.0
        %1636 = vmatprep.subr.mxu0 0.0
        %1637 = vmatpush1.msra.mxu0 0.0
        %1638 = vmatprep.subr.mxu0 0.0
        %1639 = vmatpush1.msra.mxu0 0.0
        %1640 = vmatprep.subr.mxu0 0.0
        %1641 = vmatpush1.msra.mxu0 0.0
        %1642 = vmatprep.subr.mxu0 0.0
        %1643 = vmatpush1.msra.mxu0 0.0
        %1644 = vmatprep.subr.mxu0 0.0
        %1645 = vmatpush1.msra.mxu0 0.0
        %1646 = vmatprep.subr.mxu0 0.0
        %1647 = vmatpush1.msra.mxu0 0.0
        %1648 = vmatprep.subr.mxu0 0.0
        %1649 = vmatpush1.msra.mxu0 0.0
        %1650 = vmatprep.subr.mxu0 0.0
        %1651 = vmatpush1.msra.mxu0 0.0
        %1652 = vmatprep.subr.mxu0 0.0
        %1653 = vmatpush1.msra.mxu0 0.0
        %1654 = vmatprep.subr.mxu0 0.0
        %1655 = vmatpush1.msra.mxu0 0.0
        %1656 = vmatprep.subr.mxu0 0.0
        %1657 = vmatpush1.msra.mxu0 0.0
        %1658 = vmatprep.subr.mxu0 0.0
        %1659 = vmatpush1.msra.mxu0 0.0
        %1660 = vmatprep.subr.mxu0 0.0
        %1661 = vmatpush1.msra.mxu0 0.0
        %1662 = vmatprep.subr.mxu0 0.0
        %1663 = vmatpush1.msra.mxu0 0.0
        %1664 = vmatprep.subr.mxu0 0.0
        %1665 = vmatpush1.msra.mxu0 0.0
        %1666 = vmatprep.subr.mxu0 0.0
        %1667 = vmatpush1.msra.mxu0 0.0
        %1668 = vmatprep.subr.mxu0 0.0
        %1669 = vmatpush1.msra.mxu0 0.0
        %1670 = vmatprep.subr.mxu0 0.0
        %1671 = vmatpush1.msra.mxu0 0.0
        %1672 = vmatprep.subr.mxu0 0.0
        %1673 = vmatpush1.msra.mxu0 0.0
        %1674 = vmatprep.subr.mxu0 0.0
        %1675 = vmatpush1.msra.mxu0 0.0
        %1676 = vmatprep.subr.mxu0 0.0
        %1677 = vmatpush1.msra.mxu0 0.0
        %1678 = vmatprep.subr.mxu0 0.0
        %1679 = vmatpush1.msra.mxu0 0.0
        %1680 = vmatprep.mubr.f32.mxu0 0.0
        %1681 = vmatmul.mubr.f32.gmra.mrb[0].mxu0 %v630
        %v1682 = vpop.f32.mrb[0].mxu0
        %v1683 = vadd.f32 0.0, %v1682
        %v1684 = vpop.f32.mrb[0].mxu0
        %1685 = vmatprep.mubr.f32.mxu0 0.0
        %1686 = vmatmul.mubr.f32.gmra.mrb[0].mxu0 %v633
        %v1687 = vpop.f32.mrb[0].mxu0
        %v1688 = vadd.f32 0.0, %v1687
        %v1689 = vpop.f32.mrb[0].mxu0
        %1690 = vdwg.mxu0
        %s1691 = scalar_lea.vmem %s4, 128
        %v1692 = vld [vmem:[%s1691] sm:$0xff]
        %v1693 = vld [vmem:[%s1691 + $0x8] sm:$0xff]
        %v1694 = vld [vmem:[%s1691 + $0x10] sm:$0xff]
        %v1695 = vld [vmem:[%s1691 + $0x18] sm:$0xff]
        %v1696 = vld [vmem:[%s1691 + $0x20] sm:$0xff]
        %v1697 = vld [vmem:[%s1691 + $0x28] sm:$0xff]
        %v1698 = vld [vmem:[%s1691 + $0x30] sm:$0xff]
        %v1699 = vld [vmem:[%s1691 + $0x38] sm:$0xff]
        %v1700 = vld [vmem:[%s1691 + $0x40] sm:$0xff]
        %v1701 = vld [vmem:[%s1691 + $0x48] sm:$0xff]
        %v1702 = vld [vmem:[%s1691 + $0x50] sm:$0xff]
        %v1703 = vld [vmem:[%s1691 + $0x58] sm:$0xff]
        %v1704 = vld [vmem:[%s1691 + $0x60] sm:$0xff]
        %v1705 = vld [vmem:[%s1691 + $0x68] sm:$0xff]
        %v1706 = vld [vmem:[%s1691 + $0x70] sm:$0xff]
        %v1707 = vld [vmem:[%s1691 + $0x78] sm:$0xff]
        %1708 = vmatprep.subr.mxu0 0.0
        %1709 = vmatpush1.msra.mxu0 %v1692
        %1710 = vmatprep.subr.mxu0 0.0
        %1711 = vmatpush1.msra.mxu0 %v1693
        %1712 = vmatprep.subr.mxu0 0.0
        %1713 = vmatpush1.msra.mxu0 %v1694
        %1714 = vmatprep.subr.mxu0 0.0
        %1715 = vmatpush1.msra.mxu0 %v1695
        %1716 = vmatprep.subr.mxu0 0.0
        %1717 = vmatpush1.msra.mxu0 %v1696
        %1718 = vmatprep.subr.mxu0 0.0
        %1719 = vmatpush1.msra.mxu0 %v1697
        %1720 = vmatprep.subr.mxu0 0.0
        %1721 = vmatpush1.msra.mxu0 %v1698
        %1722 = vmatprep.subr.mxu0 0.0
        %1723 = vmatpush1.msra.mxu0 %v1699
        %1724 = vmatprep.subr.mxu0 0.0
        %1725 = vmatpush1.msra.mxu0 %v1700
        %1726 = vmatprep.subr.mxu0 0.0
        %1727 = vmatpush1.msra.mxu0 %v1701
        %1728 = vmatprep.subr.mxu0 0.0
        %1729 = vmatpush1.msra.mxu0 %v1702
        %1730 = vmatprep.subr.mxu0 0.0
        %1731 = vmatpush1.msra.mxu0 %v1703
        %1732 = vmatprep.subr.mxu0 0.0
        %1733 = vmatpush1.msra.mxu0 %v1704
        %1734 = vmatprep.subr.mxu0 0.0
        %1735 = vmatpush1.msra.mxu0 %v1705
        %1736 = vmatprep.subr.mxu0 0.0
        %1737 = vmatpush1.msra.mxu0 %v1706
        %1738 = vmatprep.subr.mxu0 0.0
        %1739 = vmatpush1.msra.mxu0 %v1707
        %1740 = vmatprep.subr.mxu0 0.0
        %1741 = vmatpush1.msra.mxu0 0.0
        %1742 = vmatprep.subr.mxu0 0.0
        %1743 = vmatpush1.msra.mxu0 0.0
        %1744 = vmatprep.subr.mxu0 0.0
        %1745 = vmatpush1.msra.mxu0 0.0
        %1746 = vmatprep.subr.mxu0 0.0
        %1747 = vmatpush1.msra.mxu0 0.0
        %1748 = vmatprep.subr.mxu0 0.0
        %1749 = vmatpush1.msra.mxu0 0.0
        %1750 = vmatprep.subr.mxu0 0.0
        %1751 = vmatpush1.msra.mxu0 0.0
        %1752 = vmatprep.subr.mxu0 0.0
        %1753 = vmatpush1.msra.mxu0 0.0
        %1754 = vmatprep.subr.mxu0 0.0
        %1755 = vmatpush1.msra.mxu0 0.0
        %1756 = vmatprep.subr.mxu0 0.0
        %1757 = vmatpush1.msra.mxu0 0.0
        %1758 = vmatprep.subr.mxu0 0.0
        %1759 = vmatpush1.msra.mxu0 0.0
        %1760 = vmatprep.subr.mxu0 0.0
        %1761 = vmatpush1.msra.mxu0 0.0
        %1762 = vmatprep.subr.mxu0 0.0
        %1763 = vmatpush1.msra.mxu0 0.0
        %1764 = vmatprep.subr.mxu0 0.0
        %1765 = vmatpush1.msra.mxu0 0.0
        %1766 = vmatprep.subr.mxu0 0.0
        %1767 = vmatpush1.msra.mxu0 0.0
        %1768 = vmatprep.subr.mxu0 0.0
        %1769 = vmatpush1.msra.mxu0 0.0
        %1770 = vmatprep.subr.mxu0 0.0
        %1771 = vmatpush1.msra.mxu0 0.0
        %1772 = vmatprep.mubr.f32.mxu0 0.0
        %1773 = vmatmul.mubr.f32.gmra.mrb[0].mxu0 %v1683
        %v1774 = vpop.f32.mrb[0].mxu0
        %v1775 = vadd.f32 0.0, %v1774
        %v1776 = vpop.f32.mrb[0].mxu0
        %1777 = vmatprep.mubr.f32.mxu0 0.0
        %1778 = vmatmul.mubr.f32.gmra.mrb[0].mxu0 %v1688
        %v1779 = vpop.f32.mrb[0].mxu0
        %v1780 = vadd.f32 0.0, %v1779
        %v1781 = vpop.f32.mrb[0].mxu0
        %1782 = vdwg.mxu0
        %1783 = vmatprep.subr.mxu0 0.0
        %1784 = vmatpush1.msra.mxu0 %v1600
        %1785 = vmatprep.subr.mxu0 0.0
        %1786 = vmatpush1.msra.mxu0 %v1601
        %1787 = vmatprep.subr.mxu0 0.0
        %1788 = vmatpush1.msra.mxu0 %v1602
        %1789 = vmatprep.subr.mxu0 0.0
        %1790 = vmatpush1.msra.mxu0 %v1603
        %1791 = vmatprep.subr.mxu0 0.0
        %1792 = vmatpush1.msra.mxu0 %v1604
        %1793 = vmatprep.subr.mxu0 0.0
        %1794 = vmatpush1.msra.mxu0 %v1605
        %1795 = vmatprep.subr.mxu0 0.0
        %1796 = vmatpush1.msra.mxu0 %v1606
        %1797 = vmatprep.subr.mxu0 0.0
        %1798 = vmatpush1.msra.mxu0 %v1607
        %1799 = vmatprep.subr.mxu0 0.0
        %1800 = vmatpush1.msra.mxu0 %v1608
        %1801 = vmatprep.subr.mxu0 0.0
        %1802 = vmatpush1.msra.mxu0 %v1609
        %1803 = vmatprep.subr.mxu0 0.0
        %1804 = vmatpush1.msra.mxu0 %v1610
        %1805 = vmatprep.subr.mxu0 0.0
        %1806 = vmatpush1.msra.mxu0 %v1611
        %1807 = vmatprep.subr.mxu0 0.0
        %1808 = vmatpush1.msra.mxu0 %v1612
        %1809 = vmatprep.subr.mxu0 0.0
        %1810 = vmatpush1.msra.mxu0 %v1613
        %1811 = vmatprep.subr.mxu0 0.0
        %1812 = vmatpush1.msra.mxu0 %v1614
        %1813 = vmatprep.subr.mxu0 0.0
        %1814 = vmatpush1.msra.mxu0 %v1615
        %1815 = vmatprep.subr.mxu0 0.0
        %1816 = vmatpush1.msra.mxu0 0.0
        %1817 = vmatprep.subr.mxu0 0.0
        %1818 = vmatpush1.msra.mxu0 0.0
        %1819 = vmatprep.subr.mxu0 0.0
        %1820 = vmatpush1.msra.mxu0 0.0
        %1821 = vmatprep.subr.mxu0 0.0
        %1822 = vmatpush1.msra.mxu0 0.0
        %1823 = vmatprep.subr.mxu0 0.0
        %1824 = vmatpush1.msra.mxu0 0.0
        %1825 = vmatprep.subr.mxu0 0.0
        %1826 = vmatpush1.msra.mxu0 0.0
        %1827 = vmatprep.subr.mxu0 0.0
        %1828 = vmatpush1.msra.mxu0 0.0
        %1829 = vmatprep.subr.mxu0 0.0
        %1830 = vmatpush1.msra.mxu0 0.0
        %1831 = vmatprep.subr.mxu0 0.0
        %1832 = vmatpush1.msra.mxu0 0.0
        %1833 = vmatprep.subr.mxu0 0.0
        %1834 = vmatpush1.msra.mxu0 0.0
        %1835 = vmatprep.subr.mxu0 0.0
        %1836 = vmatpush1.msra.mxu0 0.0
        %1837 = vmatprep.subr.mxu0 0.0
        %1838 = vmatpush1.msra.mxu0 0.0
        %1839 = vmatprep.subr.mxu0 0.0
        %1840 = vmatpush1.msra.mxu0 0.0
        %1841 = vmatprep.subr.mxu0 0.0
        %1842 = vmatpush1.msra.mxu0 0.0
        %1843 = vmatprep.subr.mxu0 0.0
        %1844 = vmatpush1.msra.mxu0 0.0
        %1845 = vmatprep.subr.mxu0 0.0
        %1846 = vmatpush1.msra.mxu0 0.0
        %1847 = vmatprep.mubr.f32.mxu0 0.0
        %1848 = vmatmul.mubr.f32.gmra.mrb[0].mxu0 %v1592
        %v1849 = vpop.f32.mrb[0].mxu0
        %v1850 = vadd.f32 %v1775, %v1849
        %v1851 = vpop.f32.mrb[0].mxu0
        %1852 = vmatprep.mubr.f32.mxu0 0.0
        %1853 = vmatmul.mubr.f32.gmra.mrb[0].mxu0 %v1597
        %v1854 = vpop.f32.mrb[0].mxu0
        %v1855 = vadd.f32 %v1780, %v1854
        %v1856 = vpop.f32.mrb[0].mxu0
        %1857 = vdwg.mxu0
        %1858 = vmatprep.subr.mxu0 0.0
        %1859 = vmatpush1.msra.mxu0 %v1522
        %1860 = vmatprep.subr.mxu0 0.0
        %1861 = vmatpush1.msra.mxu0 %v1523
        %1862 = vmatprep.subr.mxu0 0.0
        %1863 = vmatpush1.msra.mxu0 0.0
        %1864 = vmatprep.subr.mxu0 0.0
        %1865 = vmatpush1.msra.mxu0 0.0
        %1866 = vmatprep.subr.mxu0 0.0
        %1867 = vmatpush1.msra.mxu0 0.0
        %1868 = vmatprep.subr.mxu0 0.0
        %1869 = vmatpush1.msra.mxu0 0.0
        %1870 = vmatprep.subr.mxu0 0.0
        %1871 = vmatpush1.msra.mxu0 0.0
        %1872 = vmatprep.subr.mxu0 0.0
        %1873 = vmatpush1.msra.mxu0 0.0
        %1874 = vmatprep.subr.mxu0 0.0
        %1875 = vmatpush1.msra.mxu0 0.0
        %1876 = vmatprep.subr.mxu0 0.0
        %1877 = vmatpush1.msra.mxu0 0.0
        %1878 = vmatprep.subr.mxu0 0.0
        %1879 = vmatpush1.msra.mxu0 0.0
        %1880 = vmatprep.subr.mxu0 0.0
        %1881 = vmatpush1.msra.mxu0 0.0
        %1882 = vmatprep.subr.mxu0 0.0
        %1883 = vmatpush1.msra.mxu0 0.0
        %1884 = vmatprep.subr.mxu0 0.0
        %1885 = vmatpush1.msra.mxu0 0.0
        %1886 = vmatprep.subr.mxu0 0.0
        %1887 = vmatpush1.msra.mxu0 0.0
        %1888 = vmatprep.subr.mxu0 0.0
        %1889 = vmatpush1.msra.mxu0 0.0
        %1890 = vmatprep.subr.mxu0 0.0
        %1891 = vmatpush1.msra.mxu0 0.0
        %1892 = vmatprep.subr.mxu0 0.0
        %1893 = vmatpush1.msra.mxu0 0.0
        %1894 = vmatprep.subr.mxu0 0.0
        %1895 = vmatpush1.msra.mxu0 0.0
        %1896 = vmatprep.subr.mxu0 0.0
        %1897 = vmatpush1.msra.mxu0 0.0
        %1898 = vmatprep.subr.mxu0 0.0
        %1899 = vmatpush1.msra.mxu0 0.0
        %1900 = vmatprep.subr.mxu0 0.0
        %1901 = vmatpush1.msra.mxu0 0.0
        %1902 = vmatprep.subr.mxu0 0.0
        %1903 = vmatpush1.msra.mxu0 0.0
        %1904 = vmatprep.subr.mxu0 0.0
        %1905 = vmatpush1.msra.mxu0 0.0
        %1906 = vmatprep.subr.mxu0 0.0
        %1907 = vmatpush1.msra.mxu0 0.0
        %1908 = vmatprep.subr.mxu0 0.0
        %1909 = vmatpush1.msra.mxu0 0.0
        %1910 = vmatprep.subr.mxu0 0.0
        %1911 = vmatpush1.msra.mxu0 0.0
        %1912 = vmatprep.subr.mxu0 0.0
        %1913 = vmatpush1.msra.mxu0 0.0
        %1914 = vmatprep.subr.mxu0 0.0
        %1915 = vmatpush1.msra.mxu0 0.0
        %1916 = vmatprep.subr.mxu0 0.0
        %1917 = vmatpush1.msra.mxu0 0.0
        %1918 = vmatprep.subr.mxu0 0.0
        %1919 = vmatpush1.msra.mxu0 0.0
        %1920 = vmatprep.subr.mxu0 0.0
        %1921 = vmatpush1.msra.mxu0 0.0
        %1922 = vmatprep.mubr.f32.mxu0 0.0
        %1923 = vmatmul.mubr.f32.gmra.mrb[0].mxu0 %v886
        %v1924 = vpop.f32.mrb[0].mxu0
        %v1925 = vadd.f32 0.0, %v1924
        %v1926 = vpop.f32.mrb[0].mxu0
        %1927 = vmatprep.mubr.f32.mxu0 0.0
        %1928 = vmatmul.mubr.f32.gmra.mrb[0].mxu0 %v889
        %v1929 = vpop.f32.mrb[0].mxu0
        %v1930 = vadd.f32 0.0, %v1929
        %v1931 = vpop.f32.mrb[0].mxu0
        %1932 = vdwg.mxu0
        %s1933 = scalar_lea.vmem %s4, 256
        %v1934 = vld [vmem:[%s1933] sm:$0xff]
        %v1935 = vld [vmem:[%s1933 + $0x8] sm:$0xff]
        %v1936 = vld [vmem:[%s1933 + $0x10] sm:$0xff]
        %v1937 = vld [vmem:[%s1933 + $0x18] sm:$0xff]
        %v1938 = vld [vmem:[%s1933 + $0x20] sm:$0xff]
        %v1939 = vld [vmem:[%s1933 + $0x28] sm:$0xff]
        %v1940 = vld [vmem:[%s1933 + $0x30] sm:$0xff]
        %v1941 = vld [vmem:[%s1933 + $0x38] sm:$0xff]
        %v1942 = vld [vmem:[%s1933 + $0x40] sm:$0xff]
        %v1943 = vld [vmem:[%s1933 + $0x48] sm:$0xff]
        %v1944 = vld [vmem:[%s1933 + $0x50] sm:$0xff]
        %v1945 = vld [vmem:[%s1933 + $0x58] sm:$0xff]
        %v1946 = vld [vmem:[%s1933 + $0x60] sm:$0xff]
        %v1947 = vld [vmem:[%s1933 + $0x68] sm:$0xff]
        %v1948 = vld [vmem:[%s1933 + $0x70] sm:$0xff]
        %v1949 = vld [vmem:[%s1933 + $0x78] sm:$0xff]
        %1950 = vmatprep.subr.mxu0 0.0
        %1951 = vmatpush1.msra.mxu0 %v1934
        %1952 = vmatprep.subr.mxu0 0.0
        %1953 = vmatpush1.msra.mxu0 %v1935
        %1954 = vmatprep.subr.mxu0 0.0
        %1955 = vmatpush1.msra.mxu0 %v1936
        %1956 = vmatprep.subr.mxu0 0.0
        %1957 = vmatpush1.msra.mxu0 %v1937
        %1958 = vmatprep.subr.mxu0 0.0
        %1959 = vmatpush1.msra.mxu0 %v1938
        %1960 = vmatprep.subr.mxu0 0.0
        %1961 = vmatpush1.msra.mxu0 %v1939
        %1962 = vmatprep.subr.mxu0 0.0
        %1963 = vmatpush1.msra.mxu0 %v1940
        %1964 = vmatprep.subr.mxu0 0.0
        %1965 = vmatpush1.msra.mxu0 %v1941
        %1966 = vmatprep.subr.mxu0 0.0
        %1967 = vmatpush1.msra.mxu0 %v1942
        %1968 = vmatprep.subr.mxu0 0.0
        %1969 = vmatpush1.msra.mxu0 %v1943
        %1970 = vmatprep.subr.mxu0 0.0
        %1971 = vmatpush1.msra.mxu0 %v1944
        %1972 = vmatprep.subr.mxu0 0.0
        %1973 = vmatpush1.msra.mxu0 %v1945
        %1974 = vmatprep.subr.mxu0 0.0
        %1975 = vmatpush1.msra.mxu0 %v1946
        %1976 = vmatprep.subr.mxu0 0.0
        %1977 = vmatpush1.msra.mxu0 %v1947
        %1978 = vmatprep.subr.mxu0 0.0
        %1979 = vmatpush1.msra.mxu0 %v1948
        %1980 = vmatprep.subr.mxu0 0.0
        %1981 = vmatpush1.msra.mxu0 %v1949
        %1982 = vmatprep.subr.mxu0 0.0
        %1983 = vmatpush1.msra.mxu0 0.0
        %1984 = vmatprep.subr.mxu0 0.0
        %1985 = vmatpush1.msra.mxu0 0.0
        %1986 = vmatprep.subr.mxu0 0.0
        %1987 = vmatpush1.msra.mxu0 0.0
        %1988 = vmatprep.subr.mxu0 0.0
        %1989 = vmatpush1.msra.mxu0 0.0
        %1990 = vmatprep.subr.mxu0 0.0
        %1991 = vmatpush1.msra.mxu0 0.0
        %1992 = vmatprep.subr.mxu0 0.0
        %1993 = vmatpush1.msra.mxu0 0.0
        %1994 = vmatprep.subr.mxu0 0.0
        %1995 = vmatpush1.msra.mxu0 0.0
        %1996 = vmatprep.subr.mxu0 0.0
        %1997 = vmatpush1.msra.mxu0 0.0
        %1998 = vmatprep.subr.mxu0 0.0
        %1999 = vmatpush1.msra.mxu0 0.0
        %2000 = vmatprep.subr.mxu0 0.0
        %2001 = vmatpush1.msra.mxu0 0.0
        %2002 = vmatprep.subr.mxu0 0.0
        %2003 = vmatpush1.msra.mxu0 0.0
        %2004 = vmatprep.subr.mxu0 0.0
        %2005 = vmatpush1.msra.mxu0 0.0
        %2006 = vmatprep.subr.mxu0 0.0
        %2007 = vmatpush1.msra.mxu0 0.0
        %2008 = vmatprep.subr.mxu0 0.0
        %2009 = vmatpush1.msra.mxu0 0.0
        %2010 = vmatprep.subr.mxu0 0.0
        %2011 = vmatpush1.msra.mxu0 0.0
        %2012 = vmatprep.subr.mxu0 0.0
        %2013 = vmatpush1.msra.mxu0 0.0
        %2014 = vmatprep.mubr.f32.mxu0 0.0
        %2015 = vmatmul.mubr.f32.gmra.mrb[0].mxu0 %v1925
        %v2016 = vpop.f32.mrb[0].mxu0
        %v2017 = vadd.f32 0.0, %v2016
        %v2018 = vpop.f32.mrb[0].mxu0
        %2019 = vmatprep.mubr.f32.mxu0 0.0
        %2020 = vmatmul.mubr.f32.gmra.mrb[0].mxu0 %v1930
        %v2021 = vpop.f32.mrb[0].mxu0
        %v2022 = vadd.f32 0.0, %v2021
        %v2023 = vpop.f32.mrb[0].mxu0
        %2024 = vdwg.mxu0
        %v2025 = vadd.f32 %v1850, %v2017
        %v2026 = vadd.f32 %v1855, %v2022
        %v2028 = vlaneseq
        %v2029 = vshrl.u32 %v2028, 7
        %v2030 = vsub.s32 0, %v2029
        %v2031 = vrot.slane %v1524, %v2030
        %v2033 = vadd.f32 %v2025, %v2031
        %v2034 = vadd.f32 %v2026, %v2031
        %vm2035 = vcmp.ge.f32.partialorder %v2033, 0.0
        %vm2036 = vcmp.ge.f32.partialorder %v2034, 0.0
        %v2037 = vmul.f32 %v2033, 0.2
        %v2038 = vmul.f32 %v2034, 0.2
        %v2039 = vsel %vm2035, %v2033, %v2037
        %v2040 = vsel %vm2036, %v2034, %v2038
        %v2041 = vld [vmem:[%s6] sm:$0xff]
        %v2042 = vld [vmem:[%s6 + $0x8] sm:$0xff]
        %v2043 = vld [vmem:[%s6 + $0x10] sm:$0xff]
        %v2044 = vld [vmem:[%s6 + $0x18] sm:$0xff]
        %v2045 = vld [vmem:[%s6 + $0x20] sm:$0xff]
        %v2046 = vld [vmem:[%s6 + $0x28] sm:$0xff]
        %v2047 = vld [vmem:[%s6 + $0x30] sm:$0xff]
        %v2048 = vld [vmem:[%s6 + $0x38] sm:$0xff]
        %v2049 = vld [vmem:[%s7] sm:$0x1]
        %v2051 = vlaneseq
        %v2052 = vshrl.u32 %v2051, 7
        %v2053 = vsub.s32 0, %v2052
        %v2054 = vrot.slane %v2049, %v2053
        %v2057 = vsel %vm719, %v531, 0
        %v2060 = vsel %vm719, %v532, 0
        %2062 = vmatprep.subr.mxu0 0.0
        %2063 = vmatpush1.msra.mxu0 %v2041
        %2064 = vmatprep.subr.mxu0 0.0
        %2065 = vmatpush1.msra.mxu0 %v2042
        %2066 = vmatprep.subr.mxu0 0.0
        %2067 = vmatpush1.msra.mxu0 %v2043
        %2068 = vmatprep.subr.mxu0 0.0
        %2069 = vmatpush1.msra.mxu0 %v2044
        %2070 = vmatprep.subr.mxu0 0.0
        %2071 = vmatpush1.msra.mxu0 %v2045
        %2072 = vmatprep.subr.mxu0 0.0
        %2073 = vmatpush1.msra.mxu0 %v2046
        %2074 = vmatprep.subr.mxu0 0.0
        %2075 = vmatpush1.msra.mxu0 %v2047
        %2076 = vmatprep.subr.mxu0 0.0
        %2077 = vmatpush1.msra.mxu0 %v2048
        %2078 = vmatprep.subr.mxu0 0.0
        %2079 = vmatpush1.msra.mxu0 0.0
        %2080 = vmatprep.subr.mxu0 0.0
        %2081 = vmatpush1.msra.mxu0 0.0
        %2082 = vmatprep.subr.mxu0 0.0
        %2083 = vmatpush1.msra.mxu0 0.0
        %2084 = vmatprep.subr.mxu0 0.0
        %2085 = vmatpush1.msra.mxu0 0.0
        %2086 = vmatprep.subr.mxu0 0.0
        %2087 = vmatpush1.msra.mxu0 0.0
        %2088 = vmatprep.subr.mxu0 0.0
        %2089 = vmatpush1.msra.mxu0 0.0
        %2090 = vmatprep.subr.mxu0 0.0
        %2091 = vmatpush1.msra.mxu0 0.0
        %2092 = vmatprep.subr.mxu0 0.0
        %2093 = vmatpush1.msra.mxu0 0.0
        %2094 = vmatprep.subr.mxu0 0.0
        %2095 = vmatpush1.msra.mxu0 0.0
        %2096 = vmatprep.subr.mxu0 0.0
        %2097 = vmatpush1.msra.mxu0 0.0
        %2098 = vmatprep.subr.mxu0 0.0
        %2099 = vmatpush1.msra.mxu0 0.0
        %2100 = vmatprep.subr.mxu0 0.0
        %2101 = vmatpush1.msra.mxu0 0.0
        %2102 = vmatprep.subr.mxu0 0.0
        %2103 = vmatpush1.msra.mxu0 0.0
        %2104 = vmatprep.subr.mxu0 0.0
        %2105 = vmatpush1.msra.mxu0 0.0
        %2106 = vmatprep.subr.mxu0 0.0
        %2107 = vmatpush1.msra.mxu0 0.0
        %2108 = vmatprep.subr.mxu0 0.0
        %2109 = vmatpush1.msra.mxu0 0.0
        %2110 = vmatprep.subr.mxu0 0.0
        %2111 = vmatpush1.msra.mxu0 0.0
        %2112 = vmatprep.subr.mxu0 0.0
        %2113 = vmatpush1.msra.mxu0 0.0
        %2114 = vmatprep.subr.mxu0 0.0
        %2115 = vmatpush1.msra.mxu0 0.0
        %2116 = vmatprep.subr.mxu0 0.0
        %2117 = vmatpush1.msra.mxu0 0.0
        %2118 = vmatprep.subr.mxu0 0.0
        %2119 = vmatpush1.msra.mxu0 0.0
        %2120 = vmatprep.subr.mxu0 0.0
        %2121 = vmatpush1.msra.mxu0 0.0
        %2122 = vmatprep.subr.mxu0 0.0
        %2123 = vmatpush1.msra.mxu0 0.0
        %2124 = vmatprep.subr.mxu0 0.0
        %2125 = vmatpush1.msra.mxu0 0.0
        %2126 = vmatprep.mubr.f32.mxu0 0.0
        %2127 = vmatmul.mubr.f32.gmra.mrb[0].mxu0 %v2057
        %v2128 = vpop.f32.mrb[0].mxu0
        %v2129 = vadd.f32 %v2054, %v2128
        %v2130 = vpop.f32.mrb[0].mxu0
        %2131 = vmatprep.mubr.f32.mxu0 0.0
        %2132 = vmatmul.mubr.f32.gmra.mrb[0].mxu0 %v2060
        %v2133 = vpop.f32.mrb[0].mxu0
        %v2134 = vadd.f32 %v2054, %v2133
        %v2135 = vpop.f32.mrb[0].mxu0
        %2136 = vdwg.mxu0
        %v2137 = vadd.f32 %v2039, %v2129
        %v2138 = vadd.f32 %v2040, %v2134
        %2139 = vst [vmem:[%s518] sm:$0xff] %v2137
        %2140 = vst [vmem:[%s518 + $0x8] sm:$0xff] %v2138
        %v2141 = vld [vmem:[%s13] sm:$0xff]
        %v2143 = vsel %vm536, %v2141, 0
        %2145 = vmatprep.subr.mxu0 0.0
        %2146 = vmatpush1.msra.mxu0 %v2137
        %2147 = vmatprep.subr.mxu0 0.0
        %2148 = vmatpush1.msra.mxu0 %v2138
        %2149 = vmatprep.subr.mxu0 0.0
        %2150 = vmatpush1.msra.mxu0 0.0
        %2151 = vmatprep.subr.mxu0 0.0
        %2152 = vmatpush1.msra.mxu0 0.0
        %2153 = vmatprep.subr.mxu0 0.0
        %2154 = vmatpush1.msra.mxu0 0.0
        %2155 = vmatprep.subr.mxu0 0.0
        %2156 = vmatpush1.msra.mxu0 0.0
        %2157 = vmatprep.subr.mxu0 0.0
        %2158 = vmatpush1.msra.mxu0 0.0
        %2159 = vmatprep.subr.mxu0 0.0
        %2160 = vmatpush1.msra.mxu0 0.0
        %2161 = vmatprep.subr.mxu0 0.0
        %2162 = vmatpush1.msra.mxu0 0.0
        %2163 = vmatprep.subr.mxu0 0.0
        %2164 = vmatpush1.msra.mxu0 0.0
        %2165 = vmatprep.subr.mxu0 0.0
        %2166 = vmatpush1.msra.mxu0 0.0
        %2167 = vmatprep.subr.mxu0 0.0
        %2168 = vmatpush1.msra.mxu0 0.0
        %2169 = vmatprep.subr.mxu0 0.0
        %2170 = vmatpush1.msra.mxu0 0.0
        %2171 = vmatprep.subr.mxu0 0.0
        %2172 = vmatpush1.msra.mxu0 0.0
        %2173 = vmatprep.subr.mxu0 0.0
        %2174 = vmatpush1.msra.mxu0 0.0
        %2175 = vmatprep.subr.mxu0 0.0
        %2176 = vmatpush1.msra.mxu0 0.0
        %2177 = vmatprep.subr.mxu0 0.0
        %2178 = vmatpush1.msra.mxu0 0.0
        %2179 = vmatprep.subr.mxu0 0.0
        %2180 = vmatpush1.msra.mxu0 0.0
        %2181 = vmatprep.subr.mxu0 0.0
        %2182 = vmatpush1.msra.mxu0 0.0
        %2183 = vmatprep.subr.mxu0 0.0
        %2184 = vmatpush1.msra.mxu0 0.0
        %2185 = vmatprep.subr.mxu0 0.0
        %2186 = vmatpush1.msra.mxu0 0.0
        %2187 = vmatprep.subr.mxu0 0.0
        %2188 = vmatpush1.msra.mxu0 0.0
        %2189 = vmatprep.subr.mxu0 0.0
        %2190 = vmatpush1.msra.mxu0 0.0
        %2191 = vmatprep.subr.mxu0 0.0
        %2192 = vmatpush1.msra.mxu0 0.0
        %2193 = vmatprep.subr.mxu0 0.0
        %2194 = vmatpush1.msra.mxu0 0.0
        %2195 = vmatprep.subr.mxu0 0.0
        %2196 = vmatpush1.msra.mxu0 0.0
        %2197 = vmatprep.subr.mxu0 0.0
        %2198 = vmatpush1.msra.mxu0 0.0
        %2199 = vmatprep.subr.mxu0 0.0
        %2200 = vmatpush1.msra.mxu0 0.0
        %2201 = vmatprep.subr.mxu0 0.0
        %2202 = vmatpush1.msra.mxu0 0.0
        %2203 = vmatprep.subr.mxu0 0.0
        %2204 = vmatpush1.msra.mxu0 0.0
        %2205 = vmatprep.subr.mxu0 0.0
        %2206 = vmatpush1.msra.mxu0 0.0
        %2207 = vmatprep.subr.mxu0 0.0
        %2208 = vmatpush1.msra.mxu0 0.0
        %2209 = vmatprep.mubr.f32.mxu0 0.0
        %2210 = vmatmul.mubr.f32.gmra.mrb[0].mxu0 %v2143
        %v2211 = vpop.f32.mrb[0].mxu0
        %v2212 = vadd.f32 0.0, %v2211
        %v2213 = vpop.f32.mrb[0].mxu0
        %2214 = vdwg.mxu0
        %v2215 = vld [vmem:[%s14] sm:$0xff]
        %v2216 = vld [vmem:[%s14 + $0x8] sm:$0xff]
        %v2217 = vld [vmem:[%s14 + $0x10] sm:$0xff]
        %v2218 = vld [vmem:[%s14 + $0x18] sm:$0xff]
        %v2219 = vld [vmem:[%s14 + $0x20] sm:$0xff]
        %v2220 = vld [vmem:[%s14 + $0x28] sm:$0xff]
        %v2221 = vld [vmem:[%s14 + $0x30] sm:$0xff]
        %v2222 = vld [vmem:[%s14 + $0x38] sm:$0xff]
        %v2223 = vld [vmem:[%s14 + $0x40] sm:$0xff]
        %v2224 = vld [vmem:[%s14 + $0x48] sm:$0xff]
        %v2225 = vld [vmem:[%s14 + $0x50] sm:$0xff]
        %v2226 = vld [vmem:[%s14 + $0x58] sm:$0xff]
        %v2227 = vld [vmem:[%s14 + $0x60] sm:$0xff]
        %v2228 = vld [vmem:[%s14 + $0x68] sm:$0xff]
        %v2229 = vld [vmem:[%s14 + $0x70] sm:$0xff]
        %v2230 = vld [vmem:[%s14 + $0x78] sm:$0xff]
        %s2231 = scalar_lea.vmem %s13, 8
        %v2232 = vld [vmem:[%s2231] sm:$0xff]
        %v2234 = vsel %vm536, %v2232, 0
        %2236 = vmatprep.subr.mxu0 0.0
        %2237 = vmatpush1.msra.mxu0 %v2137
        %2238 = vmatprep.subr.mxu0 0.0
        %2239 = vmatpush1.msra.mxu0 %v2138
        %2240 = vmatprep.subr.mxu0 0.0
        %2241 = vmatpush1.msra.mxu0 0.0
        %2242 = vmatprep.subr.mxu0 0.0
        %2243 = vmatpush1.msra.mxu0 0.0
        %2244 = vmatprep.subr.mxu0 0.0
        %2245 = vmatpush1.msra.mxu0 0.0
        %2246 = vmatprep.subr.mxu0 0.0
        %2247 = vmatpush1.msra.mxu0 0.0
        %2248 = vmatprep.subr.mxu0 0.0
        %2249 = vmatpush1.msra.mxu0 0.0
        %2250 = vmatprep.subr.mxu0 0.0
        %2251 = vmatpush1.msra.mxu0 0.0
        %2252 = vmatprep.subr.mxu0 0.0
        %2253 = vmatpush1.msra.mxu0 0.0
        %2254 = vmatprep.subr.mxu0 0.0
        %2255 = vmatpush1.msra.mxu0 0.0
        %2256 = vmatprep.subr.mxu0 0.0
        %2257 = vmatpush1.msra.mxu0 0.0
        %2258 = vmatprep.subr.mxu0 0.0
        %2259 = vmatpush1.msra.mxu0 0.0
        %2260 = vmatprep.subr.mxu0 0.0
        %2261 = vmatpush1.msra.mxu0 0.0
        %2262 = vmatprep.subr.mxu0 0.0
        %2263 = vmatpush1.msra.mxu0 0.0
        %2264 = vmatprep.subr.mxu0 0.0
        %2265 = vmatpush1.msra.mxu0 0.0
        %2266 = vmatprep.subr.mxu0 0.0
        %2267 = vmatpush1.msra.mxu0 0.0
        %2268 = vmatprep.subr.mxu0 0.0
        %2269 = vmatpush1.msra.mxu0 0.0
        %2270 = vmatprep.subr.mxu0 0.0
        %2271 = vmatpush1.msra.mxu0 0.0
        %2272 = vmatprep.subr.mxu0 0.0
        %2273 = vmatpush1.msra.mxu0 0.0
        %2274 = vmatprep.subr.mxu0 0.0
        %2275 = vmatpush1.msra.mxu0 0.0
        %2276 = vmatprep.subr.mxu0 0.0
        %2277 = vmatpush1.msra.mxu0 0.0
        %2278 = vmatprep.subr.mxu0 0.0
        %2279 = vmatpush1.msra.mxu0 0.0
        %2280 = vmatprep.subr.mxu0 0.0
        %2281 = vmatpush1.msra.mxu0 0.0
        %2282 = vmatprep.subr.mxu0 0.0
        %2283 = vmatpush1.msra.mxu0 0.0
        %2284 = vmatprep.subr.mxu0 0.0
        %2285 = vmatpush1.msra.mxu0 0.0
        %2286 = vmatprep.subr.mxu0 0.0
        %2287 = vmatpush1.msra.mxu0 0.0
        %2288 = vmatprep.subr.mxu0 0.0
        %2289 = vmatpush1.msra.mxu0 0.0
        %2290 = vmatprep.subr.mxu0 0.0
        %2291 = vmatpush1.msra.mxu0 0.0
        %2292 = vmatprep.subr.mxu0 0.0
        %2293 = vmatpush1.msra.mxu0 0.0
        %2294 = vmatprep.subr.mxu0 0.0
        %2295 = vmatpush1.msra.mxu0 0.0
        %2296 = vmatprep.subr.mxu0 0.0
        %2297 = vmatpush1.msra.mxu0 0.0
        %2298 = vmatprep.subr.mxu0 0.0
        %2299 = vmatpush1.msra.mxu0 0.0
        %2300 = vmatprep.mubr.f32.mxu0 0.0
        %2301 = vmatmul.mubr.f32.gmra.mrb[0].mxu0 %v2234
        %v2302 = vpop.f32.mrb[0].mxu0
        %v2303 = vadd.f32 0.0, %v2302
        %v2304 = vpop.f32.mrb[0].mxu0
        %2305 = vdwg.mxu0
        %s2306 = scalar_lea.vmem %s14, 128
        %v2307 = vld [vmem:[%s2306] sm:$0xff]
        %v2308 = vld [vmem:[%s2306 + $0x8] sm:$0xff]
        %v2309 = vld [vmem:[%s2306 + $0x10] sm:$0xff]
        %v2310 = vld [vmem:[%s2306 + $0x18] sm:$0xff]
        %v2311 = vld [vmem:[%s2306 + $0x20] sm:$0xff]
        %v2312 = vld [vmem:[%s2306 + $0x28] sm:$0xff]
        %v2313 = vld [vmem:[%s2306 + $0x30] sm:$0xff]
        %v2314 = vld [vmem:[%s2306 + $0x38] sm:$0xff]
        %v2315 = vld [vmem:[%s2306 + $0x40] sm:$0xff]
        %v2316 = vld [vmem:[%s2306 + $0x48] sm:$0xff]
        %v2317 = vld [vmem:[%s2306 + $0x50] sm:$0xff]
        %v2318 = vld [vmem:[%s2306 + $0x58] sm:$0xff]
        %v2319 = vld [vmem:[%s2306 + $0x60] sm:$0xff]
        %v2320 = vld [vmem:[%s2306 + $0x68] sm:$0xff]
        %v2321 = vld [vmem:[%s2306 + $0x70] sm:$0xff]
        %v2322 = vld [vmem:[%s2306 + $0x78] sm:$0xff]
        %2323 = vmatprep.subr.mxu0 0.0
        %2324 = vmatpush1.msra.mxu0 %v2307
        %2325 = vmatprep.subr.mxu0 0.0
        %2326 = vmatpush1.msra.mxu0 %v2308
        %2327 = vmatprep.subr.mxu0 0.0
        %2328 = vmatpush1.msra.mxu0 %v2309
        %2329 = vmatprep.subr.mxu0 0.0
        %2330 = vmatpush1.msra.mxu0 %v2310
        %2331 = vmatprep.subr.mxu0 0.0
        %2332 = vmatpush1.msra.mxu0 %v2311
        %2333 = vmatprep.subr.mxu0 0.0
        %2334 = vmatpush1.msra.mxu0 %v2312
        %2335 = vmatprep.subr.mxu0 0.0
        %2336 = vmatpush1.msra.mxu0 %v2313
        %2337 = vmatprep.subr.mxu0 0.0
        %2338 = vmatpush1.msra.mxu0 %v2314
        %2339 = vmatprep.subr.mxu0 0.0
        %2340 = vmatpush1.msra.mxu0 %v2315
        %2341 = vmatprep.subr.mxu0 0.0
        %2342 = vmatpush1.msra.mxu0 %v2316
        %2343 = vmatprep.subr.mxu0 0.0
        %2344 = vmatpush1.msra.mxu0 %v2317
        %2345 = vmatprep.subr.mxu0 0.0
        %2346 = vmatpush1.msra.mxu0 %v2318
        %2347 = vmatprep.subr.mxu0 0.0
        %2348 = vmatpush1.msra.mxu0 %v2319
        %2349 = vmatprep.subr.mxu0 0.0
        %2350 = vmatpush1.msra.mxu0 %v2320
        %2351 = vmatprep.subr.mxu0 0.0
        %2352 = vmatpush1.msra.mxu0 %v2321
        %2353 = vmatprep.subr.mxu0 0.0
        %2354 = vmatpush1.msra.mxu0 %v2322
        %2355 = vmatprep.subr.mxu0 0.0
        %2356 = vmatpush1.msra.mxu0 0.0
        %2357 = vmatprep.subr.mxu0 0.0
        %2358 = vmatpush1.msra.mxu0 0.0
        %2359 = vmatprep.subr.mxu0 0.0
        %2360 = vmatpush1.msra.mxu0 0.0
        %2361 = vmatprep.subr.mxu0 0.0
        %2362 = vmatpush1.msra.mxu0 0.0
        %2363 = vmatprep.subr.mxu0 0.0
        %2364 = vmatpush1.msra.mxu0 0.0
        %2365 = vmatprep.subr.mxu0 0.0
        %2366 = vmatpush1.msra.mxu0 0.0
        %2367 = vmatprep.subr.mxu0 0.0
        %2368 = vmatpush1.msra.mxu0 0.0
        %2369 = vmatprep.subr.mxu0 0.0
        %2370 = vmatpush1.msra.mxu0 0.0
        %2371 = vmatprep.subr.mxu0 0.0
        %2372 = vmatpush1.msra.mxu0 0.0
        %2373 = vmatprep.subr.mxu0 0.0
        %2374 = vmatpush1.msra.mxu0 0.0
        %2375 = vmatprep.subr.mxu0 0.0
        %2376 = vmatpush1.msra.mxu0 0.0
        %2377 = vmatprep.subr.mxu0 0.0
        %2378 = vmatpush1.msra.mxu0 0.0
        %2379 = vmatprep.subr.mxu0 0.0
        %2380 = vmatpush1.msra.mxu0 0.0
        %2381 = vmatprep.subr.mxu0 0.0
        %2382 = vmatpush1.msra.mxu0 0.0
        %2383 = vmatprep.subr.mxu0 0.0
        %2384 = vmatpush1.msra.mxu0 0.0
        %2385 = vmatprep.subr.mxu0 0.0
        %2386 = vmatpush1.msra.mxu0 0.0
        %2387 = vmatprep.mubr.f32.mxu0 0.0
        %2388 = vmatmul.mubr.f32.gmra.mrb[0].mxu0 %v2303
        %v2389 = vpop.f32.mrb[0].mxu0
        %v2390 = vadd.f32 0.0, %v2389
        %v2391 = vpop.f32.mrb[0].mxu0
        %2392 = vdwg.mxu0
        %2393 = vmatprep.subr.mxu0 0.0
        %2394 = vmatpush1.msra.mxu0 %v2215
        %2395 = vmatprep.subr.mxu0 0.0
        %2396 = vmatpush1.msra.mxu0 %v2216
        %2397 = vmatprep.subr.mxu0 0.0
        %2398 = vmatpush1.msra.mxu0 %v2217
        %2399 = vmatprep.subr.mxu0 0.0
        %2400 = vmatpush1.msra.mxu0 %v2218
        %2401 = vmatprep.subr.mxu0 0.0
        %2402 = vmatpush1.msra.mxu0 %v2219
        %2403 = vmatprep.subr.mxu0 0.0
        %2404 = vmatpush1.msra.mxu0 %v2220
        %2405 = vmatprep.subr.mxu0 0.0
        %2406 = vmatpush1.msra.mxu0 %v2221
        %2407 = vmatprep.subr.mxu0 0.0
        %2408 = vmatpush1.msra.mxu0 %v2222
        %2409 = vmatprep.subr.mxu0 0.0
        %2410 = vmatpush1.msra.mxu0 %v2223
        %2411 = vmatprep.subr.mxu0 0.0
        %2412 = vmatpush1.msra.mxu0 %v2224
        %2413 = vmatprep.subr.mxu0 0.0
        %2414 = vmatpush1.msra.mxu0 %v2225
        %2415 = vmatprep.subr.mxu0 0.0
        %2416 = vmatpush1.msra.mxu0 %v2226
        %2417 = vmatprep.subr.mxu0 0.0
        %2418 = vmatpush1.msra.mxu0 %v2227
        %2419 = vmatprep.subr.mxu0 0.0
        %2420 = vmatpush1.msra.mxu0 %v2228
        %2421 = vmatprep.subr.mxu0 0.0
        %2422 = vmatpush1.msra.mxu0 %v2229
        %2423 = vmatprep.subr.mxu0 0.0
        %2424 = vmatpush1.msra.mxu0 %v2230
        %2425 = vmatprep.subr.mxu0 0.0
        %2426 = vmatpush1.msra.mxu0 0.0
        %2427 = vmatprep.subr.mxu0 0.0
        %2428 = vmatpush1.msra.mxu0 0.0
        %2429 = vmatprep.subr.mxu0 0.0
        %2430 = vmatpush1.msra.mxu0 0.0
        %2431 = vmatprep.subr.mxu0 0.0
        %2432 = vmatpush1.msra.mxu0 0.0
        %2433 = vmatprep.subr.mxu0 0.0
        %2434 = vmatpush1.msra.mxu0 0.0
        %2435 = vmatprep.subr.mxu0 0.0
        %2436 = vmatpush1.msra.mxu0 0.0
        %2437 = vmatprep.subr.mxu0 0.0
        %2438 = vmatpush1.msra.mxu0 0.0
        %2439 = vmatprep.subr.mxu0 0.0
        %2440 = vmatpush1.msra.mxu0 0.0
        %2441 = vmatprep.subr.mxu0 0.0
        %2442 = vmatpush1.msra.mxu0 0.0
        %2443 = vmatprep.subr.mxu0 0.0
        %2444 = vmatpush1.msra.mxu0 0.0
        %2445 = vmatprep.subr.mxu0 0.0
        %2446 = vmatpush1.msra.mxu0 0.0
        %2447 = vmatprep.subr.mxu0 0.0
        %2448 = vmatpush1.msra.mxu0 0.0
        %2449 = vmatprep.subr.mxu0 0.0
        %2450 = vmatpush1.msra.mxu0 0.0
        %2451 = vmatprep.subr.mxu0 0.0
        %2452 = vmatpush1.msra.mxu0 0.0
        %2453 = vmatprep.subr.mxu0 0.0
        %2454 = vmatpush1.msra.mxu0 0.0
        %2455 = vmatprep.subr.mxu0 0.0
        %2456 = vmatpush1.msra.mxu0 0.0
        %2457 = vmatprep.mubr.f32.mxu0 0.0
        %2458 = vmatmul.mubr.f32.gmra.mrb[0].mxu0 %v2212
        %v2459 = vpop.f32.mrb[0].mxu0
        %v2460 = vadd.f32 %v2390, %v2459
        %v2461 = vpop.f32.mrb[0].mxu0
        %2462 = vdwg.mxu0
        %s2463 = scalar_lea.vmem %s13, 16
        %v2464 = vld [vmem:[%s2463] sm:$0xff]
        %v2466 = vsel %vm536, %v2464, 0
        %2468 = vmatprep.subr.mxu0 0.0
        %2469 = vmatpush1.msra.mxu0 %v2137
        %2470 = vmatprep.subr.mxu0 0.0
        %2471 = vmatpush1.msra.mxu0 %v2138
        %2472 = vmatprep.subr.mxu0 0.0
        %2473 = vmatpush1.msra.mxu0 0.0
        %2474 = vmatprep.subr.mxu0 0.0
        %2475 = vmatpush1.msra.mxu0 0.0
        %2476 = vmatprep.subr.mxu0 0.0
        %2477 = vmatpush1.msra.mxu0 0.0
        %2478 = vmatprep.subr.mxu0 0.0
        %2479 = vmatpush1.msra.mxu0 0.0
        %2480 = vmatprep.subr.mxu0 0.0
        %2481 = vmatpush1.msra.mxu0 0.0
        %2482 = vmatprep.subr.mxu0 0.0
        %2483 = vmatpush1.msra.mxu0 0.0
        %2484 = vmatprep.subr.mxu0 0.0
        %2485 = vmatpush1.msra.mxu0 0.0
        %2486 = vmatprep.subr.mxu0 0.0
        %2487 = vmatpush1.msra.mxu0 0.0
        %2488 = vmatprep.subr.mxu0 0.0
        %2489 = vmatpush1.msra.mxu0 0.0
        %2490 = vmatprep.subr.mxu0 0.0
        %2491 = vmatpush1.msra.mxu0 0.0
        %2492 = vmatprep.subr.mxu0 0.0
        %2493 = vmatpush1.msra.mxu0 0.0
        %2494 = vmatprep.subr.mxu0 0.0
        %2495 = vmatpush1.msra.mxu0 0.0
        %2496 = vmatprep.subr.mxu0 0.0
        %2497 = vmatpush1.msra.mxu0 0.0
        %2498 = vmatprep.subr.mxu0 0.0
        %2499 = vmatpush1.msra.mxu0 0.0
        %2500 = vmatprep.subr.mxu0 0.0
        %2501 = vmatpush1.msra.mxu0 0.0
        %2502 = vmatprep.subr.mxu0 0.0
        %2503 = vmatpush1.msra.mxu0 0.0
        %2504 = vmatprep.subr.mxu0 0.0
        %2505 = vmatpush1.msra.mxu0 0.0
        %2506 = vmatprep.subr.mxu0 0.0
        %2507 = vmatpush1.msra.mxu0 0.0
        %2508 = vmatprep.subr.mxu0 0.0
        %2509 = vmatpush1.msra.mxu0 0.0
        %2510 = vmatprep.subr.mxu0 0.0
        %2511 = vmatpush1.msra.mxu0 0.0
        %2512 = vmatprep.subr.mxu0 0.0
        %2513 = vmatpush1.msra.mxu0 0.0
        %2514 = vmatprep.subr.mxu0 0.0
        %2515 = vmatpush1.msra.mxu0 0.0
        %2516 = vmatprep.subr.mxu0 0.0
        %2517 = vmatpush1.msra.mxu0 0.0
        %2518 = vmatprep.subr.mxu0 0.0
        %2519 = vmatpush1.msra.mxu0 0.0
        %2520 = vmatprep.subr.mxu0 0.0
        %2521 = vmatpush1.msra.mxu0 0.0
        %2522 = vmatprep.subr.mxu0 0.0
        %2523 = vmatpush1.msra.mxu0 0.0
        %2524 = vmatprep.subr.mxu0 0.0
        %2525 = vmatpush1.msra.mxu0 0.0
        %2526 = vmatprep.subr.mxu0 0.0
        %2527 = vmatpush1.msra.mxu0 0.0
        %2528 = vmatprep.subr.mxu0 0.0
        %2529 = vmatpush1.msra.mxu0 0.0
        %2530 = vmatprep.subr.mxu0 0.0
        %2531 = vmatpush1.msra.mxu0 0.0
        %2532 = vmatprep.mubr.f32.mxu0 0.0
        %2533 = vmatmul.mubr.f32.gmra.mrb[0].mxu0 %v2466
        %v2534 = vpop.f32.mrb[0].mxu0
        %v2535 = vadd.f32 0.0, %v2534
        %v2536 = vpop.f32.mrb[0].mxu0
        %2537 = vdwg.mxu0
        %s2538 = scalar_lea.vmem %s14, 256
        %v2539 = vld [vmem:[%s2538] sm:$0xff]
        %v2540 = vld [vmem:[%s2538 + $0x8] sm:$0xff]
        %v2541 = vld [vmem:[%s2538 + $0x10] sm:$0xff]
        %v2542 = vld [vmem:[%s2538 + $0x18] sm:$0xff]
        %v2543 = vld [vmem:[%s2538 + $0x20] sm:$0xff]
        %v2544 = vld [vmem:[%s2538 + $0x28] sm:$0xff]
        %v2545 = vld [vmem:[%s2538 + $0x30] sm:$0xff]
        %v2546 = vld [vmem:[%s2538 + $0x38] sm:$0xff]
        %v2547 = vld [vmem:[%s2538 + $0x40] sm:$0xff]
        %v2548 = vld [vmem:[%s2538 + $0x48] sm:$0xff]
        %v2549 = vld [vmem:[%s2538 + $0x50] sm:$0xff]
        %v2550 = vld [vmem:[%s2538 + $0x58] sm:$0xff]
        %v2551 = vld [vmem:[%s2538 + $0x60] sm:$0xff]
        %v2552 = vld [vmem:[%s2538 + $0x68] sm:$0xff]
        %v2553 = vld [vmem:[%s2538 + $0x70] sm:$0xff]
        %v2554 = vld [vmem:[%s2538 + $0x78] sm:$0xff]
        %2555 = vmatprep.subr.mxu0 0.0
        %2556 = vmatpush1.msra.mxu0 %v2539
        %2557 = vmatprep.subr.mxu0 0.0
        %2558 = vmatpush1.msra.mxu0 %v2540
        %2559 = vmatprep.subr.mxu0 0.0
        %2560 = vmatpush1.msra.mxu0 %v2541
        %2561 = vmatprep.subr.mxu0 0.0
        %2562 = vmatpush1.msra.mxu0 %v2542
        %2563 = vmatprep.subr.mxu0 0.0
        %2564 = vmatpush1.msra.mxu0 %v2543
        %2565 = vmatprep.subr.mxu0 0.0
        %2566 = vmatpush1.msra.mxu0 %v2544
        %2567 = vmatprep.subr.mxu0 0.0
        %2568 = vmatpush1.msra.mxu0 %v2545
        %2569 = vmatprep.subr.mxu0 0.0
        %2570 = vmatpush1.msra.mxu0 %v2546
        %2571 = vmatprep.subr.mxu0 0.0
        %2572 = vmatpush1.msra.mxu0 %v2547
        %2573 = vmatprep.subr.mxu0 0.0
        %2574 = vmatpush1.msra.mxu0 %v2548
        %2575 = vmatprep.subr.mxu0 0.0
        %2576 = vmatpush1.msra.mxu0 %v2549
        %2577 = vmatprep.subr.mxu0 0.0
        %2578 = vmatpush1.msra.mxu0 %v2550
        %2579 = vmatprep.subr.mxu0 0.0
        %2580 = vmatpush1.msra.mxu0 %v2551
        %2581 = vmatprep.subr.mxu0 0.0
        %2582 = vmatpush1.msra.mxu0 %v2552
        %2583 = vmatprep.subr.mxu0 0.0
        %2584 = vmatpush1.msra.mxu0 %v2553
        %2585 = vmatprep.subr.mxu0 0.0
        %2586 = vmatpush1.msra.mxu0 %v2554
        %2587 = vmatprep.subr.mxu0 0.0
        %2588 = vmatpush1.msra.mxu0 0.0
        %2589 = vmatprep.subr.mxu0 0.0
        %2590 = vmatpush1.msra.mxu0 0.0
        %2591 = vmatprep.subr.mxu0 0.0
        %2592 = vmatpush1.msra.mxu0 0.0
        %2593 = vmatprep.subr.mxu0 0.0
        %2594 = vmatpush1.msra.mxu0 0.0
        %2595 = vmatprep.subr.mxu0 0.0
        %2596 = vmatpush1.msra.mxu0 0.0
        %2597 = vmatprep.subr.mxu0 0.0
        %2598 = vmatpush1.msra.mxu0 0.0
        %2599 = vmatprep.subr.mxu0 0.0
        %2600 = vmatpush1.msra.mxu0 0.0
        %2601 = vmatprep.subr.mxu0 0.0
        %2602 = vmatpush1.msra.mxu0 0.0
        %2603 = vmatprep.subr.mxu0 0.0
        %2604 = vmatpush1.msra.mxu0 0.0
        %2605 = vmatprep.subr.mxu0 0.0
        %2606 = vmatpush1.msra.mxu0 0.0
        %2607 = vmatprep.subr.mxu0 0.0
        %2608 = vmatpush1.msra.mxu0 0.0
        %2609 = vmatprep.subr.mxu0 0.0
        %2610 = vmatpush1.msra.mxu0 0.0
        %2611 = vmatprep.subr.mxu0 0.0
        %2612 = vmatpush1.msra.mxu0 0.0
        %2613 = vmatprep.subr.mxu0 0.0
        %2614 = vmatpush1.msra.mxu0 0.0
        %2615 = vmatprep.subr.mxu0 0.0
        %2616 = vmatpush1.msra.mxu0 0.0
        %2617 = vmatprep.subr.mxu0 0.0
        %2618 = vmatpush1.msra.mxu0 0.0
        %2619 = vmatprep.mubr.f32.mxu0 0.0
        %2620 = vmatmul.mubr.f32.gmra.mrb[0].mxu0 %v2535
        %v2621 = vpop.f32.mrb[0].mxu0
        %v2622 = vadd.f32 0.0, %v2621
        %v2623 = vpop.f32.mrb[0].mxu0
        %2624 = vdwg.mxu0
        %v2625 = vadd.f32 %v2460, %v2622
        %s2626 = scalar_lea.vmem %s13, 24
        %v2627 = vld [vmem:[%s2626] sm:$0xff]
        %v2629 = vsel %vm536, %v2627, 0
        %2631 = vmatprep.subr.mxu0 0.0
        %2632 = vmatpush1.msra.mxu0 %v2137
        %2633 = vmatprep.subr.mxu0 0.0
        %2634 = vmatpush1.msra.mxu0 %v2138
        %2635 = vmatprep.subr.mxu0 0.0
        %2636 = vmatpush1.msra.mxu0 0.0
        %2637 = vmatprep.subr.mxu0 0.0
        %2638 = vmatpush1.msra.mxu0 0.0
        %2639 = vmatprep.subr.mxu0 0.0
        %2640 = vmatpush1.msra.mxu0 0.0
        %2641 = vmatprep.subr.mxu0 0.0
        %2642 = vmatpush1.msra.mxu0 0.0
        %2643 = vmatprep.subr.mxu0 0.0
        %2644 = vmatpush1.msra.mxu0 0.0
        %2645 = vmatprep.subr.mxu0 0.0
        %2646 = vmatpush1.msra.mxu0 0.0
        %2647 = vmatprep.subr.mxu0 0.0
        %2648 = vmatpush1.msra.mxu0 0.0
        %2649 = vmatprep.subr.mxu0 0.0
        %2650 = vmatpush1.msra.mxu0 0.0
        %2651 = vmatprep.subr.mxu0 0.0
        %2652 = vmatpush1.msra.mxu0 0.0
        %2653 = vmatprep.subr.mxu0 0.0
        %2654 = vmatpush1.msra.mxu0 0.0
        %2655 = vmatprep.subr.mxu0 0.0
        %2656 = vmatpush1.msra.mxu0 0.0
        %2657 = vmatprep.subr.mxu0 0.0
        %2658 = vmatpush1.msra.mxu0 0.0
        %2659 = vmatprep.subr.mxu0 0.0
        %2660 = vmatpush1.msra.mxu0 0.0
        %2661 = vmatprep.subr.mxu0 0.0
        %2662 = vmatpush1.msra.mxu0 0.0
        %2663 = vmatprep.subr.mxu0 0.0
        %2664 = vmatpush1.msra.mxu0 0.0
        %2665 = vmatprep.subr.mxu0 0.0
        %2666 = vmatpush1.msra.mxu0 0.0
        %2667 = vmatprep.subr.mxu0 0.0
        %2668 = vmatpush1.msra.mxu0 0.0
        %2669 = vmatprep.subr.mxu0 0.0
        %2670 = vmatpush1.msra.mxu0 0.0
        %2671 = vmatprep.subr.mxu0 0.0
        %2672 = vmatpush1.msra.mxu0 0.0
        %2673 = vmatprep.subr.mxu0 0.0
        %2674 = vmatpush1.msra.mxu0 0.0
        %2675 = vmatprep.subr.mxu0 0.0
        %2676 = vmatpush1.msra.mxu0 0.0
        %2677 = vmatprep.subr.mxu0 0.0
        %2678 = vmatpush1.msra.mxu0 0.0
        %2679 = vmatprep.subr.mxu0 0.0
        %2680 = vmatpush1.msra.mxu0 0.0
        %2681 = vmatprep.subr.mxu0 0.0
        %2682 = vmatpush1.msra.mxu0 0.0
        %2683 = vmatprep.subr.mxu0 0.0
        %2684 = vmatpush1.msra.mxu0 0.0
        %2685 = vmatprep.subr.mxu0 0.0
        %2686 = vmatpush1.msra.mxu0 0.0
        %2687 = vmatprep.subr.mxu0 0.0
        %2688 = vmatpush1.msra.mxu0 0.0
        %2689 = vmatprep.subr.mxu0 0.0
        %2690 = vmatpush1.msra.mxu0 0.0
        %2691 = vmatprep.subr.mxu0 0.0
        %2692 = vmatpush1.msra.mxu0 0.0
        %2693 = vmatprep.subr.mxu0 0.0
        %2694 = vmatpush1.msra.mxu0 0.0
        %2695 = vmatprep.mubr.f32.mxu0 0.0
        %2696 = vmatmul.mubr.f32.gmra.mrb[0].mxu0 %v2629
        %v2697 = vpop.f32.mrb[0].mxu0
        %v2698 = vadd.f32 0.0, %v2697
        %v2699 = vpop.f32.mrb[0].mxu0
        %2700 = vdwg.mxu0
        %s2701 = scalar_lea.vmem %s14, 384
        %v2702 = vld [vmem:[%s2701] sm:$0xff]
        %v2703 = vld [vmem:[%s2701 + $0x8] sm:$0xff]
        %v2704 = vld [vmem:[%s2701 + $0x10] sm:$0xff]
        %v2705 = vld [vmem:[%s2701 + $0x18] sm:$0xff]
        %v2706 = vld [vmem:[%s2701 + $0x20] sm:$0xff]
        %v2707 = vld [vmem:[%s2701 + $0x28] sm:$0xff]
        %v2708 = vld [vmem:[%s2701 + $0x30] sm:$0xff]
        %v2709 = vld [vmem:[%s2701 + $0x38] sm:$0xff]
        %v2710 = vld [vmem:[%s2701 + $0x40] sm:$0xff]
        %v2711 = vld [vmem:[%s2701 + $0x48] sm:$0xff]
        %v2712 = vld [vmem:[%s2701 + $0x50] sm:$0xff]
        %v2713 = vld [vmem:[%s2701 + $0x58] sm:$0xff]
        %v2714 = vld [vmem:[%s2701 + $0x60] sm:$0xff]
        %v2715 = vld [vmem:[%s2701 + $0x68] sm:$0xff]
        %v2716 = vld [vmem:[%s2701 + $0x70] sm:$0xff]
        %v2717 = vld [vmem:[%s2701 + $0x78] sm:$0xff]
        %2718 = vmatprep.subr.mxu0 0.0
        %2719 = vmatpush1.msra.mxu0 %v2702
        %2720 = vmatprep.subr.mxu0 0.0
        %2721 = vmatpush1.msra.mxu0 %v2703
        %2722 = vmatprep.subr.mxu0 0.0
        %2723 = vmatpush1.msra.mxu0 %v2704
        %2724 = vmatprep.subr.mxu0 0.0
        %2725 = vmatpush1.msra.mxu0 %v2705
        %2726 = vmatprep.subr.mxu0 0.0
        %2727 = vmatpush1.msra.mxu0 %v2706
        %2728 = vmatprep.subr.mxu0 0.0
        %2729 = vmatpush1.msra.mxu0 %v2707
        %2730 = vmatprep.subr.mxu0 0.0
        %2731 = vmatpush1.msra.mxu0 %v2708
        %2732 = vmatprep.subr.mxu0 0.0
        %2733 = vmatpush1.msra.mxu0 %v2709
        %2734 = vmatprep.subr.mxu0 0.0
        %2735 = vmatpush1.msra.mxu0 %v2710
        %2736 = vmatprep.subr.mxu0 0.0
        %2737 = vmatpush1.msra.mxu0 %v2711
        %2738 = vmatprep.subr.mxu0 0.0
        %2739 = vmatpush1.msra.mxu0 %v2712
        %2740 = vmatprep.subr.mxu0 0.0
        %2741 = vmatpush1.msra.mxu0 %v2713
        %2742 = vmatprep.subr.mxu0 0.0
        %2743 = vmatpush1.msra.mxu0 %v2714
        %2744 = vmatprep.subr.mxu0 0.0
        %2745 = vmatpush1.msra.mxu0 %v2715
        %2746 = vmatprep.subr.mxu0 0.0
        %2747 = vmatpush1.msra.mxu0 %v2716
        %2748 = vmatprep.subr.mxu0 0.0
        %2749 = vmatpush1.msra.mxu0 %v2717
        %2750 = vmatprep.subr.mxu0 0.0
        %2751 = vmatpush1.msra.mxu0 0.0
        %2752 = vmatprep.subr.mxu0 0.0
        %2753 = vmatpush1.msra.mxu0 0.0
        %2754 = vmatprep.subr.mxu0 0.0
        %2755 = vmatpush1.msra.mxu0 0.0
        %2756 = vmatprep.subr.mxu0 0.0
        %2757 = vmatpush1.msra.mxu0 0.0
        %2758 = vmatprep.subr.mxu0 0.0
        %2759 = vmatpush1.msra.mxu0 0.0
        %2760 = vmatprep.subr.mxu0 0.0
        %2761 = vmatpush1.msra.mxu0 0.0
        %2762 = vmatprep.subr.mxu0 0.0
        %2763 = vmatpush1.msra.mxu0 0.0
        %2764 = vmatprep.subr.mxu0 0.0
        %2765 = vmatpush1.msra.mxu0 0.0
        %2766 = vmatprep.subr.mxu0 0.0
        %2767 = vmatpush1.msra.mxu0 0.0
        %2768 = vmatprep.subr.mxu0 0.0
        %2769 = vmatpush1.msra.mxu0 0.0
        %2770 = vmatprep.subr.mxu0 0.0
        %2771 = vmatpush1.msra.mxu0 0.0
        %2772 = vmatprep.subr.mxu0 0.0
        %2773 = vmatpush1.msra.mxu0 0.0
        %2774 = vmatprep.subr.mxu0 0.0
        %2775 = vmatpush1.msra.mxu0 0.0
        %2776 = vmatprep.subr.mxu0 0.0
        %2777 = vmatpush1.msra.mxu0 0.0
        %2778 = vmatprep.subr.mxu0 0.0
        %2779 = vmatpush1.msra.mxu0 0.0
        %2780 = vmatprep.subr.mxu0 0.0
        %2781 = vmatpush1.msra.mxu0 0.0
        %2782 = vmatprep.mubr.f32.mxu0 0.0
        %2783 = vmatmul.mubr.f32.gmra.mrb[0].mxu0 %v2698
        %v2784 = vpop.f32.mrb[0].mxu0
        %v2785 = vadd.f32 0.0, %v2784
        %v2786 = vpop.f32.mrb[0].mxu0
        %2787 = vdwg.mxu0
        %v2788 = vadd.f32 %v2625, %v2785
        %2789 = vst.msk [vmem:[%s525] sm:$0xff] %vm719, %v2788
        %s2790 = sand.u32 %s362, 1
        %s2791 = scalar_lea.sflag [#allocation3], %s2790
        %s2792 = sand.u32 %s362, 1
        %s2793 = smul.addr %s2792, 16
        %s2794 = scalar_lea.vmem [#allocation2], %s2793
        %s2795 = sand.u32 %s388, 1
        %s2796 = scalar_lea.sflag [#allocation5], %s2795
        %s2797 = sand.u32 %s388, 1
        %s2798 = smul.addr %s2797, 8
        %s2799 = scalar_lea.vmem [#allocation4], %s2798
        // Predicated region
        $region81: #{tpu_custom_call.1} parent=79 // pred_check
          %p2800 = pneg %p372
        $region82: #{tpu_custom_call.1} parent=79 // pred_check_branch
          %2802 = sbr.rel (%p2800) target = $region84
        $region83: #{tpu_custom_call.1} parent=79 // pred_region
          %s2804 = ssub.s32 256, 256
          %2805 = vsyncadd %s2791, %s2804
          %s2806 = smul.addr %s34, 2
          %s2807 = smul.addr %s2806, 128
          %s2808 = scalar_lea.hbm %s15, %s2807
          %s2809 = sshll.u32 %s2794, 4
          %s2810 = int_to_ptr.vmem [resolvable:$true] %s2809
          %2815 = dma.vmem_to_hbm [thread:$0]  %s2810, 256, %s2808, %s2791, 128, 128, 8
        $region84: #{tpu_custom_call.1} parent=79 // pred_fallthru
          _
        // Predicated region
        $region85: #{tpu_custom_call.1} parent=79 // pred_check
          %p2816 = pneg %p398
        $region86: #{tpu_custom_call.1} parent=79 // pred_check_branch
          %2818 = sbr.rel (%p2816) target = $region88
        $region87: #{tpu_custom_call.1} parent=79 // pred_region
          %s2820 = ssub.s32 128, 128
          %2821 = vsyncadd %s2796, %s2820
          %s2822 = smul.addr %s34, 128
          %s2823 = scalar_lea.hbm %s16, %s2822
          %s2825 = sshll.u32 %s2799, 4
          %s2826 = int_to_ptr.vmem [resolvable:$true] %s2825
          %2828 = dma.vmem_to_hbm [thread:$0]  %s2826, 128, %s2823, %s2796
        $region88: #{tpu_custom_call.1} parent=79 // pred_fallthru
          _
      $region80: #{tpu_custom_call.1} parent=5 // pred_fallthru
        _
      %p2829 = scmp.le.s32.totalorder 2, %s29
      // Predicated region
      $region89: #{tpu_custom_call.1} parent=5 // pred_check
        %p2830 = pneg %p2829
      $region90: #{tpu_custom_call.1} parent=5 // pred_check_branch
        %2832 = sbr.rel (%p2830) target = $region92
      $region91: #{tpu_custom_call.1} parent=5 // pred_region
        %s2833 = ssub.s32 %s29, 2
        // Predicated region
        $region93: #{tpu_custom_call.1} parent=91 // pred_check
          %p2834 = pneg %p378
        $region94: #{tpu_custom_call.1} parent=91 // pred_check_branch
          %2836 = sbr.rel (%p2834) target = $region96
        $region95: #{tpu_custom_call.1} parent=91 // pred_region
          %s2837 = sand.u32 %s363, 1
          %s2838 = scalar_lea.sflag [#allocation3], %s2837
          %s2839 = sand.u32 %s363, 1
          %s2840 = smul.addr %s2839, 16
          %s2841 = scalar_lea.vmem [#allocation2], %s2840
          %2842 = dma.done %s2838, 256
        $region96: #{tpu_custom_call.1} parent=91 // pred_fallthru
          _
        // Predicated region
        $region97: #{tpu_custom_call.1} parent=91 // pred_check
          %p2843 = pneg %p404
        $region98: #{tpu_custom_call.1} parent=91 // pred_check_branch
          %2845 = sbr.rel (%p2843) target = $region100
        $region99: #{tpu_custom_call.1} parent=91 // pred_region
          %s2846 = sand.u32 %s389, 1
          %s2847 = scalar_lea.sflag [#allocation5], %s2846
          %s2848 = sand.u32 %s389, 1
          %s2849 = smul.addr %s2848, 8
          %s2850 = scalar_lea.vmem [#allocation4], %s2849
          %2851 = dma.done %s2847, 128
        $region100: #{tpu_custom_call.1} parent=91 // pred_fallthru
          _
      $region92: #{tpu_custom_call.1} parent=5 // pred_fallthru
        _
    $region6: #{tpu_custom_call.1} parent=1 // loop_footer
      %s33 = sadd.s32 1, %s29
    $region7: #{tpu_custom_call.1} parent=1 // loop_footer_branch
      %28 = sbr.rel target = $region3
    $region8: #{tpu_custom_call.1} parent=1 // loop_exit
      _
    %2852 = vsyncpa [#allocation3], 1
    %s2853 = scalar_lea.sflag [#allocation3], 1
    %2854 = vsyncpa %s2853, 1
    %2855 = vsyncpa [#allocation5], 1
    %s2856 = scalar_lea.sflag [#allocation5], 1
    %2857 = vsyncpa %s2856, 1

</llo_original>
